<compile_context>
chip_gen: v5e
topology: v5e:2x2
jax: 0.10.0
libtpu: 0.0.40
codegen_flags: <defaults>
</compile_context>

<pallas_src>
import functools

import numpy as np
import jax
import jax.numpy as jnp
from jax.experimental import pallas as pl
from jax.experimental.pallas import tpu as pltpu

KSIZE = 3            # conv kernel size (odd; padding = KSIZE // 2)
PAD = KSIZE // 2


# ----------------------------- layer geometry -------------------------------
def _chain_layer_cfgs(block_channels, H0, W0, num_layers):
    cfgs = []
    H, W = H0, W0
    for cin, cout in block_channels:
        for l in range(num_layers):
            s = 2 if l == 0 else 1
            ci = cin if l == 0 else cout
            Ho = (H + 2 * PAD - KSIZE) // s + 1
            Wo = (W + 2 * PAD - KSIZE) // s + 1
            cfgs.append(dict(
                Hin=H, Hp_in=H + 2, Win=W, Cin=ci,
                Ho=Ho, Hp_out=Ho + 2, Wout=Wo, Cout=cout,
                Kin=W * ci, Kout=Wo * cout, stride=s))
            H, W = Ho, Wo
    return cfgs


# ------------------------------- parameters ----------------------------------
def _he_conv_weight(key, cin, cout):
    std = (2.0 / (KSIZE * KSIZE * cin)) ** 0.5
    return jax.random.normal(key, (KSIZE, KSIZE, cin, cout), jnp.float32) * std


def _fold_conv_weight(w, cfg):
    """(3,3,Cin,Cout) conv weight -> 3 "(Win*Cin) x (Wout*Cout)" matrices.

    B[i][wi*Cin+ci, wo*Cout+co] = w[i, j, ci, co] with wi = stride*wo + j - PAD;
    out-of-range wi (W padding) simply has no entry.  Stored as bf16 for the MXU.
    """
    wn = np.asarray(w, np.float32)
    cin, cout = cfg["Cin"], cfg["Cout"]
    win, wout, s = cfg["Win"], cfg["Wout"], cfg["stride"]
    B = np.zeros((KSIZE, win * cin, wout * cout), np.float32)
    for i in range(KSIZE):
        for wo in range(wout):
            for j in range(KSIZE):
                wi = s * wo + j - PAD
                if 0 <= wi < win:
                    B[i, wi * cin:(wi + 1) * cin, wo * cout:(wo + 1) * cout] = wn[i, j]
    return jnp.asarray(B, jnp.bfloat16)


def make_encoder_params(key, *, x0, x1, x2, x3, o0, o1, o2, o3, out_channels,
                        H, W, num_layers_x=2, num_layers_o=2):
    del x3  # unused by the module (matches the PyTorch source)
    x_blocks = [(x0 + o0, x1), (x1, x2), (x2, o3), (o3, out_channels)]
    o_blocks = [(o0, o1), (o1, o2), (o2, o3), (o3, out_channels)]
    cfgs = dict(x=_chain_layer_cfgs(x_blocks, H, W, num_layers_x),
                o=_chain_layer_cfgs(o_blocks, H, W, num_layers_o))

    def chain_weights(key, chain_cfgs):
        ws, bs = [], []
        for cfg in chain_cfgs:
            key, sub = jax.random.split(key)
            w = _he_conv_weight(sub, cfg["Cin"], cfg["Cout"])
            ws.append(w)
            bs.append(_fold_conv_weight(w, cfg))
        return key, ws, bs

    key, wx, bx = chain_weights(key, cfgs["x"])
    key, wo_, bo = chain_weights(key, cfgs["o"])
    weights = dict(wx=wx, wo=wo_, bx=bx, bo=bo)
    return cfgs, weights


# ------------------------------ Pallas kernel ---------------------------------
def _conv_relu_layer(src_ref, dst_ref, b_ref, cfg, N):
    """One 3x3 conv (+ReLU) on row-packed activations, fully in VMEM."""
    Hin, Hp_in, Kin = cfg["Hin"], cfg["Hp_in"], cfg["Kin"]
    Ho, Hp_out, Kout = cfg["Ho"], cfg["Hp_out"], cfg["Kout"]
    stride = cfg["stride"]
    Mtot = N * Hp_in - 2                     # all conv-window top rows (both imgs)

    a = src_ref[...].astype(jnp.bfloat16)    # single read of the activation slab
    acc = None
    for i in range(KSIZE):                   # 3 H-taps -> 3 MXU matmuls
        lhs = a[i:i + Mtot, 0:Kin]
        part = jnp.dot(lhs, b_ref[i], preferred_element_type=jnp.float32)
        acc = part if acc is None else acc + part

    # Fresh zero slab: the zero rows ARE the H padding seen by the next layer.
    dst_ref[...] = jnp.zeros(dst_ref.shape, dst_ref.dtype)

    for n in range(N):
        img = acc[n * Hp_in:n * Hp_in + Hin, :]         # stride-1 rows, image n
        if stride == 2:                                 # keep even output rows
            if Ho == 1:
                img = img[0:1, :]
            else:
                r = jax.lax.broadcasted_iota(jnp.int32, (Ho, Hin), 0)
                c = jax.lax.broadcasted_iota(jnp.int32, (Ho, Hin), 1)
                sel = jnp.where(c == 2 * r, 1.0, 0.0)   # exact 0/1 selection
                img = jnp.dot(sel, img, preferred_element_type=jnp.float32)
        img = jnp.maximum(img, 0.0)                     # ReLU in f32
        dst_ref[n * Hp_out + 1:n * Hp_out + 1 + Ho, 0:Kout] = img


def _encoder_kernel(x_ref, o_ref, *rest, cfgs_x, cfgs_o, N):
    nx, no = len(cfgs_x), len(cfgs_o)
    bx = rest[:nx]
    bo = rest[nx:nx + no]
    y_ref, z_ref = rest[nx + no], rest[nx + no + 1]
    buf0, buf1 = rest[nx + no + 2], rest[nx + no + 3]

    def run_chain(in_ref, b_refs, cfgs, out_ref):
        src = in_ref
        for li, (cfg, b_ref) in enumerate(zip(cfgs, b_refs)):
            dst = buf0 if li % 2 == 0 else buf1
            _conv_relu_layer(src, dst, b_ref, cfg, N)
            src = dst
        last = cfgs[-1]
        Ho, Hp, Kout = last["Ho"], last["Hp_out"], last["Kout"]
        for n in range(N):
            out_ref[n * Ho:(n + 1) * Ho, :] = src[n * Hp + 1:n * Hp + 1 + Ho, 0:Kout]

    run_chain(x_ref, bx, cfgs_x, y_ref)      # y = x_encoder(cat([x, obs], C))
    run_chain(o_ref, bo, cfgs_o, z_ref)      # z = o_encoder(obs)


# ------------------------------ forward wrapper --------------------------------
def _pack_rows(a_nchw):
    """NCHW -> zero-H-padded row layout (N*(H+2), W*C); lane index = w*C + c."""
    N, C, H, W = a_nchw.shape
    a = jnp.transpose(a_nchw, (0, 2, 3, 1)).reshape(N, H, W * C)
    a = jnp.pad(a, ((0, 0), (1, 1), (0, 0)))
    return a.reshape(N * (H + 2), W * C).astype(jnp.float32)


def encoder_forward(weights, x_nchw, obs_nchw, *, cfgs):
    cfgs_x, cfgs_o = cfgs["x"], cfgs["o"]
    N = x_nchw.shape[0]

    xin = _pack_rows(jnp.concatenate([x_nchw, obs_nchw], axis=1))
    oin = _pack_rows(obs_nchw)

    last_x, last_o = cfgs_x[-1], cfgs_o[-1]
    out_shape = (
        jax.ShapeDtypeStruct((N * last_x["Ho"], last_x["Kout"]), jnp.float32),
        jax.ShapeDtypeStruct((N * last_o["Ho"], last_o["Kout"]), jnp.float32),
    )
    scratch_rows = max(N * c["Hp_out"] for c in cfgs_x + cfgs_o)
    scratch_lanes = max(c["Kout"] for c in cfgs_x + cfgs_o)

    n_in = 2 + len(cfgs_x) + len(cfgs_o)
    kernel = functools.partial(_encoder_kernel, cfgs_x=cfgs_x, cfgs_o=cfgs_o, N=N)
    y2d, z2d = pl.pallas_call(
        kernel,
        out_shape=out_shape,
        in_specs=[pl.BlockSpec(memory_space=pltpu.MemorySpace.VMEM)] * n_in,
        out_specs=(pl.BlockSpec(memory_space=pltpu.MemorySpace.VMEM),) * 2,
        scratch_shapes=[
            pltpu.VMEM((scratch_rows, scratch_lanes), jnp.float32),
            pltpu.VMEM((scratch_rows, scratch_lanes), jnp.float32),
        ],
    )(xin, oin, *weights["bx"], *weights["bo"])

    def unpack(a2d, cfg):
        return a2d.reshape(N, cfg["Ho"], cfg["Wout"], cfg["Cout"]).transpose(0, 3, 1, 2)

    return unpack(y2d, last_x), unpack(z2d, last_o)


# ---------------------------- plain-JAX reference ------------------------------
def _reference_forward(weights, x_nchw, obs_nchw, cfgs):
    def chain(a_nchw, ws, chain_cfgs):
        a = jnp.transpose(a_nchw, (0, 2, 3, 1))
        for w, cfg in zip(ws, chain_cfgs):
            s = cfg["stride"]
            a = jax.lax.conv_general_dilated(
                a, w, window_strides=(s, s), padding=((PAD, PAD), (PAD, PAD)),
                dimension_numbers=("NHWC", "HWIO", "NHWC"))
            a = jnp.maximum(a, 0.0)
        return jnp.transpose(a, (0, 3, 1, 2))

    y = chain(jnp.concatenate([x_nchw, obs_nchw], axis=1), weights["wx"], cfgs["x"])
    z = chain(obs_nchw, weights["wo"], cfgs["o"])
    return y, z


# ------------------------------------ main -------------------------------------
if __name__ == "__main__":
    key = jax.random.PRNGKey(0)
    kp, kx, ko = jax.random.split(key, 3)

    # Small shapes consistent with the module: batch=2, spatial=16x16.
    B, H, W = 2, 16, 16
    x0, x1, x2, x3 = 4, 8, 16, 16     # x_feat_channels_* (x3 unused by the module)
    o0, o1, o2, o3 = 4, 8, 16, 16     # o_feat_channels_*
    out_channels = 32

    cfgs, weights = make_encoder_params(
        kp, x0=x0, x1=x1, x2=x2, x3=x3, o0=o0, o1=o1, o2=o2, o3=o3,
        out_channels=out_channels, H=H, W=W, num_layers_x=2, num_layers_o=2)

    x = jax.random.normal(kx, (B, x0, H, W), jnp.float32)     # NCHW
    obs = jax.random.normal(ko, (B, o0, H, W), jnp.float32)   # NCHW

    fwd = jax.jit(functools.partial(encoder_forward, cfgs=cfgs))
    y, z = fwd(weights, x, obs)
    jax.block_until_ready((y, z))

    assert y.shape == (B, out_channels, 1, 1), y.shape   # 16 / 2**4 = 1
    assert z.shape == (B, out_channels, 1, 1), z.shape

    # Numerical check vs. an XLA conv reference (loose tol: kernel uses bf16 MXU
    # operands with f32 accumulation, per the performance review).
    y_ref, z_ref = _reference_forward(weights, x, obs, cfgs)
    for got, ref in ((y, y_ref), (z, z_ref)):
        err = float(jnp.max(jnp.abs(got - ref)))
        scale = float(jnp.max(jnp.abs(ref))) + 1.0
        assert err <= 0.1 * scale, (err, scale)

    print("KERNEL_OK")
</pallas_src>

<mosaic_0001>
module attributes {stable_mosaic.version = 11 : i64} {
  func.func @_encoder_kernel(%arg0: memref<36x128xf32, #tpu.memory_space<vmem>>, %arg1: memref<36x64xf32, #tpu.memory_space<vmem>>, %arg2: memref<3x128x64xbf16, #tpu.memory_space<vmem>>, %arg3: memref<3x64x64xbf16, #tpu.memory_space<vmem>>, %arg4: memref<3x64x64xbf16, #tpu.memory_space<vmem>>, %arg5: memref<3x64x64xbf16, #tpu.memory_space<vmem>>, %arg6: memref<3x64x32xbf16, #tpu.memory_space<vmem>>, %arg7: memref<3x32x32xbf16, #tpu.memory_space<vmem>>, %arg8: memref<3x32x32xbf16, #tpu.memory_space<vmem>>, %arg9: memref<3x32x32xbf16, #tpu.memory_space<vmem>>, %arg10: memref<3x64x64xbf16, #tpu.memory_space<vmem>>, %arg11: memref<3x64x64xbf16, #tpu.memory_space<vmem>>, %arg12: memref<3x64x64xbf16, #tpu.memory_space<vmem>>, %arg13: memref<3x64x64xbf16, #tpu.memory_space<vmem>>, %arg14: memref<3x64x32xbf16, #tpu.memory_space<vmem>>, %arg15: memref<3x32x32xbf16, #tpu.memory_space<vmem>>, %arg16: memref<3x32x32xbf16, #tpu.memory_space<vmem>>, %arg17: memref<3x32x32xbf16, #tpu.memory_space<vmem>>, %arg18: memref<2x32xf32, #tpu.memory_space<vmem>>, %arg19: memref<2x32xf32, #tpu.memory_space<vmem>>, %arg20: memref<20x64xf32, #tpu.memory_space<vmem>>, %arg21: memref<20x64xf32, #tpu.memory_space<vmem>>) attributes {dimension_semantics = [], scalar_prefetch = 0 : i64, scratch_operands = 2 : i64, tpu.core_type = #tpu.core_type<tc>} {
    %c0 = arith.constant 0 : index
    %c0_0 = arith.constant 0 : index
    %0 = vector.load %arg0[%c0, %c0_0] : memref<36x128xf32, #tpu.memory_space<vmem>>, vector<36x128xf32>
    %1 = arith.truncf %0 : vector<36x128xf32> to vector<36x128xbf16>
    %2 = vector.extract_strided_slice %1 {offsets = [0, 0], sizes = [34, 128], strides = [1, 1]} : vector<36x128xbf16> to vector<34x128xbf16>
    %c0_1 = arith.constant 0 : index
    %c0_2 = arith.constant 0 : index
    %c0_3 = arith.constant 0 : index
    %3 = vector.load %arg2[%c0_1, %c0_2, %c0_3] : memref<3x128x64xbf16, #tpu.memory_space<vmem>>, vector<1x128x64xbf16>
    %4 = vector.shape_cast %3 : vector<1x128x64xbf16> to vector<128x64xbf16>
    %cst = arith.constant dense<0.000000e+00> : vector<34x64xf32>
    %5 = tpu.matmul %2, %4, %cst {dimension_numbers = #tpu.dot_dimension_numbers<[1], [0], [0], [1], [0, 0, 1, 1], [], []>} : vector<34x128xbf16>, vector<128x64xbf16>, vector<34x64xf32> -> vector<34x64xf32>
    %6 = vector.extract_strided_slice %1 {offsets = [1, 0], sizes = [34, 128], strides = [1, 1]} : vector<36x128xbf16> to vector<34x128xbf16>
    %c1 = arith.constant 1 : index
    %c0_4 = arith.constant 0 : index
    %c0_5 = arith.constant 0 : index
    %7 = vector.load %arg2[%c1, %c0_4, %c0_5] : memref<3x128x64xbf16, #tpu.memory_space<vmem>>, vector<1x128x64xbf16>
    %8 = vector.shape_cast %7 : vector<1x128x64xbf16> to vector<128x64xbf16>
    %cst_6 = arith.constant dense<0.000000e+00> : vector<34x64xf32>
    %9 = tpu.matmul %6, %8, %cst_6 {dimension_numbers = #tpu.dot_dimension_numbers<[1], [0], [0], [1], [0, 0, 1, 1], [], []>} : vector<34x128xbf16>, vector<128x64xbf16>, vector<34x64xf32> -> vector<34x64xf32>
    %10 = arith.addf %5, %9 : vector<34x64xf32>
    %11 = vector.extract_strided_slice %1 {offsets = [2, 0], sizes = [34, 128], strides = [1, 1]} : vector<36x128xbf16> to vector<34x128xbf16>
    %c2 = arith.constant 2 : index
    %c0_7 = arith.constant 0 : index
    %c0_8 = arith.constant 0 : index
    %12 = vector.load %arg2[%c2, %c0_7, %c0_8] : memref<3x128x64xbf16, #tpu.memory_space<vmem>>, vector<1x128x64xbf16>
    %13 = vector.shape_cast %12 : vector<1x128x64xbf16> to vector<128x64xbf16>
    %cst_9 = arith.constant dense<0.000000e+00> : vector<34x64xf32>
    %14 = tpu.matmul %11, %13, %cst_9 {dimension_numbers = #tpu.dot_dimension_numbers<[1], [0], [0], [1], [0, 0, 1, 1], [], []>} : vector<34x128xbf16>, vector<128x64xbf16>, vector<34x64xf32> -> vector<34x64xf32>
    %15 = arith.addf %10, %14 : vector<34x64xf32>
    %cst_10 = arith.constant 0.000000e+00 : f32
    %16 = vector.broadcast %cst_10 : f32 to vector<20x64xf32>
    %c0_11 = arith.constant 0 : index
    %c0_12 = arith.constant 0 : index
    %17 = vector.load %arg20[%c0_11, %c0_12] : memref<20x64xf32, #tpu.memory_space<vmem>>, vector<20x64xf32>
    tpu.vector_store %arg20[%c0_11, %c0_12], %16 {strides = array<i32>} : memref<20x64xf32, #tpu.memory_space<vmem>>, vector<20x64xf32>,
    %18 = vector.extract_strided_slice %15 {offsets = [0, 0], sizes = [16, 64], strides = [1, 1]} : vector<34x64xf32> to vector<16x64xf32>
    %19 = tpu.iota {dimensions = array<i32: 0>} : vector<8x16xi32>
    %20 = tpu.iota {dimensions = array<i32: 1>} : vector<8x16xi32>
    %c2_i32 = arith.constant 2 : i32
    %21 = vector.broadcast %c2_i32 : i32 to vector<8x16xi32>
    %22 = arith.muli %21, %19 : vector<8x16xi32>
    %23 = arith.cmpi eq, %20, %22 : vector<8x16xi32>
    %cst_13 = arith.constant 1.000000e+00 : f32
    %cst_14 = arith.constant 0.000000e+00 : f32
    %24 = vector.broadcast %cst_13 : f32 to vector<8x16xf32>
    %25 = vector.broadcast %cst_14 : f32 to vector<8x16xf32>
    %26 = arith.select %23, %24, %25 : vector<8x16xi1>, vector<8x16xf32>
    %cst_15 = arith.constant dense<0.000000e+00> : vector<8x64xf32>
    %27 = tpu.matmul %26, %18, %cst_15 {dimension_numbers = #tpu.dot_dimension_numbers<[1], [0], [0], [1], [0, 0, 1, 1], [], []>} : vector<8x16xf32>, vector<16x64xf32>, vector<8x64xf32> -> vector<8x64xf32>
    %cst_16 = arith.constant 0.000000e+00 : f32
    %28 = vector.broadcast %cst_16 : f32 to vector<8x64xf32>
    %29 = arith.maximumf %27, %28 : vector<8x64xf32>
    %c1_17 = arith.constant 1 : index
    %c0_18 = arith.constant 0 : index
    %30 = vector.load %arg20[%c1_17, %c0_18] : memref<20x64xf32, #tpu.memory_space<vmem>>, vector<8x64xf32>
    tpu.vector_store %arg20[%c1_17, %c0_18], %29 {strides = array<i32>} : memref<20x64xf32, #tpu.memory_space<vmem>>, vector<8x64xf32>,
    %31 = vector.extract_strided_slice %15 {offsets = [18, 0], sizes = [16, 64], strides = [1, 1]} : vector<34x64xf32> to vector<16x64xf32>
    %32 = tpu.iota {dimensions = array<i32: 0>} : vector<8x16xi32>
    %33 = tpu.iota {dimensions = array<i32: 1>} : vector<8x16xi32>
    %c2_i32_19 = arith.constant 2 : i32
    %34 = vector.broadcast %c2_i32_19 : i32 to vector<8x16xi32>
    %35 = arith.muli %34, %32 : vector<8x16xi32>
    %36 = arith.cmpi eq, %33, %35 : vector<8x16xi32>
    %cst_20 = arith.constant 1.000000e+00 : f32
    %cst_21 = arith.constant 0.000000e+00 : f32
    %37 = vector.broadcast %cst_20 : f32 to vector<8x16xf32>
    %38 = vector.broadcast %cst_21 : f32 to vector<8x16xf32>
    %39 = arith.select %36, %37, %38 : vector<8x16xi1>, vector<8x16xf32>
    %cst_22 = arith.constant dense<0.000000e+00> : vector<8x64xf32>
    %40 = tpu.matmul %39, %31, %cst_22 {dimension_numbers = #tpu.dot_dimension_numbers<[1], [0], [0], [1], [0, 0, 1, 1], [], []>} : vector<8x16xf32>, vector<16x64xf32>, vector<8x64xf32> -> vector<8x64xf32>
    %cst_23 = arith.constant 0.000000e+00 : f32
    %41 = vector.broadcast %cst_23 : f32 to vector<8x64xf32>
    %42 = arith.maximumf %40, %41 : vector<8x64xf32>
    %c11 = arith.constant 11 : index
    %c0_24 = arith.constant 0 : index
    %43 = vector.load %arg20[%c11, %c0_24] : memref<20x64xf32, #tpu.memory_space<vmem>>, vector<8x64xf32>
    tpu.vector_store %arg20[%c11, %c0_24], %42 {strides = array<i32>} : memref<20x64xf32, #tpu.memory_space<vmem>>, vector<8x64xf32>,
    %c0_25 = arith.constant 0 : index
    %c0_26 = arith.constant 0 : index
    %44 = vector.load %arg20[%c0_25, %c0_26] : memref<20x64xf32, #tpu.memory_space<vmem>>, vector<20x64xf32>
    %45 = arith.truncf %44 : vector<20x64xf32> to vector<20x64xbf16>
    %46 = vector.extract_strided_slice %45 {offsets = [0, 0], sizes = [18, 64], strides = [1, 1]} : vector<20x64xbf16> to vector<18x64xbf16>
    %c0_27 = arith.constant 0 : index
    %c0_28 = arith.constant 0 : index
    %c0_29 = arith.constant 0 : index
    %47 = vector.load %arg3[%c0_27, %c0_28, %c0_29] : memref<3x64x64xbf16, #tpu.memory_space<vmem>>, vector<1x64x64xbf16>
    %48 = vector.shape_cast %47 : vector<1x64x64xbf16> to vector<64x64xbf16>
    %cst_30 = arith.constant dense<0.000000e+00> : vector<18x64xf32>
    %49 = tpu.matmul %46, %48, %cst_30 {dimension_numbers = #tpu.dot_dimension_numbers<[1], [0], [0], [1], [0, 0, 1, 1], [], []>} : vector<18x64xbf16>, vector<64x64xbf16>, vector<18x64xf32> -> vector<18x64xf32>
    %50 = vector.extract_strided_slice %45 {offsets = [1, 0], sizes = [18, 64], strides = [1, 1]} : vector<20x64xbf16> to vector<18x64xbf16>
    %c1_31 = arith.constant 1 : index
    %c0_32 = arith.constant 0 : index
    %c0_33 = arith.constant 0 : index
    %51 = vector.load %arg3[%c1_31, %c0_32, %c0_33] : memref<3x64x64xbf16, #tpu.memory_space<vmem>>, vector<1x64x64xbf16>
    %52 = vector.shape_cast %51 : vector<1x64x64xbf16> to vector<64x64xbf16>
    %cst_34 = arith.constant dense<0.000000e+00> : vector<18x64xf32>
    %53 = tpu.matmul %50, %52, %cst_34 {dimension_numbers = #tpu.dot_dimension_numbers<[1], [0], [0], [1], [0, 0, 1, 1], [], []>} : vector<18x64xbf16>, vector<64x64xbf16>, vector<18x64xf32> -> vector<18x64xf32>
    %54 = arith.addf %49, %53 : vector<18x64xf32>
    %55 = vector.extract_strided_slice %45 {offsets = [2, 0], sizes = [18, 64], strides = [1, 1]} : vector<20x64xbf16> to vector<18x64xbf16>
    %c2_35 = arith.constant 2 : index
    %c0_36 = arith.constant 0 : index
    %c0_37 = arith.constant 0 : index
    %56 = vector.load %arg3[%c2_35, %c0_36, %c0_37] : memref<3x64x64xbf16, #tpu.memory_space<vmem>>, vector<1x64x64xbf16>
    %57 = vector.shape_cast %56 : vector<1x64x64xbf16> to vector<64x64xbf16>
    %cst_38 = arith.constant dense<0.000000e+00> : vector<18x64xf32>
    %58 = tpu.matmul %55, %57, %cst_38 {dimension_numbers = #tpu.dot_dimension_numbers<[1], [0], [0], [1], [0, 0, 1, 1], [], []>} : vector<18x64xbf16>, vector<64x64xbf16>, vector<18x64xf32> -> vector<18x64xf32>
    %59 = arith.addf %54, %58 : vector<18x64xf32>
    %cst_39 = arith.constant 0.000000e+00 : f32
    %60 = vector.broadcast %cst_39 : f32 to vector<20x64xf32>
    %c0_40 = arith.constant 0 : index
    %c0_41 = arith.constant 0 : index
    %61 = vector.load %arg21[%c0_40, %c0_41] : memref<20x64xf32, #tpu.memory_space<vmem>>, vector<20x64xf32>
    tpu.vector_store %arg21[%c0_40, %c0_41], %60 {strides = array<i32>} : memref<20x64xf32, #tpu.memory_space<vmem>>, vector<20x64xf32>,
    %62 = vector.extract_strided_slice %59 {offsets = [0, 0], sizes = [8, 64], strides = [1, 1]} : vector<18x64xf32> to vector<8x64xf32>
    %cst_42 = arith.constant 0.000000e+00 : f32
    %63 = vector.broadcast %cst_42 : f32 to vector<8x64xf32>
    %64 = arith.maximumf %62, %63 : vector<8x64xf32>
    %c1_43 = arith.constant 1 : index
    %c0_44 = arith.constant 0 : index
    %65 = vector.load %arg21[%c1_43, %c0_44] : memref<20x64xf32, #tpu.memory_space<vmem>>, vector<8x64xf32>
    tpu.vector_store %arg21[%c1_43, %c0_44], %64 {strides = array<i32>} : memref<20x64xf32, #tpu.memory_space<vmem>>, vector<8x64xf32>,
    %66 = vector.extract_strided_slice %59 {offsets = [10, 0], sizes = [8, 64], strides = [1, 1]} : vector<18x64xf32> to vector<8x64xf32>
    %cst_45 = arith.constant 0.000000e+00 : f32
    %67 = vector.broadcast %cst_45 : f32 to vector<8x64xf32>
    %68 = arith.maximumf %66, %67 : vector<8x64xf32>
    %c11_46 = arith.constant 11 : index
    %c0_47 = arith.constant 0 : index
    %69 = vector.load %arg21[%c11_46, %c0_47] : memref<20x64xf32, #tpu.memory_space<vmem>>, vector<8x64xf32>
    tpu.vector_store %arg21[%c11_46, %c0_47], %68 {strides = array<i32>} : memref<20x64xf32, #tpu.memory_space<vmem>>, vector<8x64xf32>,
    %c0_48 = arith.constant 0 : index
    %c0_49 = arith.constant 0 : index
    %70 = vector.load %arg21[%c0_48, %c0_49] : memref<20x64xf32, #tpu.memory_space<vmem>>, vector<20x64xf32>
    %71 = arith.truncf %70 : vector<20x64xf32> to vector<20x64xbf16>
    %72 = vector.extract_strided_slice %71 {offsets = [0, 0], sizes = [18, 64], strides = [1, 1]} : vector<20x64xbf16> to vector<18x64xbf16>
    %c0_50 = arith.constant 0 : index
    %c0_51 = arith.constant 0 : index
    %c0_52 = arith.constant 0 : index
    %73 = vector.load %arg4[%c0_50, %c0_51, %c0_52] : memref<3x64x64xbf16, #tpu.memory_space<vmem>>, vector<1x64x64xbf16>
    %74 = vector.shape_cast %73 : vector<1x64x64xbf16> to vector<64x64xbf16>
    %cst_53 = arith.constant dense<0.000000e+00> : vector<18x64xf32>
    %75 = tpu.matmul %72, %74, %cst_53 {dimension_numbers = #tpu.dot_dimension_numbers<[1], [0], [0], [1], [0, 0, 1, 1], [], []>} : vector<18x64xbf16>, vector<64x64xbf16>, vector<18x64xf32> -> vector<18x64xf32>
    %76 = vector.extract_strided_slice %71 {offsets = [1, 0], sizes = [18, 64], strides = [1, 1]} : vector<20x64xbf16> to vector<18x64xbf16>
    %c1_54 = arith.constant 1 : index
    %c0_55 = arith.constant 0 : index
    %c0_56 = arith.constant 0 : index
    %77 = vector.load %arg4[%c1_54, %c0_55, %c0_56] : memref<3x64x64xbf16, #tpu.memory_space<vmem>>, vector<1x64x64xbf16>
    %78 = vector.shape_cast %77 : vector<1x64x64xbf16> to vector<64x64xbf16>
    %cst_57 = arith.constant dense<0.000000e+00> : vector<18x64xf32>
    %79 = tpu.matmul %76, %78, %cst_57 {dimension_numbers = #tpu.dot_dimension_numbers<[1], [0], [0], [1], [0, 0, 1, 1], [], []>} : vector<18x64xbf16>, vector<64x64xbf16>, vector<18x64xf32> -> vector<18x64xf32>
    %80 = arith.addf %75, %79 : vector<18x64xf32>
    %81 = vector.extract_strided_slice %71 {offsets = [2, 0], sizes = [18, 64], strides = [1, 1]} : vector<20x64xbf16> to vector<18x64xbf16>
    %c2_58 = arith.constant 2 : index
    %c0_59 = arith.constant 0 : index
    %c0_60 = arith.constant 0 : index
    %82 = vector.load %arg4[%c2_58, %c0_59, %c0_60] : memref<3x64x64xbf16, #tpu.memory_space<vmem>>, vector<1x64x64xbf16>
    %83 = vector.shape_cast %82 : vector<1x64x64xbf16> to vector<64x64xbf16>
    %cst_61 = arith.constant dense<0.000000e+00> : vector<18x64xf32>
    %84 = tpu.matmul %81, %83, %cst_61 {dimension_numbers = #tpu.dot_dimension_numbers<[1], [0], [0], [1], [0, 0, 1, 1], [], []>} : vector<18x64xbf16>, vector<64x64xbf16>, vector<18x64xf32> -> vector<18x64xf32>
    %85 = arith.addf %80, %84 : vector<18x64xf32>
    %cst_62 = arith.constant 0.000000e+00 : f32
    %86 = vector.broadcast %cst_62 : f32 to vector<20x64xf32>
    %c0_63 = arith.constant 0 : index
    %c0_64 = arith.constant 0 : index
    %87 = vector.load %arg20[%c0_63, %c0_64] : memref<20x64xf32, #tpu.memory_space<vmem>>, vector<20x64xf32>
    tpu.vector_store %arg20[%c0_63, %c0_64], %86 {strides = array<i32>} : memref<20x64xf32, #tpu.memory_space<vmem>>, vector<20x64xf32>,
    %88 = vector.extract_strided_slice %85 {offsets = [0, 0], sizes = [8, 64], strides = [1, 1]} : vector<18x64xf32> to vector<8x64xf32>
    %89 = tpu.iota {dimensions = array<i32: 0>} : vector<4x8xi32>
    %90 = tpu.iota {dimensions = array<i32: 1>} : vector<4x8xi32>
    %c2_i32_65 = arith.constant 2 : i32
    %91 = vector.broadcast %c2_i32_65 : i32 to vector<4x8xi32>
    %92 = arith.muli %91, %89 : vector<4x8xi32>
    %93 = arith.cmpi eq, %90, %92 : vector<4x8xi32>
    %cst_66 = arith.constant 1.000000e+00 : f32
    %cst_67 = arith.constant 0.000000e+00 : f32
    %94 = vector.broadcast %cst_66 : f32 to vector<4x8xf32>
    %95 = vector.broadcast %cst_67 : f32 to vector<4x8xf32>
    %96 = arith.select %93, %94, %95 : vector<4x8xi1>, vector<4x8xf32>
    %cst_68 = arith.constant dense<0.000000e+00> : vector<4x64xf32>
    %97 = tpu.matmul %96, %88, %cst_68 {dimension_numbers = #tpu.dot_dimension_numbers<[1], [0], [0], [1], [0, 0, 1, 1], [], []>} : vector<4x8xf32>, vector<8x64xf32>, vector<4x64xf32> -> vector<4x64xf32>
    %cst_69 = arith.constant 0.000000e+00 : f32
    %98 = vector.broadcast %cst_69 : f32 to vector<4x64xf32>
    %99 = arith.maximumf %97, %98 : vector<4x64xf32>
    %c1_70 = arith.constant 1 : index
    %c0_71 = arith.constant 0 : index
    %100 = vector.load %arg20[%c1_70, %c0_71] : memref<20x64xf32, #tpu.memory_space<vmem>>, vector<4x64xf32>
    tpu.vector_store %arg20[%c1_70, %c0_71], %99 {strides = array<i32>} : memref<20x64xf32, #tpu.memory_space<vmem>>, vector<4x64xf32>,
    %101 = vector.extract_strided_slice %85 {offsets = [10, 0], sizes = [8, 64], strides = [1, 1]} : vector<18x64xf32> to vector<8x64xf32>
    %102 = tpu.iota {dimensions = array<i32: 0>} : vector<4x8xi32>
    %103 = tpu.iota {dimensions = array<i32: 1>} : vector<4x8xi32>
    %c2_i32_72 = arith.constant 2 : i32
    %104 = vector.broadcast %c2_i32_72 : i32 to vector<4x8xi32>
    %105 = arith.muli %104, %102 : vector<4x8xi32>
    %106 = arith.cmpi eq, %103, %105 : vector<4x8xi32>
    %cst_73 = arith.constant 1.000000e+00 : f32
    %cst_74 = arith.constant 0.000000e+00 : f32
    %107 = vector.broadcast %cst_73 : f32 to vector<4x8xf32>
    %108 = vector.broadcast %cst_74 : f32 to vector<4x8xf32>
    %109 = arith.select %106, %107, %108 : vector<4x8xi1>, vector<4x8xf32>
    %cst_75 = arith.constant dense<0.000000e+00> : vector<4x64xf32>
    %110 = tpu.matmul %109, %101, %cst_75 {dimension_numbers = #tpu.dot_dimension_numbers<[1], [0], [0], [1], [0, 0, 1, 1], [], []>} : vector<4x8xf32>, vector<8x64xf32>, vector<4x64xf32> -> vector<4x64xf32>
    %cst_76 = arith.constant 0.000000e+00 : f32
    %111 = vector.broadcast %cst_76 : f32 to vector<4x64xf32>
    %112 = arith.maximumf %110, %111 : vector<4x64xf32>
    %c7 = arith.constant 7 : index
    %c0_77 = arith.constant 0 : index
    %113 = vector.load %arg20[%c7, %c0_77] : memref<20x64xf32, #tpu.memory_space<vmem>>, vector<4x64xf32>
    tpu.vector_store %arg20[%c7, %c0_77], %112 {strides = array<i32>} : memref<20x64xf32, #tpu.memory_space<vmem>>, vector<4x64xf32>,
    %c0_78 = arith.constant 0 : index
    %c0_79 = arith.constant 0 : index
    %114 = vector.load %arg20[%c0_78, %c0_79] : memref<20x64xf32, #tpu.memory_space<vmem>>, vector<20x64xf32>
    %115 = arith.truncf %114 : vector<20x64xf32> to vector<20x64xbf16>
    %116 = vector.extract_strided_slice %115 {offsets = [0, 0], sizes = [10, 64], strides = [1, 1]} : vector<20x64xbf16> to vector<10x64xbf16>
    %c0_80 = arith.constant 0 : index
    %c0_81 = arith.constant 0 : index
    %c0_82 = arith.constant 0 : index
    %117 = vector.load %arg5[%c0_80, %c0_81, %c0_82] : memref<3x64x64xbf16, #tpu.memory_space<vmem>>, vector<1x64x64xbf16>
    %118 = vector.shape_cast %117 : vector<1x64x64xbf16> to vector<64x64xbf16>
    %cst_83 = arith.constant dense<0.000000e+00> : vector<10x64xf32>
    %119 = tpu.matmul %116, %118, %cst_83 {dimension_numbers = #tpu.dot_dimension_numbers<[1], [0], [0], [1], [0, 0, 1, 1], [], []>} : vector<10x64xbf16>, vector<64x64xbf16>, vector<10x64xf32> -> vector<10x64xf32>
    %120 = vector.extract_strided_slice %115 {offsets = [1, 0], sizes = [10, 64], strides = [1, 1]} : vector<20x64xbf16> to vector<10x64xbf16>
    %c1_84 = arith.constant 1 : index
    %c0_85 = arith.constant 0 : index
    %c0_86 = arith.constant 0 : index
    %121 = vector.load %arg5[%c1_84, %c0_85, %c0_86] : memref<3x64x64xbf16, #tpu.memory_space<vmem>>, vector<1x64x64xbf16>
    %122 = vector.shape_cast %121 : vector<1x64x64xbf16> to vector<64x64xbf16>
    %cst_87 = arith.constant dense<0.000000e+00> : vector<10x64xf32>
    %123 = tpu.matmul %120, %122, %cst_87 {dimension_numbers = #tpu.dot_dimension_numbers<[1], [0], [0], [1], [0, 0, 1, 1], [], []>} : vector<10x64xbf16>, vector<64x64xbf16>, vector<10x64xf32> -> vector<10x64xf32>
    %124 = arith.addf %119, %123 : vector<10x64xf32>
    %125 = vector.extract_strided_slice %115 {offsets = [2, 0], sizes = [10, 64], strides = [1, 1]} : vector<20x64xbf16> to vector<10x64xbf16>
    %c2_88 = arith.constant 2 : index
    %c0_89 = arith.constant 0 : index
    %c0_90 = arith.constant 0 : index
    %126 = vector.load %arg5[%c2_88, %c0_89, %c0_90] : memref<3x64x64xbf16, #tpu.memory_space<vmem>>, vector<1x64x64xbf16>
    %127 = vector.shape_cast %126 : vector<1x64x64xbf16> to vector<64x64xbf16>
    %cst_91 = arith.constant dense<0.000000e+00> : vector<10x64xf32>
    %128 = tpu.matmul %125, %127, %cst_91 {dimension_numbers = #tpu.dot_dimension_numbers<[1], [0], [0], [1], [0, 0, 1, 1], [], []>} : vector<10x64xbf16>, vector<64x64xbf16>, vector<10x64xf32> -> vector<10x64xf32>
    %129 = arith.addf %124, %128 : vector<10x64xf32>
    %cst_92 = arith.constant 0.000000e+00 : f32
    %130 = vector.broadcast %cst_92 : f32 to vector<20x64xf32>
    %c0_93 = arith.constant 0 : index
    %c0_94 = arith.constant 0 : index
    %131 = vector.load %arg21[%c0_93, %c0_94] : memref<20x64xf32, #tpu.memory_space<vmem>>, vector<20x64xf32>
    tpu.vector_store %arg21[%c0_93, %c0_94], %130 {strides = array<i32>} : memref<20x64xf32, #tpu.memory_space<vmem>>, vector<20x64xf32>,
    %132 = vector.extract_strided_slice %129 {offsets = [0, 0], sizes = [4, 64], strides = [1, 1]} : vector<10x64xf32> to vector<4x64xf32>
    %cst_95 = arith.constant 0.000000e+00 : f32
    %133 = vector.broadcast %cst_95 : f32 to vector<4x64xf32>
    %134 = arith.maximumf %132, %133 : vector<4x64xf32>
    %c1_96 = arith.constant 1 : index
    %c0_97 = arith.constant 0 : index
    %135 = vector.load %arg21[%c1_96, %c0_97] : memref<20x64xf32, #tpu.memory_space<vmem>>, vector<4x64xf32>
    tpu.vector_store %arg21[%c1_96, %c0_97], %134 {strides = array<i32>} : memref<20x64xf32, #tpu.memory_space<vmem>>, vector<4x64xf32>,
    %136 = vector.extract_strided_slice %129 {offsets = [6, 0], sizes = [4, 64], strides = [1, 1]} : vector<10x64xf32> to vector<4x64xf32>
    %cst_98 = arith.constant 0.000000e+00 : f32
    %137 = vector.broadcast %cst_98 : f32 to vector<4x64xf32>
    %138 = arith.maximumf %136, %137 : vector<4x64xf32>
    %c7_99 = arith.constant 7 : index
    %c0_100 = arith.constant 0 : index
    %139 = vector.load %arg21[%c7_99, %c0_100] : memref<20x64xf32, #tpu.memory_space<vmem>>, vector<4x64xf32>
    tpu.vector_store %arg21[%c7_99, %c0_100], %138 {strides = array<i32>} : memref<20x64xf32, #tpu.memory_space<vmem>>, vector<4x64xf32>,
    %c0_101 = arith.constant 0 : index
    %c0_102 = arith.constant 0 : index
    %140 = vector.load %arg21[%c0_101, %c0_102] : memref<20x64xf32, #tpu.memory_space<vmem>>, vector<20x64xf32>
    %141 = arith.truncf %140 : vector<20x64xf32> to vector<20x64xbf16>
    %142 = vector.extract_strided_slice %141 {offsets = [0, 0], sizes = [10, 64], strides = [1, 1]} : vector<20x64xbf16> to vector<10x64xbf16>
    %c0_103 = arith.constant 0 : index
    %c0_104 = arith.constant 0 : index
    %c0_105 = arith.constant 0 : index
    %143 = vector.load %arg6[%c0_103, %c0_104, %c0_105] : memref<3x64x32xbf16, #tpu.memory_space<vmem>>, vector<1x64x32xbf16>
    %144 = vector.shape_cast %143 : vector<1x64x32xbf16> to vector<64x32xbf16>
    %cst_106 = arith.constant dense<0.000000e+00> : vector<10x32xf32>
    %145 = tpu.matmul %142, %144, %cst_106 {dimension_numbers = #tpu.dot_dimension_numbers<[1], [0], [0], [1], [0, 0, 1, 1], [], []>} : vector<10x64xbf16>, vector<64x32xbf16>, vector<10x32xf32> -> vector<10x32xf32>
    %146 = vector.extract_strided_slice %141 {offsets = [1, 0], sizes = [10, 64], strides = [1, 1]} : vector<20x64xbf16> to vector<10x64xbf16>
    %c1_107 = arith.constant 1 : index
    %c0_108 = arith.constant 0 : index
    %c0_109 = arith.constant 0 : index
    %147 = vector.load %arg6[%c1_107, %c0_108, %c0_109] : memref<3x64x32xbf16, #tpu.memory_space<vmem>>, vector<1x64x32xbf16>
    %148 = vector.shape_cast %147 : vector<1x64x32xbf16> to vector<64x32xbf16>
    %cst_110 = arith.constant dense<0.000000e+00> : vector<10x32xf32>
    %149 = tpu.matmul %146, %148, %cst_110 {dimension_numbers = #tpu.dot_dimension_numbers<[1], [0], [0], [1], [0, 0, 1, 1], [], []>} : vector<10x64xbf16>, vector<64x32xbf16>, vector<10x32xf32> -> vector<10x32xf32>
    %150 = arith.addf %145, %149 : vector<10x32xf32>
    %151 = vector.extract_strided_slice %141 {offsets = [2, 0], sizes = [10, 64], strides = [1, 1]} : vector<20x64xbf16> to vector<10x64xbf16>
    %c2_111 = arith.constant 2 : index
    %c0_112 = arith.constant 0 : index
    %c0_113 = arith.constant 0 : index
    %152 = vector.load %arg6[%c2_111, %c0_112, %c0_113] : memref<3x64x32xbf16, #tpu.memory_space<vmem>>, vector<1x64x32xbf16>
    %153 = vector.shape_cast %152 : vector<1x64x32xbf16> to vector<64x32xbf16>
    %cst_114 = arith.constant dense<0.000000e+00> : vector<10x32xf32>
    %154 = tpu.matmul %151, %153, %cst_114 {dimension_numbers = #tpu.dot_dimension_numbers<[1], [0], [0], [1], [0, 0, 1, 1], [], []>} : vector<10x64xbf16>, vector<64x32xbf16>, vector<10x32xf32> -> vector<10x32xf32>
    %155 = arith.addf %150, %154 : vector<10x32xf32>
    %cst_115 = arith.constant 0.000000e+00 : f32
    %156 = vector.broadcast %cst_115 : f32 to vector<20x64xf32>
    %c0_116 = arith.constant 0 : index
    %c0_117 = arith.constant 0 : index
    %157 = vector.load %arg20[%c0_116, %c0_117] : memref<20x64xf32, #tpu.memory_space<vmem>>, vector<20x64xf32>
    tpu.vector_store %arg20[%c0_116, %c0_117], %156 {strides = array<i32>} : memref<20x64xf32, #tpu.memory_space<vmem>>, vector<20x64xf32>,
    %158 = vector.extract_strided_slice %155 {offsets = [0, 0], sizes = [4, 32], strides = [1, 1]} : vector<10x32xf32> to vector<4x32xf32>
    %159 = tpu.iota {dimensions = array<i32: 0>} : vector<2x4xi32>
    %160 = tpu.iota {dimensions = array<i32: 1>} : vector<2x4xi32>
    %c2_i32_118 = arith.constant 2 : i32
    %161 = vector.broadcast %c2_i32_118 : i32 to vector<2x4xi32>
    %162 = arith.muli %161, %159 : vector<2x4xi32>
    %163 = arith.cmpi eq, %160, %162 : vector<2x4xi32>
    %cst_119 = arith.constant 1.000000e+00 : f32
    %cst_120 = arith.constant 0.000000e+00 : f32
    %164 = vector.broadcast %cst_119 : f32 to vector<2x4xf32>
    %165 = vector.broadcast %cst_120 : f32 to vector<2x4xf32>
    %166 = arith.select %163, %164, %165 : vector<2x4xi1>, vector<2x4xf32>
    %cst_121 = arith.constant dense<0.000000e+00> : vector<2x32xf32>
    %167 = tpu.matmul %166, %158, %cst_121 {dimension_numbers = #tpu.dot_dimension_numbers<[1], [0], [0], [1], [0, 0, 1, 1], [], []>} : vector<2x4xf32>, vector<4x32xf32>, vector<2x32xf32> -> vector<2x32xf32>
    %cst_122 = arith.constant 0.000000e+00 : f32
    %168 = vector.broadcast %cst_122 : f32 to vector<2x32xf32>
    %169 = arith.maximumf %167, %168 : vector<2x32xf32>
    %c1_123 = arith.constant 1 : index
    %c0_124 = arith.constant 0 : index
    %170 = vector.load %arg20[%c1_123, %c0_124] : memref<20x64xf32, #tpu.memory_space<vmem>>, vector<2x32xf32>
    tpu.vector_store %arg20[%c1_123, %c0_124], %169 {strides = array<i32>} : memref<20x64xf32, #tpu.memory_space<vmem>>, vector<2x32xf32>,
    %171 = vector.extract_strided_slice %155 {offsets = [6, 0], sizes = [4, 32], strides = [1, 1]} : vector<10x32xf32> to vector<4x32xf32>
    %172 = tpu.iota {dimensions = array<i32: 0>} : vector<2x4xi32>
    %173 = tpu.iota {dimensions = array<i32: 1>} : vector<2x4xi32>
    %c2_i32_125 = arith.constant 2 : i32
    %174 = vector.broadcast %c2_i32_125 : i32 to vector<2x4xi32>
    %175 = arith.muli %174, %172 : vector<2x4xi32>
    %176 = arith.cmpi eq, %173, %175 : vector<2x4xi32>
    %cst_126 = arith.constant 1.000000e+00 : f32
    %cst_127 = arith.constant 0.000000e+00 : f32
    %177 = vector.broadcast %cst_126 : f32 to vector<2x4xf32>
    %178 = vector.broadcast %cst_127 : f32 to vector<2x4xf32>
    %179 = arith.select %176, %177, %178 : vector<2x4xi1>, vector<2x4xf32>
    %cst_128 = arith.constant dense<0.000000e+00> : vector<2x32xf32>
    %180 = tpu.matmul %179, %171, %cst_128 {dimension_numbers = #tpu.dot_dimension_numbers<[1], [0], [0], [1], [0, 0, 1, 1], [], []>} : vector<2x4xf32>, vector<4x32xf32>, vector<2x32xf32> -> vector<2x32xf32>
    %cst_129 = arith.constant 0.000000e+00 : f32
    %181 = vector.broadcast %cst_129 : f32 to vector<2x32xf32>
    %182 = arith.maximumf %180, %181 : vector<2x32xf32>
    %c5 = arith.constant 5 : index
    %c0_130 = arith.constant 0 : index
    %183 = vector.load %arg20[%c5, %c0_130] : memref<20x64xf32, #tpu.memory_space<vmem>>, vector<2x32xf32>
    tpu.vector_store %arg20[%c5, %c0_130], %182 {strides = array<i32>} : memref<20x64xf32, #tpu.memory_space<vmem>>, vector<2x32xf32>,
    %c0_131 = arith.constant 0 : index
    %c0_132 = arith.constant 0 : index
    %184 = vector.load %arg20[%c0_131, %c0_132] : memref<20x64xf32, #tpu.memory_space<vmem>>, vector<20x64xf32>
    %185 = arith.truncf %184 : vector<20x64xf32> to vector<20x64xbf16>
    %186 = vector.extract_strided_slice %185 {offsets = [0, 0], sizes = [6, 32], strides = [1, 1]} : vector<20x64xbf16> to vector<6x32xbf16>
    %c0_133 = arith.constant 0 : index
    %c0_134 = arith.constant 0 : index
    %c0_135 = arith.constant 0 : index
    %187 = vector.load %arg7[%c0_133, %c0_134, %c0_135] : memref<3x32x32xbf16, #tpu.memory_space<vmem>>, vector<1x32x32xbf16>
    %188 = vector.shape_cast %187 : vector<1x32x32xbf16> to vector<32x32xbf16>
    %cst_136 = arith.constant dense<0.000000e+00> : vector<6x32xf32>
    %189 = tpu.matmul %186, %188, %cst_136 {dimension_numbers = #tpu.dot_dimension_numbers<[1], [0], [0], [1], [0, 0, 1, 1], [], []>} : vector<6x32xbf16>, vector<32x32xbf16>, vector<6x32xf32> -> vector<6x32xf32>
    %190 = vector.extract_strided_slice %185 {offsets = [1, 0], sizes = [6, 32], strides = [1, 1]} : vector<20x64xbf16> to vector<6x32xbf16>
    %c1_137 = arith.constant 1 : index
    %c0_138 = arith.constant 0 : index
    %c0_139 = arith.constant 0 : index
    %191 = vector.load %arg7[%c1_137, %c0_138, %c0_139] : memref<3x32x32xbf16, #tpu.memory_space<vmem>>, vector<1x32x32xbf16>
    %192 = vector.shape_cast %191 : vector<1x32x32xbf16> to vector<32x32xbf16>
    %cst_140 = arith.constant dense<0.000000e+00> : vector<6x32xf32>
    %193 = tpu.matmul %190, %192, %cst_140 {dimension_numbers = #tpu.dot_dimension_numbers<[1], [0], [0], [1], [0, 0, 1, 1], [], []>} : vector<6x32xbf16>, vector<32x32xbf16>, vector<6x32xf32> -> vector<6x32xf32>
    %194 = arith.addf %189, %193 : vector<6x32xf32>
    %195 = vector.extract_strided_slice %185 {offsets = [2, 0], sizes = [6, 32], strides = [1, 1]} : vector<20x64xbf16> to vector<6x32xbf16>
    %c2_141 = arith.constant 2 : index
    %c0_142 = arith.constant 0 : index
    %c0_143 = arith.constant 0 : index
    %196 = vector.load %arg7[%c2_141, %c0_142, %c0_143] : memref<3x32x32xbf16, #tpu.memory_space<vmem>>, vector<1x32x32xbf16>
    %197 = vector.shape_cast %196 : vector<1x32x32xbf16> to vector<32x32xbf16>
    %cst_144 = arith.constant dense<0.000000e+00> : vector<6x32xf32>
    %198 = tpu.matmul %195, %197, %cst_144 {dimension_numbers = #tpu.dot_dimension_numbers<[1], [0], [0], [1], [0, 0, 1, 1], [], []>} : vector<6x32xbf16>, vector<32x32xbf16>, vector<6x32xf32> -> vector<6x32xf32>
    %199 = arith.addf %194, %198 : vector<6x32xf32>
    %cst_145 = arith.constant 0.000000e+00 : f32
    %200 = vector.broadcast %cst_145 : f32 to vector<20x64xf32>
    %c0_146 = arith.constant 0 : index
    %c0_147 = arith.constant 0 : index
    %201 = vector.load %arg21[%c0_146, %c0_147] : memref<20x64xf32, #tpu.memory_space<vmem>>, vector<20x64xf32>
    tpu.vector_store %arg21[%c0_146, %c0_147], %200 {strides = array<i32>} : memref<20x64xf32, #tpu.memory_space<vmem>>, vector<20x64xf32>,
    %202 = vector.extract_strided_slice %199 {offsets = [0, 0], sizes = [2, 32], strides = [1, 1]} : vector<6x32xf32> to vector<2x32xf32>
    %cst_148 = arith.constant 0.000000e+00 : f32
    %203 = vector.broadcast %cst_148 : f32 to vector<2x32xf32>
    %204 = arith.maximumf %202, %203 : vector<2x32xf32>
    %c1_149 = arith.constant 1 : index
    %c0_150 = arith.constant 0 : index
    %205 = vector.load %arg21[%c1_149, %c0_150] : memref<20x64xf32, #tpu.memory_space<vmem>>, vector<2x32xf32>
    tpu.vector_store %arg21[%c1_149, %c0_150], %204 {strides = array<i32>} : memref<20x64xf32, #tpu.memory_space<vmem>>, vector<2x32xf32>,
    %206 = vector.extract_strided_slice %199 {offsets = [4, 0], sizes = [2, 32], strides = [1, 1]} : vector<6x32xf32> to vector<2x32xf32>
    %cst_151 = arith.constant 0.000000e+00 : f32
    %207 = vector.broadcast %cst_151 : f32 to vector<2x32xf32>
    %208 = arith.maximumf %206, %207 : vector<2x32xf32>
    %c5_152 = arith.constant 5 : index
    %c0_153 = arith.constant 0 : index
    %209 = vector.load %arg21[%c5_152, %c0_153] : memref<20x64xf32, #tpu.memory_space<vmem>>, vector<2x32xf32>
    tpu.vector_store %arg21[%c5_152, %c0_153], %208 {strides = array<i32>} : memref<20x64xf32, #tpu.memory_space<vmem>>, vector<2x32xf32>,
    %c0_154 = arith.constant 0 : index
    %c0_155 = arith.constant 0 : index
    %210 = vector.load %arg21[%c0_154, %c0_155] : memref<20x64xf32, #tpu.memory_space<vmem>>, vector<20x64xf32>
    %211 = arith.truncf %210 : vector<20x64xf32> to vector<20x64xbf16>
    %212 = vector.extract_strided_slice %211 {offsets = [0, 0], sizes = [6, 32], strides = [1, 1]} : vector<20x64xbf16> to vector<6x32xbf16>
    %c0_156 = arith.constant 0 : index
    %c0_157 = arith.constant 0 : index
    %c0_158 = arith.constant 0 : index
    %213 = vector.load %arg8[%c0_156, %c0_157, %c0_158] : memref<3x32x32xbf16, #tpu.memory_space<vmem>>, vector<1x32x32xbf16>
    %214 = vector.shape_cast %213 : vector<1x32x32xbf16> to vector<32x32xbf16>
    %cst_159 = arith.constant dense<0.000000e+00> : vector<6x32xf32>
    %215 = tpu.matmul %212, %214, %cst_159 {dimension_numbers = #tpu.dot_dimension_numbers<[1], [0], [0], [1], [0, 0, 1, 1], [], []>} : vector<6x32xbf16>, vector<32x32xbf16>, vector<6x32xf32> -> vector<6x32xf32>
    %216 = vector.extract_strided_slice %211 {offsets = [1, 0], sizes = [6, 32], strides = [1, 1]} : vector<20x64xbf16> to vector<6x32xbf16>
    %c1_160 = arith.constant 1 : index
    %c0_161 = arith.constant 0 : index
    %c0_162 = arith.constant 0 : index
    %217 = vector.load %arg8[%c1_160, %c0_161, %c0_162] : memref<3x32x32xbf16, #tpu.memory_space<vmem>>, vector<1x32x32xbf16>
    %218 = vector.shape_cast %217 : vector<1x32x32xbf16> to vector<32x32xbf16>
    %cst_163 = arith.constant dense<0.000000e+00> : vector<6x32xf32>
    %219 = tpu.matmul %216, %218, %cst_163 {dimension_numbers = #tpu.dot_dimension_numbers<[1], [0], [0], [1], [0, 0, 1, 1], [], []>} : vector<6x32xbf16>, vector<32x32xbf16>, vector<6x32xf32> -> vector<6x32xf32>
    %220 = arith.addf %215, %219 : vector<6x32xf32>
    %221 = vector.extract_strided_slice %211 {offsets = [2, 0], sizes = [6, 32], strides = [1, 1]} : vector<20x64xbf16> to vector<6x32xbf16>
    %c2_164 = arith.constant 2 : index
    %c0_165 = arith.constant 0 : index
    %c0_166 = arith.constant 0 : index
    %222 = vector.load %arg8[%c2_164, %c0_165, %c0_166] : memref<3x32x32xbf16, #tpu.memory_space<vmem>>, vector<1x32x32xbf16>
    %223 = vector.shape_cast %222 : vector<1x32x32xbf16> to vector<32x32xbf16>
    %cst_167 = arith.constant dense<0.000000e+00> : vector<6x32xf32>
    %224 = tpu.matmul %221, %223, %cst_167 {dimension_numbers = #tpu.dot_dimension_numbers<[1], [0], [0], [1], [0, 0, 1, 1], [], []>} : vector<6x32xbf16>, vector<32x32xbf16>, vector<6x32xf32> -> vector<6x32xf32>
    %225 = arith.addf %220, %224 : vector<6x32xf32>
    %cst_168 = arith.constant 0.000000e+00 : f32
    %226 = vector.broadcast %cst_168 : f32 to vector<20x64xf32>
    %c0_169 = arith.constant 0 : index
    %c0_170 = arith.constant 0 : index
    %227 = vector.load %arg20[%c0_169, %c0_170] : memref<20x64xf32, #tpu.memory_space<vmem>>, vector<20x64xf32>
    tpu.vector_store %arg20[%c0_169, %c0_170], %226 {strides = array<i32>} : memref<20x64xf32, #tpu.memory_space<vmem>>, vector<20x64xf32>,
    %228 = vector.extract_strided_slice %225 {offsets = [0, 0], sizes = [2, 32], strides = [1, 1]} : vector<6x32xf32> to vector<2x32xf32>
    %229 = vector.extract_strided_slice %228 {offsets = [0, 0], sizes = [1, 32], strides = [1, 1]} : vector<2x32xf32> to vector<1x32xf32>
    %cst_171 = arith.constant 0.000000e+00 : f32
    %230 = vector.broadcast %cst_171 : f32 to vector<1x32xf32>
    %231 = arith.maximumf %229, %230 : vector<1x32xf32>
    %c1_172 = arith.constant 1 : index
    %c0_173 = arith.constant 0 : index
    %232 = vector.load %arg20[%c1_172, %c0_173] : memref<20x64xf32, #tpu.memory_space<vmem>>, vector<1x32xf32>
    tpu.vector_store %arg20[%c1_172, %c0_173], %231 {strides = array<i32>} : memref<20x64xf32, #tpu.memory_space<vmem>>, vector<1x32xf32>,
    %233 = vector.extract_strided_slice %225 {offsets = [4, 0], sizes = [2, 32], strides = [1, 1]} : vector<6x32xf32> to vector<2x32xf32>
    %234 = vector.extract_strided_slice %233 {offsets = [0, 0], sizes = [1, 32], strides = [1, 1]} : vector<2x32xf32> to vector<1x32xf32>
    %cst_174 = arith.constant 0.000000e+00 : f32
    %235 = vector.broadcast %cst_174 : f32 to vector<1x32xf32>
    %236 = arith.maximumf %234, %235 : vector<1x32xf32>
    %c4 = arith.constant 4 : index
    %c0_175 = arith.constant 0 : index
    %237 = vector.load %arg20[%c4, %c0_175] : memref<20x64xf32, #tpu.memory_space<vmem>>, vector<1x32xf32>
    tpu.vector_store %arg20[%c4, %c0_175], %236 {strides = array<i32>} : memref<20x64xf32, #tpu.memory_space<vmem>>, vector<1x32xf32>,
    %c0_176 = arith.constant 0 : index
    %c0_177 = arith.constant 0 : index
    %238 = vector.load %arg20[%c0_176, %c0_177] : memref<20x64xf32, #tpu.memory_space<vmem>>, vector<20x64xf32>
    %239 = arith.truncf %238 : vector<20x64xf32> to vector<20x64xbf16>
    %240 = vector.extract_strided_slice %239 {offsets = [0, 0], sizes = [4, 32], strides = [1, 1]} : vector<20x64xbf16> to vector<4x32xbf16>
    %c0_178 = arith.constant 0 : index
    %c0_179 = arith.constant 0 : index
    %c0_180 = arith.constant 0 : index
    %241 = vector.load %arg9[%c0_178, %c0_179, %c0_180] : memref<3x32x32xbf16, #tpu.memory_space<vmem>>, vector<1x32x32xbf16>
    %242 = vector.shape_cast %241 : vector<1x32x32xbf16> to vector<32x32xbf16>
    %cst_181 = arith.constant dense<0.000000e+00> : vector<4x32xf32>
    %243 = tpu.matmul %240, %242, %cst_181 {dimension_numbers = #tpu.dot_dimension_numbers<[1], [0], [0], [1], [0, 0, 1, 1], [], []>} : vector<4x32xbf16>, vector<32x32xbf16>, vector<4x32xf32> -> vector<4x32xf32>
    %244 = vector.extract_strided_slice %239 {offsets = [1, 0], sizes = [4, 32], strides = [1, 1]} : vector<20x64xbf16> to vector<4x32xbf16>
    %c1_182 = arith.constant 1 : index
    %c0_183 = arith.constant 0 : index
    %c0_184 = arith.constant 0 : index
    %245 = vector.load %arg9[%c1_182, %c0_183, %c0_184] : memref<3x32x32xbf16, #tpu.memory_space<vmem>>, vector<1x32x32xbf16>
    %246 = vector.shape_cast %245 : vector<1x32x32xbf16> to vector<32x32xbf16>
    %cst_185 = arith.constant dense<0.000000e+00> : vector<4x32xf32>
    %247 = tpu.matmul %244, %246, %cst_185 {dimension_numbers = #tpu.dot_dimension_numbers<[1], [0], [0], [1], [0, 0, 1, 1], [], []>} : vector<4x32xbf16>, vector<32x32xbf16>, vector<4x32xf32> -> vector<4x32xf32>
    %248 = arith.addf %243, %247 : vector<4x32xf32>
    %249 = vector.extract_strided_slice %239 {offsets = [2, 0], sizes = [4, 32], strides = [1, 1]} : vector<20x64xbf16> to vector<4x32xbf16>
    %c2_186 = arith.constant 2 : index
    %c0_187 = arith.constant 0 : index
    %c0_188 = arith.constant 0 : index
    %250 = vector.load %arg9[%c2_186, %c0_187, %c0_188] : memref<3x32x32xbf16, #tpu.memory_space<vmem>>, vector<1x32x32xbf16>
    %251 = vector.shape_cast %250 : vector<1x32x32xbf16> to vector<32x32xbf16>
    %cst_189 = arith.constant dense<0.000000e+00> : vector<4x32xf32>
    %252 = tpu.matmul %249, %251, %cst_189 {dimension_numbers = #tpu.dot_dimension_numbers<[1], [0], [0], [1], [0, 0, 1, 1], [], []>} : vector<4x32xbf16>, vector<32x32xbf16>, vector<4x32xf32> -> vector<4x32xf32>
    %253 = arith.addf %248, %252 : vector<4x32xf32>
    %cst_190 = arith.constant 0.000000e+00 : f32
    %254 = vector.broadcast %cst_190 : f32 to vector<20x64xf32>
    %c0_191 = arith.constant 0 : index
    %c0_192 = arith.constant 0 : index
    %255 = vector.load %arg21[%c0_191, %c0_192] : memref<20x64xf32, #tpu.memory_space<vmem>>, vector<20x64xf32>
    tpu.vector_store %arg21[%c0_191, %c0_192], %254 {strides = array<i32>} : memref<20x64xf32, #tpu.memory_space<vmem>>, vector<20x64xf32>,
    %256 = vector.extract_strided_slice %253 {offsets = [0, 0], sizes = [1, 32], strides = [1, 1]} : vector<4x32xf32> to vector<1x32xf32>
    %cst_193 = arith.constant 0.000000e+00 : f32
    %257 = vector.broadcast %cst_193 : f32 to vector<1x32xf32>
    %258 = arith.maximumf %256, %257 : vector<1x32xf32>
    %c1_194 = arith.constant 1 : index
    %c0_195 = arith.constant 0 : index
    %259 = vector.load %arg21[%c1_194, %c0_195] : memref<20x64xf32, #tpu.memory_space<vmem>>, vector<1x32xf32>
    tpu.vector_store %arg21[%c1_194, %c0_195], %258 {strides = array<i32>} : memref<20x64xf32, #tpu.memory_space<vmem>>, vector<1x32xf32>,
    %260 = vector.extract_strided_slice %253 {offsets = [3, 0], sizes = [1, 32], strides = [1, 1]} : vector<4x32xf32> to vector<1x32xf32>
    %cst_196 = arith.constant 0.000000e+00 : f32
    %261 = vector.broadcast %cst_196 : f32 to vector<1x32xf32>
    %262 = arith.maximumf %260, %261 : vector<1x32xf32>
    %c4_197 = arith.constant 4 : index
    %c0_198 = arith.constant 0 : index
    %263 = vector.load %arg21[%c4_197, %c0_198] : memref<20x64xf32, #tpu.memory_space<vmem>>, vector<1x32xf32>
    tpu.vector_store %arg21[%c4_197, %c0_198], %262 {strides = array<i32>} : memref<20x64xf32, #tpu.memory_space<vmem>>, vector<1x32xf32>,
    %c1_199 = arith.constant 1 : index
    %c0_200 = arith.constant 0 : index
    %264 = vector.load %arg21[%c1_199, %c0_200] : memref<20x64xf32, #tpu.memory_space<vmem>>, vector<1x32xf32>
    %c0_201 = arith.constant 0 : index
    %c0_202 = arith.constant 0 : index
    %265 = vector.load %arg18[%c0_201, %c0_202] : memref<2x32xf32, #tpu.memory_space<vmem>>, vector<1x32xf32>
    tpu.vector_store %arg18[%c0_201, %c0_202], %264 {strides = array<i32>} : memref<2x32xf32, #tpu.memory_space<vmem>>, vector<1x32xf32>,
    %c4_203 = arith.constant 4 : index
    %c0_204 = arith.constant 0 : index
    %266 = vector.load %arg21[%c4_203, %c0_204] : memref<20x64xf32, #tpu.memory_space<vmem>>, vector<1x32xf32>
    %c1_205 = arith.constant 1 : index
    %c0_206 = arith.constant 0 : index
    %267 = vector.load %arg18[%c1_205, %c0_206] : memref<2x32xf32, #tpu.memory_space<vmem>>, vector<1x32xf32>
    tpu.vector_store %arg18[%c1_205, %c0_206], %266 {strides = array<i32>} : memref<2x32xf32, #tpu.memory_space<vmem>>, vector<1x32xf32>,
    %c0_207 = arith.constant 0 : index
    %c0_208 = arith.constant 0 : index
    %268 = vector.load %arg1[%c0_207, %c0_208] : memref<36x64xf32, #tpu.memory_space<vmem>>, vector<36x64xf32>
    %269 = arith.truncf %268 : vector<36x64xf32> to vector<36x64xbf16>
    %270 = vector.extract_strided_slice %269 {offsets = [0, 0], sizes = [34, 64], strides = [1, 1]} : vector<36x64xbf16> to vector<34x64xbf16>
    %c0_209 = arith.constant 0 : index
    %c0_210 = arith.constant 0 : index
    %c0_211 = arith.constant 0 : index
    %271 = vector.load %arg10[%c0_209, %c0_210, %c0_211] : memref<3x64x64xbf16, #tpu.memory_space<vmem>>, vector<1x64x64xbf16>
    %272 = vector.shape_cast %271 : vector<1x64x64xbf16> to vector<64x64xbf16>
    %cst_212 = arith.constant dense<0.000000e+00> : vector<34x64xf32>
    %273 = tpu.matmul %270, %272, %cst_212 {dimension_numbers = #tpu.dot_dimension_numbers<[1], [0], [0], [1], [0, 0, 1, 1], [], []>} : vector<34x64xbf16>, vector<64x64xbf16>, vector<34x64xf32> -> vector<34x64xf32>
    %274 = vector.extract_strided_slice %269 {offsets = [1, 0], sizes = [34, 64], strides = [1, 1]} : vector<36x64xbf16> to vector<34x64xbf16>
    %c1_213 = arith.constant 1 : index
    %c0_214 = arith.constant 0 : index
    %c0_215 = arith.constant 0 : index
    %275 = vector.load %arg10[%c1_213, %c0_214, %c0_215] : memref<3x64x64xbf16, #tpu.memory_space<vmem>>, vector<1x64x64xbf16>
    %276 = vector.shape_cast %275 : vector<1x64x64xbf16> to vector<64x64xbf16>
    %cst_216 = arith.constant dense<0.000000e+00> : vector<34x64xf32>
    %277 = tpu.matmul %274, %276, %cst_216 {dimension_numbers = #tpu.dot_dimension_numbers<[1], [0], [0], [1], [0, 0, 1, 1], [], []>} : vector<34x64xbf16>, vector<64x64xbf16>, vector<34x64xf32> -> vector<34x64xf32>
    %278 = arith.addf %273, %277 : vector<34x64xf32>
    %279 = vector.extract_strided_slice %269 {offsets = [2, 0], sizes = [34, 64], strides = [1, 1]} : vector<36x64xbf16> to vector<34x64xbf16>
    %c2_217 = arith.constant 2 : index
    %c0_218 = arith.constant 0 : index
    %c0_219 = arith.constant 0 : index
    %280 = vector.load %arg10[%c2_217, %c0_218, %c0_219] : memref<3x64x64xbf16, #tpu.memory_space<vmem>>, vector<1x64x64xbf16>
    %281 = vector.shape_cast %280 : vector<1x64x64xbf16> to vector<64x64xbf16>
    %cst_220 = arith.constant dense<0.000000e+00> : vector<34x64xf32>
    %282 = tpu.matmul %279, %281, %cst_220 {dimension_numbers = #tpu.dot_dimension_numbers<[1], [0], [0], [1], [0, 0, 1, 1], [], []>} : vector<34x64xbf16>, vector<64x64xbf16>, vector<34x64xf32> -> vector<34x64xf32>
    %283 = arith.addf %278, %282 : vector<34x64xf32>
    %cst_221 = arith.constant 0.000000e+00 : f32
    %284 = vector.broadcast %cst_221 : f32 to vector<20x64xf32>
    %c0_222 = arith.constant 0 : index
    %c0_223 = arith.constant 0 : index
    %285 = vector.load %arg20[%c0_222, %c0_223] : memref<20x64xf32, #tpu.memory_space<vmem>>, vector<20x64xf32>
    tpu.vector_store %arg20[%c0_222, %c0_223], %284 {strides = array<i32>} : memref<20x64xf32, #tpu.memory_space<vmem>>, vector<20x64xf32>,
    %286 = vector.extract_strided_slice %283 {offsets = [0, 0], sizes = [16, 64], strides = [1, 1]} : vector<34x64xf32> to vector<16x64xf32>
    %287 = tpu.iota {dimensions = array<i32: 0>} : vector<8x16xi32>
    %288 = tpu.iota {dimensions = array<i32: 1>} : vector<8x16xi32>
    %c2_i32_224 = arith.constant 2 : i32
    %289 = vector.broadcast %c2_i32_224 : i32 to vector<8x16xi32>
    %290 = arith.muli %289, %287 : vector<8x16xi32>
    %291 = arith.cmpi eq, %288, %290 : vector<8x16xi32>
    %cst_225 = arith.constant 1.000000e+00 : f32
    %cst_226 = arith.constant 0.000000e+00 : f32
    %292 = vector.broadcast %cst_225 : f32 to vector<8x16xf32>
    %293 = vector.broadcast %cst_226 : f32 to vector<8x16xf32>
    %294 = arith.select %291, %292, %293 : vector<8x16xi1>, vector<8x16xf32>
    %cst_227 = arith.constant dense<0.000000e+00> : vector<8x64xf32>
    %295 = tpu.matmul %294, %286, %cst_227 {dimension_numbers = #tpu.dot_dimension_numbers<[1], [0], [0], [1], [0, 0, 1, 1], [], []>} : vector<8x16xf32>, vector<16x64xf32>, vector<8x64xf32> -> vector<8x64xf32>
    %cst_228 = arith.constant 0.000000e+00 : f32
    %296 = vector.broadcast %cst_228 : f32 to vector<8x64xf32>
    %297 = arith.maximumf %295, %296 : vector<8x64xf32>
    %c1_229 = arith.constant 1 : index
    %c0_230 = arith.constant 0 : index
    %298 = vector.load %arg20[%c1_229, %c0_230] : memref<20x64xf32, #tpu.memory_space<vmem>>, vector<8x64xf32>
    tpu.vector_store %arg20[%c1_229, %c0_230], %297 {strides = array<i32>} : memref<20x64xf32, #tpu.memory_space<vmem>>, vector<8x64xf32>,
    %299 = vector.extract_strided_slice %283 {offsets = [18, 0], sizes = [16, 64], strides = [1, 1]} : vector<34x64xf32> to vector<16x64xf32>
    %300 = tpu.iota {dimensions = array<i32: 0>} : vector<8x16xi32>
    %301 = tpu.iota {dimensions = array<i32: 1>} : vector<8x16xi32>
    %c2_i32_231 = arith.constant 2 : i32
    %302 = vector.broadcast %c2_i32_231 : i32 to vector<8x16xi32>
    %303 = arith.muli %302, %300 : vector<8x16xi32>
    %304 = arith.cmpi eq, %301, %303 : vector<8x16xi32>
    %cst_232 = arith.constant 1.000000e+00 : f32
    %cst_233 = arith.constant 0.000000e+00 : f32
    %305 = vector.broadcast %cst_232 : f32 to vector<8x16xf32>
    %306 = vector.broadcast %cst_233 : f32 to vector<8x16xf32>
    %307 = arith.select %304, %305, %306 : vector<8x16xi1>, vector<8x16xf32>
    %cst_234 = arith.constant dense<0.000000e+00> : vector<8x64xf32>
    %308 = tpu.matmul %307, %299, %cst_234 {dimension_numbers = #tpu.dot_dimension_numbers<[1], [0], [0], [1], [0, 0, 1, 1], [], []>} : vector<8x16xf32>, vector<16x64xf32>, vector<8x64xf32> -> vector<8x64xf32>
    %cst_235 = arith.constant 0.000000e+00 : f32
    %309 = vector.broadcast %cst_235 : f32 to vector<8x64xf32>
    %310 = arith.maximumf %308, %309 : vector<8x64xf32>
    %c11_236 = arith.constant 11 : index
    %c0_237 = arith.constant 0 : index
    %311 = vector.load %arg20[%c11_236, %c0_237] : memref<20x64xf32, #tpu.memory_space<vmem>>, vector<8x64xf32>
    tpu.vector_store %arg20[%c11_236, %c0_237], %310 {strides = array<i32>} : memref<20x64xf32, #tpu.memory_space<vmem>>, vector<8x64xf32>,
    %c0_238 = arith.constant 0 : index
    %c0_239 = arith.constant 0 : index
    %312 = vector.load %arg20[%c0_238, %c0_239] : memref<20x64xf32, #tpu.memory_space<vmem>>, vector<20x64xf32>
    %313 = arith.truncf %312 : vector<20x64xf32> to vector<20x64xbf16>
    %314 = vector.extract_strided_slice %313 {offsets = [0, 0], sizes = [18, 64], strides = [1, 1]} : vector<20x64xbf16> to vector<18x64xbf16>
    %c0_240 = arith.constant 0 : index
    %c0_241 = arith.constant 0 : index
    %c0_242 = arith.constant 0 : index
    %315 = vector.load %arg11[%c0_240, %c0_241, %c0_242] : memref<3x64x64xbf16, #tpu.memory_space<vmem>>, vector<1x64x64xbf16>
    %316 = vector.shape_cast %315 : vector<1x64x64xbf16> to vector<64x64xbf16>
    %cst_243 = arith.constant dense<0.000000e+00> : vector<18x64xf32>
    %317 = tpu.matmul %314, %316, %cst_243 {dimension_numbers = #tpu.dot_dimension_numbers<[1], [0], [0], [1], [0, 0, 1, 1], [], []>} : vector<18x64xbf16>, vector<64x64xbf16>, vector<18x64xf32> -> vector<18x64xf32>
    %318 = vector.extract_strided_slice %313 {offsets = [1, 0], sizes = [18, 64], strides = [1, 1]} : vector<20x64xbf16> to vector<18x64xbf16>
    %c1_244 = arith.constant 1 : index
    %c0_245 = arith.constant 0 : index
    %c0_246 = arith.constant 0 : index
    %319 = vector.load %arg11[%c1_244, %c0_245, %c0_246] : memref<3x64x64xbf16, #tpu.memory_space<vmem>>, vector<1x64x64xbf16>
    %320 = vector.shape_cast %319 : vector<1x64x64xbf16> to vector<64x64xbf16>
    %cst_247 = arith.constant dense<0.000000e+00> : vector<18x64xf32>
    %321 = tpu.matmul %318, %320, %cst_247 {dimension_numbers = #tpu.dot_dimension_numbers<[1], [0], [0], [1], [0, 0, 1, 1], [], []>} : vector<18x64xbf16>, vector<64x64xbf16>, vector<18x64xf32> -> vector<18x64xf32>
    %322 = arith.addf %317, %321 : vector<18x64xf32>
    %323 = vector.extract_strided_slice %313 {offsets = [2, 0], sizes = [18, 64], strides = [1, 1]} : vector<20x64xbf16> to vector<18x64xbf16>
    %c2_248 = arith.constant 2 : index
    %c0_249 = arith.constant 0 : index
    %c0_250 = arith.constant 0 : index
    %324 = vector.load %arg11[%c2_248, %c0_249, %c0_250] : memref<3x64x64xbf16, #tpu.memory_space<vmem>>, vector<1x64x64xbf16>
    %325 = vector.shape_cast %324 : vector<1x64x64xbf16> to vector<64x64xbf16>
    %cst_251 = arith.constant dense<0.000000e+00> : vector<18x64xf32>
    %326 = tpu.matmul %323, %325, %cst_251 {dimension_numbers = #tpu.dot_dimension_numbers<[1], [0], [0], [1], [0, 0, 1, 1], [], []>} : vector<18x64xbf16>, vector<64x64xbf16>, vector<18x64xf32> -> vector<18x64xf32>
    %327 = arith.addf %322, %326 : vector<18x64xf32>
    %cst_252 = arith.constant 0.000000e+00 : f32
    %328 = vector.broadcast %cst_252 : f32 to vector<20x64xf32>
    %c0_253 = arith.constant 0 : index
    %c0_254 = arith.constant 0 : index
    %329 = vector.load %arg21[%c0_253, %c0_254] : memref<20x64xf32, #tpu.memory_space<vmem>>, vector<20x64xf32>
    tpu.vector_store %arg21[%c0_253, %c0_254], %328 {strides = array<i32>} : memref<20x64xf32, #tpu.memory_space<vmem>>, vector<20x64xf32>,
    %330 = vector.extract_strided_slice %327 {offsets = [0, 0], sizes = [8, 64], strides = [1, 1]} : vector<18x64xf32> to vector<8x64xf32>
    %cst_255 = arith.constant 0.000000e+00 : f32
    %331 = vector.broadcast %cst_255 : f32 to vector<8x64xf32>
    %332 = arith.maximumf %330, %331 : vector<8x64xf32>
    %c1_256 = arith.constant 1 : index
    %c0_257 = arith.constant 0 : index
    %333 = vector.load %arg21[%c1_256, %c0_257] : memref<20x64xf32, #tpu.memory_space<vmem>>, vector<8x64xf32>
    tpu.vector_store %arg21[%c1_256, %c0_257], %332 {strides = array<i32>} : memref<20x64xf32, #tpu.memory_space<vmem>>, vector<8x64xf32>,
    %334 = vector.extract_strided_slice %327 {offsets = [10, 0], sizes = [8, 64], strides = [1, 1]} : vector<18x64xf32> to vector<8x64xf32>
    %cst_258 = arith.constant 0.000000e+00 : f32
    %335 = vector.broadcast %cst_258 : f32 to vector<8x64xf32>
    %336 = arith.maximumf %334, %335 : vector<8x64xf32>
    %c11_259 = arith.constant 11 : index
    %c0_260 = arith.constant 0 : index
    %337 = vector.load %arg21[%c11_259, %c0_260] : memref<20x64xf32, #tpu.memory_space<vmem>>, vector<8x64xf32>
    tpu.vector_store %arg21[%c11_259, %c0_260], %336 {strides = array<i32>} : memref<20x64xf32, #tpu.memory_space<vmem>>, vector<8x64xf32>,
    %c0_261 = arith.constant 0 : index
    %c0_262 = arith.constant 0 : index
    %338 = vector.load %arg21[%c0_261, %c0_262] : memref<20x64xf32, #tpu.memory_space<vmem>>, vector<20x64xf32>
    %339 = arith.truncf %338 : vector<20x64xf32> to vector<20x64xbf16>
    %340 = vector.extract_strided_slice %339 {offsets = [0, 0], sizes = [18, 64], strides = [1, 1]} : vector<20x64xbf16> to vector<18x64xbf16>
    %c0_263 = arith.constant 0 : index
    %c0_264 = arith.constant 0 : index
    %c0_265 = arith.constant 0 : index
    %341 = vector.load %arg12[%c0_263, %c0_264, %c0_265] : memref<3x64x64xbf16, #tpu.memory_space<vmem>>, vector<1x64x64xbf16>
    %342 = vector.shape_cast %341 : vector<1x64x64xbf16> to vector<64x64xbf16>
    %cst_266 = arith.constant dense<0.000000e+00> : vector<18x64xf32>
    %343 = tpu.matmul %340, %342, %cst_266 {dimension_numbers = #tpu.dot_dimension_numbers<[1], [0], [0], [1], [0, 0, 1, 1], [], []>} : vector<18x64xbf16>, vector<64x64xbf16>, vector<18x64xf32> -> vector<18x64xf32>
    %344 = vector.extract_strided_slice %339 {offsets = [1, 0], sizes = [18, 64], strides = [1, 1]} : vector<20x64xbf16> to vector<18x64xbf16>
    %c1_267 = arith.constant 1 : index
    %c0_268 = arith.constant 0 : index
    %c0_269 = arith.constant 0 : index
    %345 = vector.load %arg12[%c1_267, %c0_268, %c0_269] : memref<3x64x64xbf16, #tpu.memory_space<vmem>>, vector<1x64x64xbf16>
    %346 = vector.shape_cast %345 : vector<1x64x64xbf16> to vector<64x64xbf16>
    %cst_270 = arith.constant dense<0.000000e+00> : vector<18x64xf32>
    %347 = tpu.matmul %344, %346, %cst_270 {dimension_numbers = #tpu.dot_dimension_numbers<[1], [0], [0], [1], [0, 0, 1, 1], [], []>} : vector<18x64xbf16>, vector<64x64xbf16>, vector<18x64xf32> -> vector<18x64xf32>
    %348 = arith.addf %343, %347 : vector<18x64xf32>
    %349 = vector.extract_strided_slice %339 {offsets = [2, 0], sizes = [18, 64], strides = [1, 1]} : vector<20x64xbf16> to vector<18x64xbf16>
    %c2_271 = arith.constant 2 : index
    %c0_272 = arith.constant 0 : index
    %c0_273 = arith.constant 0 : index
    %350 = vector.load %arg12[%c2_271, %c0_272, %c0_273] : memref<3x64x64xbf16, #tpu.memory_space<vmem>>, vector<1x64x64xbf16>
    %351 = vector.shape_cast %350 : vector<1x64x64xbf16> to vector<64x64xbf16>
    %cst_274 = arith.constant dense<0.000000e+00> : vector<18x64xf32>
    %352 = tpu.matmul %349, %351, %cst_274 {dimension_numbers = #tpu.dot_dimension_numbers<[1], [0], [0], [1], [0, 0, 1, 1], [], []>} : vector<18x64xbf16>, vector<64x64xbf16>, vector<18x64xf32> -> vector<18x64xf32>
    %353 = arith.addf %348, %352 : vector<18x64xf32>
    %cst_275 = arith.constant 0.000000e+00 : f32
    %354 = vector.broadcast %cst_275 : f32 to vector<20x64xf32>
    %c0_276 = arith.constant 0 : index
    %c0_277 = arith.constant 0 : index
    %355 = vector.load %arg20[%c0_276, %c0_277] : memref<20x64xf32, #tpu.memory_space<vmem>>, vector<20x64xf32>
    tpu.vector_store %arg20[%c0_276, %c0_277], %354 {strides = array<i32>} : memref<20x64xf32, #tpu.memory_space<vmem>>, vector<20x64xf32>,
    %356 = vector.extract_strided_slice %353 {offsets = [0, 0], sizes = [8, 64], strides = [1, 1]} : vector<18x64xf32> to vector<8x64xf32>
    %357 = tpu.iota {dimensions = array<i32: 0>} : vector<4x8xi32>
    %358 = tpu.iota {dimensions = array<i32: 1>} : vector<4x8xi32>
    %c2_i32_278 = arith.constant 2 : i32
    %359 = vector.broadcast %c2_i32_278 : i32 to vector<4x8xi32>
    %360 = arith.muli %359, %357 : vector<4x8xi32>
    %361 = arith.cmpi eq, %358, %360 : vector<4x8xi32>
    %cst_279 = arith.constant 1.000000e+00 : f32
    %cst_280 = arith.constant 0.000000e+00 : f32
    %362 = vector.broadcast %cst_279 : f32 to vector<4x8xf32>
    %363 = vector.broadcast %cst_280 : f32 to vector<4x8xf32>
    %364 = arith.select %361, %362, %363 : vector<4x8xi1>, vector<4x8xf32>
    %cst_281 = arith.constant dense<0.000000e+00> : vector<4x64xf32>
    %365 = tpu.matmul %364, %356, %cst_281 {dimension_numbers = #tpu.dot_dimension_numbers<[1], [0], [0], [1], [0, 0, 1, 1], [], []>} : vector<4x8xf32>, vector<8x64xf32>, vector<4x64xf32> -> vector<4x64xf32>
    %cst_282 = arith.constant 0.000000e+00 : f32
    %366 = vector.broadcast %cst_282 : f32 to vector<4x64xf32>
    %367 = arith.maximumf %365, %366 : vector<4x64xf32>
    %c1_283 = arith.constant 1 : index
    %c0_284 = arith.constant 0 : index
    %368 = vector.load %arg20[%c1_283, %c0_284] : memref<20x64xf32, #tpu.memory_space<vmem>>, vector<4x64xf32>
    tpu.vector_store %arg20[%c1_283, %c0_284], %367 {strides = array<i32>} : memref<20x64xf32, #tpu.memory_space<vmem>>, vector<4x64xf32>,
    %369 = vector.extract_strided_slice %353 {offsets = [10, 0], sizes = [8, 64], strides = [1, 1]} : vector<18x64xf32> to vector<8x64xf32>
    %370 = tpu.iota {dimensions = array<i32: 0>} : vector<4x8xi32>
    %371 = tpu.iota {dimensions = array<i32: 1>} : vector<4x8xi32>
    %c2_i32_285 = arith.constant 2 : i32
    %372 = vector.broadcast %c2_i32_285 : i32 to vector<4x8xi32>
    %373 = arith.muli %372, %370 : vector<4x8xi32>
    %374 = arith.cmpi eq, %371, %373 : vector<4x8xi32>
    %cst_286 = arith.constant 1.000000e+00 : f32
    %cst_287 = arith.constant 0.000000e+00 : f32
    %375 = vector.broadcast %cst_286 : f32 to vector<4x8xf32>
    %376 = vector.broadcast %cst_287 : f32 to vector<4x8xf32>
    %377 = arith.select %374, %375, %376 : vector<4x8xi1>, vector<4x8xf32>
    %cst_288 = arith.constant dense<0.000000e+00> : vector<4x64xf32>
    %378 = tpu.matmul %377, %369, %cst_288 {dimension_numbers = #tpu.dot_dimension_numbers<[1], [0], [0], [1], [0, 0, 1, 1], [], []>} : vector<4x8xf32>, vector<8x64xf32>, vector<4x64xf32> -> vector<4x64xf32>
    %cst_289 = arith.constant 0.000000e+00 : f32
    %379 = vector.broadcast %cst_289 : f32 to vector<4x64xf32>
    %380 = arith.maximumf %378, %379 : vector<4x64xf32>
    %c7_290 = arith.constant 7 : index
    %c0_291 = arith.constant 0 : index
    %381 = vector.load %arg20[%c7_290, %c0_291] : memref<20x64xf32, #tpu.memory_space<vmem>>, vector<4x64xf32>
    tpu.vector_store %arg20[%c7_290, %c0_291], %380 {strides = array<i32>} : memref<20x64xf32, #tpu.memory_space<vmem>>, vector<4x64xf32>,
    %c0_292 = arith.constant 0 : index
    %c0_293 = arith.constant 0 : index
    %382 = vector.load %arg20[%c0_292, %c0_293] : memref<20x64xf32, #tpu.memory_space<vmem>>, vector<20x64xf32>
    %383 = arith.truncf %382 : vector<20x64xf32> to vector<20x64xbf16>
    %384 = vector.extract_strided_slice %383 {offsets = [0, 0], sizes = [10, 64], strides = [1, 1]} : vector<20x64xbf16> to vector<10x64xbf16>
    %c0_294 = arith.constant 0 : index
    %c0_295 = arith.constant 0 : index
    %c0_296 = arith.constant 0 : index
    %385 = vector.load %arg13[%c0_294, %c0_295, %c0_296] : memref<3x64x64xbf16, #tpu.memory_space<vmem>>, vector<1x64x64xbf16>
    %386 = vector.shape_cast %385 : vector<1x64x64xbf16> to vector<64x64xbf16>
    %cst_297 = arith.constant dense<0.000000e+00> : vector<10x64xf32>
    %387 = tpu.matmul %384, %386, %cst_297 {dimension_numbers = #tpu.dot_dimension_numbers<[1], [0], [0], [1], [0, 0, 1, 1], [], []>} : vector<10x64xbf16>, vector<64x64xbf16>, vector<10x64xf32> -> vector<10x64xf32>
    %388 = vector.extract_strided_slice %383 {offsets = [1, 0], sizes = [10, 64], strides = [1, 1]} : vector<20x64xbf16> to vector<10x64xbf16>
    %c1_298 = arith.constant 1 : index
    %c0_299 = arith.constant 0 : index
    %c0_300 = arith.constant 0 : index
    %389 = vector.load %arg13[%c1_298, %c0_299, %c0_300] : memref<3x64x64xbf16, #tpu.memory_space<vmem>>, vector<1x64x64xbf16>
    %390 = vector.shape_cast %389 : vector<1x64x64xbf16> to vector<64x64xbf16>
    %cst_301 = arith.constant dense<0.000000e+00> : vector<10x64xf32>
    %391 = tpu.matmul %388, %390, %cst_301 {dimension_numbers = #tpu.dot_dimension_numbers<[1], [0], [0], [1], [0, 0, 1, 1], [], []>} : vector<10x64xbf16>, vector<64x64xbf16>, vector<10x64xf32> -> vector<10x64xf32>
    %392 = arith.addf %387, %391 : vector<10x64xf32>
    %393 = vector.extract_strided_slice %383 {offsets = [2, 0], sizes = [10, 64], strides = [1, 1]} : vector<20x64xbf16> to vector<10x64xbf16>
    %c2_302 = arith.constant 2 : index
    %c0_303 = arith.constant 0 : index
    %c0_304 = arith.constant 0 : index
    %394 = vector.load %arg13[%c2_302, %c0_303, %c0_304] : memref<3x64x64xbf16, #tpu.memory_space<vmem>>, vector<1x64x64xbf16>
    %395 = vector.shape_cast %394 : vector<1x64x64xbf16> to vector<64x64xbf16>
    %cst_305 = arith.constant dense<0.000000e+00> : vector<10x64xf32>
    %396 = tpu.matmul %393, %395, %cst_305 {dimension_numbers = #tpu.dot_dimension_numbers<[1], [0], [0], [1], [0, 0, 1, 1], [], []>} : vector<10x64xbf16>, vector<64x64xbf16>, vector<10x64xf32> -> vector<10x64xf32>
    %397 = arith.addf %392, %396 : vector<10x64xf32>
    %cst_306 = arith.constant 0.000000e+00 : f32
    %398 = vector.broadcast %cst_306 : f32 to vector<20x64xf32>
    %c0_307 = arith.constant 0 : index
    %c0_308 = arith.constant 0 : index
    %399 = vector.load %arg21[%c0_307, %c0_308] : memref<20x64xf32, #tpu.memory_space<vmem>>, vector<20x64xf32>
    tpu.vector_store %arg21[%c0_307, %c0_308], %398 {strides = array<i32>} : memref<20x64xf32, #tpu.memory_space<vmem>>, vector<20x64xf32>,
    %400 = vector.extract_strided_slice %397 {offsets = [0, 0], sizes = [4, 64], strides = [1, 1]} : vector<10x64xf32> to vector<4x64xf32>
    %cst_309 = arith.constant 0.000000e+00 : f32
    %401 = vector.broadcast %cst_309 : f32 to vector<4x64xf32>
    %402 = arith.maximumf %400, %401 : vector<4x64xf32>
    %c1_310 = arith.constant 1 : index
    %c0_311 = arith.constant 0 : index
    %403 = vector.load %arg21[%c1_310, %c0_311] : memref<20x64xf32, #tpu.memory_space<vmem>>, vector<4x64xf32>
    tpu.vector_store %arg21[%c1_310, %c0_311], %402 {strides = array<i32>} : memref<20x64xf32, #tpu.memory_space<vmem>>, vector<4x64xf32>,
    %404 = vector.extract_strided_slice %397 {offsets = [6, 0], sizes = [4, 64], strides = [1, 1]} : vector<10x64xf32> to vector<4x64xf32>
    %cst_312 = arith.constant 0.000000e+00 : f32
    %405 = vector.broadcast %cst_312 : f32 to vector<4x64xf32>
    %406 = arith.maximumf %404, %405 : vector<4x64xf32>
    %c7_313 = arith.constant 7 : index
    %c0_314 = arith.constant 0 : index
    %407 = vector.load %arg21[%c7_313, %c0_314] : memref<20x64xf32, #tpu.memory_space<vmem>>, vector<4x64xf32>
    tpu.vector_store %arg21[%c7_313, %c0_314], %406 {strides = array<i32>} : memref<20x64xf32, #tpu.memory_space<vmem>>, vector<4x64xf32>,
    %c0_315 = arith.constant 0 : index
    %c0_316 = arith.constant 0 : index
    %408 = vector.load %arg21[%c0_315, %c0_316] : memref<20x64xf32, #tpu.memory_space<vmem>>, vector<20x64xf32>
    %409 = arith.truncf %408 : vector<20x64xf32> to vector<20x64xbf16>
    %410 = vector.extract_strided_slice %409 {offsets = [0, 0], sizes = [10, 64], strides = [1, 1]} : vector<20x64xbf16> to vector<10x64xbf16>
    %c0_317 = arith.constant 0 : index
    %c0_318 = arith.constant 0 : index
    %c0_319 = arith.constant 0 : index
    %411 = vector.load %arg14[%c0_317, %c0_318, %c0_319] : memref<3x64x32xbf16, #tpu.memory_space<vmem>>, vector<1x64x32xbf16>
    %412 = vector.shape_cast %411 : vector<1x64x32xbf16> to vector<64x32xbf16>
    %cst_320 = arith.constant dense<0.000000e+00> : vector<10x32xf32>
    %413 = tpu.matmul %410, %412, %cst_320 {dimension_numbers = #tpu.dot_dimension_numbers<[1], [0], [0], [1], [0, 0, 1, 1], [], []>} : vector<10x64xbf16>, vector<64x32xbf16>, vector<10x32xf32> -> vector<10x32xf32>
    %414 = vector.extract_strided_slice %409 {offsets = [1, 0], sizes = [10, 64], strides = [1, 1]} : vector<20x64xbf16> to vector<10x64xbf16>
    %c1_321 = arith.constant 1 : index
    %c0_322 = arith.constant 0 : index
    %c0_323 = arith.constant 0 : index
    %415 = vector.load %arg14[%c1_321, %c0_322, %c0_323] : memref<3x64x32xbf16, #tpu.memory_space<vmem>>, vector<1x64x32xbf16>
    %416 = vector.shape_cast %415 : vector<1x64x32xbf16> to vector<64x32xbf16>
    %cst_324 = arith.constant dense<0.000000e+00> : vector<10x32xf32>
    %417 = tpu.matmul %414, %416, %cst_324 {dimension_numbers = #tpu.dot_dimension_numbers<[1], [0], [0], [1], [0, 0, 1, 1], [], []>} : vector<10x64xbf16>, vector<64x32xbf16>, vector<10x32xf32> -> vector<10x32xf32>
    %418 = arith.addf %413, %417 : vector<10x32xf32>
    %419 = vector.extract_strided_slice %409 {offsets = [2, 0], sizes = [10, 64], strides = [1, 1]} : vector<20x64xbf16> to vector<10x64xbf16>
    %c2_325 = arith.constant 2 : index
    %c0_326 = arith.constant 0 : index
    %c0_327 = arith.constant 0 : index
    %420 = vector.load %arg14[%c2_325, %c0_326, %c0_327] : memref<3x64x32xbf16, #tpu.memory_space<vmem>>, vector<1x64x32xbf16>
    %421 = vector.shape_cast %420 : vector<1x64x32xbf16> to vector<64x32xbf16>
    %cst_328 = arith.constant dense<0.000000e+00> : vector<10x32xf32>
    %422 = tpu.matmul %419, %421, %cst_328 {dimension_numbers = #tpu.dot_dimension_numbers<[1], [0], [0], [1], [0, 0, 1, 1], [], []>} : vector<10x64xbf16>, vector<64x32xbf16>, vector<10x32xf32> -> vector<10x32xf32>
    %423 = arith.addf %418, %422 : vector<10x32xf32>
    %cst_329 = arith.constant 0.000000e+00 : f32
    %424 = vector.broadcast %cst_329 : f32 to vector<20x64xf32>
    %c0_330 = arith.constant 0 : index
    %c0_331 = arith.constant 0 : index
    %425 = vector.load %arg20[%c0_330, %c0_331] : memref<20x64xf32, #tpu.memory_space<vmem>>, vector<20x64xf32>
    tpu.vector_store %arg20[%c0_330, %c0_331], %424 {strides = array<i32>} : memref<20x64xf32, #tpu.memory_space<vmem>>, vector<20x64xf32>,
    %426 = vector.extract_strided_slice %423 {offsets = [0, 0], sizes = [4, 32], strides = [1, 1]} : vector<10x32xf32> to vector<4x32xf32>
    %427 = tpu.iota {dimensions = array<i32: 0>} : vector<2x4xi32>
    %428 = tpu.iota {dimensions = array<i32: 1>} : vector<2x4xi32>
    %c2_i32_332 = arith.constant 2 : i32
    %429 = vector.broadcast %c2_i32_332 : i32 to vector<2x4xi32>
    %430 = arith.muli %429, %427 : vector<2x4xi32>
    %431 = arith.cmpi eq, %428, %430 : vector<2x4xi32>
    %cst_333 = arith.constant 1.000000e+00 : f32
    %cst_334 = arith.constant 0.000000e+00 : f32
    %432 = vector.broadcast %cst_333 : f32 to vector<2x4xf32>
    %433 = vector.broadcast %cst_334 : f32 to vector<2x4xf32>
    %434 = arith.select %431, %432, %433 : vector<2x4xi1>, vector<2x4xf32>
    %cst_335 = arith.constant dense<0.000000e+00> : vector<2x32xf32>
    %435 = tpu.matmul %434, %426, %cst_335 {dimension_numbers = #tpu.dot_dimension_numbers<[1], [0], [0], [1], [0, 0, 1, 1], [], []>} : vector<2x4xf32>, vector<4x32xf32>, vector<2x32xf32> -> vector<2x32xf32>
    %cst_336 = arith.constant 0.000000e+00 : f32
    %436 = vector.broadcast %cst_336 : f32 to vector<2x32xf32>
    %437 = arith.maximumf %435, %436 : vector<2x32xf32>
    %c1_337 = arith.constant 1 : index
    %c0_338 = arith.constant 0 : index
    %438 = vector.load %arg20[%c1_337, %c0_338] : memref<20x64xf32, #tpu.memory_space<vmem>>, vector<2x32xf32>
    tpu.vector_store %arg20[%c1_337, %c0_338], %437 {strides = array<i32>} : memref<20x64xf32, #tpu.memory_space<vmem>>, vector<2x32xf32>,
    %439 = vector.extract_strided_slice %423 {offsets = [6, 0], sizes = [4, 32], strides = [1, 1]} : vector<10x32xf32> to vector<4x32xf32>
    %440 = tpu.iota {dimensions = array<i32: 0>} : vector<2x4xi32>
    %441 = tpu.iota {dimensions = array<i32: 1>} : vector<2x4xi32>
    %c2_i32_339 = arith.constant 2 : i32
    %442 = vector.broadcast %c2_i32_339 : i32 to vector<2x4xi32>
    %443 = arith.muli %442, %440 : vector<2x4xi32>
    %444 = arith.cmpi eq, %441, %443 : vector<2x4xi32>
    %cst_340 = arith.constant 1.000000e+00 : f32
    %cst_341 = arith.constant 0.000000e+00 : f32
    %445 = vector.broadcast %cst_340 : f32 to vector<2x4xf32>
    %446 = vector.broadcast %cst_341 : f32 to vector<2x4xf32>
    %447 = arith.select %444, %445, %446 : vector<2x4xi1>, vector<2x4xf32>
    %cst_342 = arith.constant dense<0.000000e+00> : vector<2x32xf32>
    %448 = tpu.matmul %447, %439, %cst_342 {dimension_numbers = #tpu.dot_dimension_numbers<[1], [0], [0], [1], [0, 0, 1, 1], [], []>} : vector<2x4xf32>, vector<4x32xf32>, vector<2x32xf32> -> vector<2x32xf32>
    %cst_343 = arith.constant 0.000000e+00 : f32
    %449 = vector.broadcast %cst_343 : f32 to vector<2x32xf32>
    %450 = arith.maximumf %448, %449 : vector<2x32xf32>
    %c5_344 = arith.constant 5 : index
    %c0_345 = arith.constant 0 : index
    %451 = vector.load %arg20[%c5_344, %c0_345] : memref<20x64xf32, #tpu.memory_space<vmem>>, vector<2x32xf32>
    tpu.vector_store %arg20[%c5_344, %c0_345], %450 {strides = array<i32>} : memref<20x64xf32, #tpu.memory_space<vmem>>, vector<2x32xf32>,
    %c0_346 = arith.constant 0 : index
    %c0_347 = arith.constant 0 : index
    %452 = vector.load %arg20[%c0_346, %c0_347] : memref<20x64xf32, #tpu.memory_space<vmem>>, vector<20x64xf32>
    %453 = arith.truncf %452 : vector<20x64xf32> to vector<20x64xbf16>
    %454 = vector.extract_strided_slice %453 {offsets = [0, 0], sizes = [6, 32], strides = [1, 1]} : vector<20x64xbf16> to vector<6x32xbf16>
    %c0_348 = arith.constant 0 : index
    %c0_349 = arith.constant 0 : index
    %c0_350 = arith.constant 0 : index
    %455 = vector.load %arg15[%c0_348, %c0_349, %c0_350] : memref<3x32x32xbf16, #tpu.memory_space<vmem>>, vector<1x32x32xbf16>
    %456 = vector.shape_cast %455 : vector<1x32x32xbf16> to vector<32x32xbf16>
    %cst_351 = arith.constant dense<0.000000e+00> : vector<6x32xf32>
    %457 = tpu.matmul %454, %456, %cst_351 {dimension_numbers = #tpu.dot_dimension_numbers<[1], [0], [0], [1], [0, 0, 1, 1], [], []>} : vector<6x32xbf16>, vector<32x32xbf16>, vector<6x32xf32> -> vector<6x32xf32>
    %458 = vector.extract_strided_slice %453 {offsets = [1, 0], sizes = [6, 32], strides = [1, 1]} : vector<20x64xbf16> to vector<6x32xbf16>
    %c1_352 = arith.constant 1 : index
    %c0_353 = arith.constant 0 : index
    %c0_354 = arith.constant 0 : index
    %459 = vector.load %arg15[%c1_352, %c0_353, %c0_354] : memref<3x32x32xbf16, #tpu.memory_space<vmem>>, vector<1x32x32xbf16>
    %460 = vector.shape_cast %459 : vector<1x32x32xbf16> to vector<32x32xbf16>
    %cst_355 = arith.constant dense<0.000000e+00> : vector<6x32xf32>
    %461 = tpu.matmul %458, %460, %cst_355 {dimension_numbers = #tpu.dot_dimension_numbers<[1], [0], [0], [1], [0, 0, 1, 1], [], []>} : vector<6x32xbf16>, vector<32x32xbf16>, vector<6x32xf32> -> vector<6x32xf32>
    %462 = arith.addf %457, %461 : vector<6x32xf32>
    %463 = vector.extract_strided_slice %453 {offsets = [2, 0], sizes = [6, 32], strides = [1, 1]} : vector<20x64xbf16> to vector<6x32xbf16>
    %c2_356 = arith.constant 2 : index
    %c0_357 = arith.constant 0 : index
    %c0_358 = arith.constant 0 : index
    %464 = vector.load %arg15[%c2_356, %c0_357, %c0_358] : memref<3x32x32xbf16, #tpu.memory_space<vmem>>, vector<1x32x32xbf16>
    %465 = vector.shape_cast %464 : vector<1x32x32xbf16> to vector<32x32xbf16>
    %cst_359 = arith.constant dense<0.000000e+00> : vector<6x32xf32>
    %466 = tpu.matmul %463, %465, %cst_359 {dimension_numbers = #tpu.dot_dimension_numbers<[1], [0], [0], [1], [0, 0, 1, 1], [], []>} : vector<6x32xbf16>, vector<32x32xbf16>, vector<6x32xf32> -> vector<6x32xf32>
    %467 = arith.addf %462, %466 : vector<6x32xf32>
    %cst_360 = arith.constant 0.000000e+00 : f32
    %468 = vector.broadcast %cst_360 : f32 to vector<20x64xf32>
    %c0_361 = arith.constant 0 : index
    %c0_362 = arith.constant 0 : index
    %469 = vector.load %arg21[%c0_361, %c0_362] : memref<20x64xf32, #tpu.memory_space<vmem>>, vector<20x64xf32>
    tpu.vector_store %arg21[%c0_361, %c0_362], %468 {strides = array<i32>} : memref<20x64xf32, #tpu.memory_space<vmem>>, vector<20x64xf32>,
    %470 = vector.extract_strided_slice %467 {offsets = [0, 0], sizes = [2, 32], strides = [1, 1]} : vector<6x32xf32> to vector<2x32xf32>
    %cst_363 = arith.constant 0.000000e+00 : f32
    %471 = vector.broadcast %cst_363 : f32 to vector<2x32xf32>
    %472 = arith.maximumf %470, %471 : vector<2x32xf32>
    %c1_364 = arith.constant 1 : index
    %c0_365 = arith.constant 0 : index
    %473 = vector.load %arg21[%c1_364, %c0_365] : memref<20x64xf32, #tpu.memory_space<vmem>>, vector<2x32xf32>
    tpu.vector_store %arg21[%c1_364, %c0_365], %472 {strides = array<i32>} : memref<20x64xf32, #tpu.memory_space<vmem>>, vector<2x32xf32>,
    %474 = vector.extract_strided_slice %467 {offsets = [4, 0], sizes = [2, 32], strides = [1, 1]} : vector<6x32xf32> to vector<2x32xf32>
    %cst_366 = arith.constant 0.000000e+00 : f32
    %475 = vector.broadcast %cst_366 : f32 to vector<2x32xf32>
    %476 = arith.maximumf %474, %475 : vector<2x32xf32>
    %c5_367 = arith.constant 5 : index
    %c0_368 = arith.constant 0 : index
    %477 = vector.load %arg21[%c5_367, %c0_368] : memref<20x64xf32, #tpu.memory_space<vmem>>, vector<2x32xf32>
    tpu.vector_store %arg21[%c5_367, %c0_368], %476 {strides = array<i32>} : memref<20x64xf32, #tpu.memory_space<vmem>>, vector<2x32xf32>,
    %c0_369 = arith.constant 0 : index
    %c0_370 = arith.constant 0 : index
    %478 = vector.load %arg21[%c0_369, %c0_370] : memref<20x64xf32, #tpu.memory_space<vmem>>, vector<20x64xf32>
    %479 = arith.truncf %478 : vector<20x64xf32> to vector<20x64xbf16>
    %480 = vector.extract_strided_slice %479 {offsets = [0, 0], sizes = [6, 32], strides = [1, 1]} : vector<20x64xbf16> to vector<6x32xbf16>
    %c0_371 = arith.constant 0 : index
    %c0_372 = arith.constant 0 : index
    %c0_373 = arith.constant 0 : index
    %481 = vector.load %arg16[%c0_371, %c0_372, %c0_373] : memref<3x32x32xbf16, #tpu.memory_space<vmem>>, vector<1x32x32xbf16>
    %482 = vector.shape_cast %481 : vector<1x32x32xbf16> to vector<32x32xbf16>
    %cst_374 = arith.constant dense<0.000000e+00> : vector<6x32xf32>
    %483 = tpu.matmul %480, %482, %cst_374 {dimension_numbers = #tpu.dot_dimension_numbers<[1], [0], [0], [1], [0, 0, 1, 1], [], []>} : vector<6x32xbf16>, vector<32x32xbf16>, vector<6x32xf32> -> vector<6x32xf32>
    %484 = vector.extract_strided_slice %479 {offsets = [1, 0], sizes = [6, 32], strides = [1, 1]} : vector<20x64xbf16> to vector<6x32xbf16>
    %c1_375 = arith.constant 1 : index
    %c0_376 = arith.constant 0 : index
    %c0_377 = arith.constant 0 : index
    %485 = vector.load %arg16[%c1_375, %c0_376, %c0_377] : memref<3x32x32xbf16, #tpu.memory_space<vmem>>, vector<1x32x32xbf16>
    %486 = vector.shape_cast %485 : vector<1x32x32xbf16> to vector<32x32xbf16>
    %cst_378 = arith.constant dense<0.000000e+00> : vector<6x32xf32>
    %487 = tpu.matmul %484, %486, %cst_378 {dimension_numbers = #tpu.dot_dimension_numbers<[1], [0], [0], [1], [0, 0, 1, 1], [], []>} : vector<6x32xbf16>, vector<32x32xbf16>, vector<6x32xf32> -> vector<6x32xf32>
    %488 = arith.addf %483, %487 : vector<6x32xf32>
    %489 = vector.extract_strided_slice %479 {offsets = [2, 0], sizes = [6, 32], strides = [1, 1]} : vector<20x64xbf16> to vector<6x32xbf16>
    %c2_379 = arith.constant 2 : index
    %c0_380 = arith.constant 0 : index
    %c0_381 = arith.constant 0 : index
    %490 = vector.load %arg16[%c2_379, %c0_380, %c0_381] : memref<3x32x32xbf16, #tpu.memory_space<vmem>>, vector<1x32x32xbf16>
    %491 = vector.shape_cast %490 : vector<1x32x32xbf16> to vector<32x32xbf16>
    %cst_382 = arith.constant dense<0.000000e+00> : vector<6x32xf32>
    %492 = tpu.matmul %489, %491, %cst_382 {dimension_numbers = #tpu.dot_dimension_numbers<[1], [0], [0], [1], [0, 0, 1, 1], [], []>} : vector<6x32xbf16>, vector<32x32xbf16>, vector<6x32xf32> -> vector<6x32xf32>
    %493 = arith.addf %488, %492 : vector<6x32xf32>
    %cst_383 = arith.constant 0.000000e+00 : f32
    %494 = vector.broadcast %cst_383 : f32 to vector<20x64xf32>
    %c0_384 = arith.constant 0 : index
    %c0_385 = arith.constant 0 : index
    %495 = vector.load %arg20[%c0_384, %c0_385] : memref<20x64xf32, #tpu.memory_space<vmem>>, vector<20x64xf32>
    tpu.vector_store %arg20[%c0_384, %c0_385], %494 {strides = array<i32>} : memref<20x64xf32, #tpu.memory_space<vmem>>, vector<20x64xf32>,
    %496 = vector.extract_strided_slice %493 {offsets = [0, 0], sizes = [2, 32], strides = [1, 1]} : vector<6x32xf32> to vector<2x32xf32>
    %497 = vector.extract_strided_slice %496 {offsets = [0, 0], sizes = [1, 32], strides = [1, 1]} : vector<2x32xf32> to vector<1x32xf32>
    %cst_386 = arith.constant 0.000000e+00 : f32
    %498 = vector.broadcast %cst_386 : f32 to vector<1x32xf32>
    %499 = arith.maximumf %497, %498 : vector<1x32xf32>
    %c1_387 = arith.constant 1 : index
    %c0_388 = arith.constant 0 : index
    %500 = vector.load %arg20[%c1_387, %c0_388] : memref<20x64xf32, #tpu.memory_space<vmem>>, vector<1x32xf32>
    tpu.vector_store %arg20[%c1_387, %c0_388], %499 {strides = array<i32>} : memref<20x64xf32, #tpu.memory_space<vmem>>, vector<1x32xf32>,
    %501 = vector.extract_strided_slice %493 {offsets = [4, 0], sizes = [2, 32], strides = [1, 1]} : vector<6x32xf32> to vector<2x32xf32>
    %502 = vector.extract_strided_slice %501 {offsets = [0, 0], sizes = [1, 32], strides = [1, 1]} : vector<2x32xf32> to vector<1x32xf32>
    %cst_389 = arith.constant 0.000000e+00 : f32
    %503 = vector.broadcast %cst_389 : f32 to vector<1x32xf32>
    %504 = arith.maximumf %502, %503 : vector<1x32xf32>
    %c4_390 = arith.constant 4 : index
    %c0_391 = arith.constant 0 : index
    %505 = vector.load %arg20[%c4_390, %c0_391] : memref<20x64xf32, #tpu.memory_space<vmem>>, vector<1x32xf32>
    tpu.vector_store %arg20[%c4_390, %c0_391], %504 {strides = array<i32>} : memref<20x64xf32, #tpu.memory_space<vmem>>, vector<1x32xf32>,
    %c0_392 = arith.constant 0 : index
    %c0_393 = arith.constant 0 : index
    %506 = vector.load %arg20[%c0_392, %c0_393] : memref<20x64xf32, #tpu.memory_space<vmem>>, vector<20x64xf32>
    %507 = arith.truncf %506 : vector<20x64xf32> to vector<20x64xbf16>
    %508 = vector.extract_strided_slice %507 {offsets = [0, 0], sizes = [4, 32], strides = [1, 1]} : vector<20x64xbf16> to vector<4x32xbf16>
    %c0_394 = arith.constant 0 : index
    %c0_395 = arith.constant 0 : index
    %c0_396 = arith.constant 0 : index
    %509 = vector.load %arg17[%c0_394, %c0_395, %c0_396] : memref<3x32x32xbf16, #tpu.memory_space<vmem>>, vector<1x32x32xbf16>
    %510 = vector.shape_cast %509 : vector<1x32x32xbf16> to vector<32x32xbf16>
    %cst_397 = arith.constant dense<0.000000e+00> : vector<4x32xf32>
    %511 = tpu.matmul %508, %510, %cst_397 {dimension_numbers = #tpu.dot_dimension_numbers<[1], [0], [0], [1], [0, 0, 1, 1], [], []>} : vector<4x32xbf16>, vector<32x32xbf16>, vector<4x32xf32> -> vector<4x32xf32>
    %512 = vector.extract_strided_slice %507 {offsets = [1, 0], sizes = [4, 32], strides = [1, 1]} : vector<20x64xbf16> to vector<4x32xbf16>
    %c1_398 = arith.constant 1 : index
    %c0_399 = arith.constant 0 : index
    %c0_400 = arith.constant 0 : index
    %513 = vector.load %arg17[%c1_398, %c0_399, %c0_400] : memref<3x32x32xbf16, #tpu.memory_space<vmem>>, vector<1x32x32xbf16>
    %514 = vector.shape_cast %513 : vector<1x32x32xbf16> to vector<32x32xbf16>
    %cst_401 = arith.constant dense<0.000000e+00> : vector<4x32xf32>
    %515 = tpu.matmul %512, %514, %cst_401 {dimension_numbers = #tpu.dot_dimension_numbers<[1], [0], [0], [1], [0, 0, 1, 1], [], []>} : vector<4x32xbf16>, vector<32x32xbf16>, vector<4x32xf32> -> vector<4x32xf32>
    %516 = arith.addf %511, %515 : vector<4x32xf32>
    %517 = vector.extract_strided_slice %507 {offsets = [2, 0], sizes = [4, 32], strides = [1, 1]} : vector<20x64xbf16> to vector<4x32xbf16>
    %c2_402 = arith.constant 2 : index
    %c0_403 = arith.constant 0 : index
    %c0_404 = arith.constant 0 : index
    %518 = vector.load %arg17[%c2_402, %c0_403, %c0_404] : memref<3x32x32xbf16, #tpu.memory_space<vmem>>, vector<1x32x32xbf16>
    %519 = vector.shape_cast %518 : vector<1x32x32xbf16> to vector<32x32xbf16>
    %cst_405 = arith.constant dense<0.000000e+00> : vector<4x32xf32>
    %520 = tpu.matmul %517, %519, %cst_405 {dimension_numbers = #tpu.dot_dimension_numbers<[1], [0], [0], [1], [0, 0, 1, 1], [], []>} : vector<4x32xbf16>, vector<32x32xbf16>, vector<4x32xf32> -> vector<4x32xf32>
    %521 = arith.addf %516, %520 : vector<4x32xf32>
    %cst_406 = arith.constant 0.000000e+00 : f32
    %522 = vector.broadcast %cst_406 : f32 to vector<20x64xf32>
    %c0_407 = arith.constant 0 : index
    %c0_408 = arith.constant 0 : index
    %523 = vector.load %arg21[%c0_407, %c0_408] : memref<20x64xf32, #tpu.memory_space<vmem>>, vector<20x64xf32>
    tpu.vector_store %arg21[%c0_407, %c0_408], %522 {strides = array<i32>} : memref<20x64xf32, #tpu.memory_space<vmem>>, vector<20x64xf32>,
    %524 = vector.extract_strided_slice %521 {offsets = [0, 0], sizes = [1, 32], strides = [1, 1]} : vector<4x32xf32> to vector<1x32xf32>
    %cst_409 = arith.constant 0.000000e+00 : f32
    %525 = vector.broadcast %cst_409 : f32 to vector<1x32xf32>
    %526 = arith.maximumf %524, %525 : vector<1x32xf32>
    %c1_410 = arith.constant 1 : index
    %c0_411 = arith.constant 0 : index
    %527 = vector.load %arg21[%c1_410, %c0_411] : memref<20x64xf32, #tpu.memory_space<vmem>>, vector<1x32xf32>
    tpu.vector_store %arg21[%c1_410, %c0_411], %526 {strides = array<i32>} : memref<20x64xf32, #tpu.memory_space<vmem>>, vector<1x32xf32>,
    %528 = vector.extract_strided_slice %521 {offsets = [3, 0], sizes = [1, 32], strides = [1, 1]} : vector<4x32xf32> to vector<1x32xf32>
    %cst_412 = arith.constant 0.000000e+00 : f32
    %529 = vector.broadcast %cst_412 : f32 to vector<1x32xf32>
    %530 = arith.maximumf %528, %529 : vector<1x32xf32>
    %c4_413 = arith.constant 4 : index
    %c0_414 = arith.constant 0 : index
    %531 = vector.load %arg21[%c4_413, %c0_414] : memref<20x64xf32, #tpu.memory_space<vmem>>, vector<1x32xf32>
    tpu.vector_store %arg21[%c4_413, %c0_414], %530 {strides = array<i32>} : memref<20x64xf32, #tpu.memory_space<vmem>>, vector<1x32xf32>,
    %c1_415 = arith.constant 1 : index
    %c0_416 = arith.constant 0 : index
    %532 = vector.load %arg21[%c1_415, %c0_416] : memref<20x64xf32, #tpu.memory_space<vmem>>, vector<1x32xf32>
    %c0_417 = arith.constant 0 : index
    %c0_418 = arith.constant 0 : index
    %533 = vector.load %arg19[%c0_417, %c0_418] : memref<2x32xf32, #tpu.memory_space<vmem>>, vector<1x32xf32>
    tpu.vector_store %arg19[%c0_417, %c0_418], %532 {strides = array<i32>} : memref<2x32xf32, #tpu.memory_space<vmem>>, vector<1x32xf32>,
    %c4_419 = arith.constant 4 : index
    %c0_420 = arith.constant 0 : index
    %534 = vector.load %arg21[%c4_419, %c0_420] : memref<20x64xf32, #tpu.memory_space<vmem>>, vector<1x32xf32>
    %c1_421 = arith.constant 1 : index
    %c0_422 = arith.constant 0 : index
    %535 = vector.load %arg19[%c1_421, %c0_422] : memref<2x32xf32, #tpu.memory_space<vmem>>, vector<1x32xf32>
    tpu.vector_store %arg19[%c1_421, %c0_422], %534 {strides = array<i32>} : memref<2x32xf32, #tpu.memory_space<vmem>>, vector<1x32xf32>,
    return
  }
}

</mosaic_0001>

<llo_original>
// kernel: encoder_forward.1
$region0: #{encoder_forward.1}
  #allocation0 [shape = 'u32[]', space=smem, size = 0x4, offset = 0x4, fixed_abs, tag = 'smem constant byte address 0x4 - core index']
  #allocation1 [shape = 'u32[72,128]{1,0:T(1,128)}', space=vmem, size = 0x9000, scoped, tag = 'internal scratch']
  #allocation2 [shape = 'f32[20,64]{1,0:T(8,128)}', space=vmem, size = 0x3000, scoped, tag = 'scratch operand']
  #allocation3 [shape = 'f32[20,64]{1,0:T(8,128)}', space=vmem, size = 0x3000, scoped, tag = 'scratch operand']
  %s0 = inlined_call_operand.vmem [shape: f32[36,128], index: 0, kind: input, shape index: {}]
  %s1 = inlined_call_operand.vmem [shape: f32[36,64], index: 1, kind: input, shape index: {}]
  %s2 = inlined_call_operand.vmem [shape: bf16[3,128,64], index: 2, kind: input, shape index: {}]
  %s3 = inlined_call_operand.vmem [shape: bf16[3,64,64], index: 3, kind: input, shape index: {}]
  %s4 = inlined_call_operand.vmem [shape: bf16[3,64,64], index: 4, kind: input, shape index: {}]
  %s5 = inlined_call_operand.vmem [shape: bf16[3,64,64], index: 5, kind: input, shape index: {}]
  %s6 = inlined_call_operand.vmem [shape: bf16[3,64,32], index: 6, kind: input, shape index: {}]
  %s7 = inlined_call_operand.vmem [shape: bf16[3,32,32], index: 7, kind: input, shape index: {}]
  %s8 = inlined_call_operand.vmem [shape: bf16[3,32,32], index: 8, kind: input, shape index: {}]
  %s9 = inlined_call_operand.vmem [shape: bf16[3,32,32], index: 9, kind: input, shape index: {}]
  %s10 = inlined_call_operand.vmem [shape: bf16[3,64,64], index: 10, kind: input, shape index: {}]
  %s11 = inlined_call_operand.vmem [shape: bf16[3,64,64], index: 11, kind: input, shape index: {}]
  %s12 = inlined_call_operand.vmem [shape: bf16[3,64,64], index: 12, kind: input, shape index: {}]
  %s13 = inlined_call_operand.vmem [shape: bf16[3,64,64], index: 13, kind: input, shape index: {}]
  %s14 = inlined_call_operand.vmem [shape: bf16[3,64,32], index: 14, kind: input, shape index: {}]
  %s15 = inlined_call_operand.vmem [shape: bf16[3,32,32], index: 15, kind: input, shape index: {}]
  %s16 = inlined_call_operand.vmem [shape: bf16[3,32,32], index: 16, kind: input, shape index: {}]
  %s17 = inlined_call_operand.vmem [shape: bf16[3,32,32], index: 17, kind: input, shape index: {}]
  %s18 = inlined_call_operand.hbm [shape: f32[2,32], index: 18, kind: output, shape index: {0}]
  %s19 = inlined_call_operand.hbm [shape: f32[2,32], index: 19, kind: output, shape index: {1}]
  %20 = xla_tuple %s18, %s19
  %s21 = sld [smem:[#allocation0]]
  $region90: #{encoder_forward.1} parent=0
    _
  %s23 = ssub.s32 1, %s21
  %s24 = scalar_select 0, %s23, %s21
  $region1: #{encoder_forward.1} parent=0
    #allocation4 [shape = 'u8[1024]{0}', space=vmem, size = 0x400, scoped, tag = 'output window, operand 0, single buffered']
    #allocation5 [shape = 's32[1]{0}', space=sflag, size = 0x4, scoped, tag = 'scoped memory for encoder_forward.1']
    #allocation6 [shape = 'u8[1024]{0}', space=vmem, size = 0x400, scoped, tag = 'output window, operand 1, single buffered']
    #allocation7 [shape = 's32[1]{0}', space=sflag, size = 0x4, scoped, tag = 'scoped memory for encoder_forward.1']
    %25 = vsyncpa [#allocation5], 0
    %26 = vsyncpa [#allocation7], 0
    // Predicated region
    $region2: #{encoder_forward.1} parent=1 // pred_check
      _
    $region3: #{encoder_forward.1} parent=1 // pred_check_branch
      %28 = sbr.rel (0) target = $region5
    $region4: #{encoder_forward.1} parent=1 // pred_region
      _
    $region5: #{encoder_forward.1} parent=1 // pred_fallthru
      _
    // Predicated region
    $region6: #{encoder_forward.1} parent=1 // pred_check
      _
    $region7: #{encoder_forward.1} parent=1 // pred_check_branch
      %30 = sbr.rel (0) target = $region9
    $region8: #{encoder_forward.1} parent=1 // pred_region
      _
    $region9: #{encoder_forward.1} parent=1 // pred_fallthru
      _
    // Predicated region
    $region10: #{encoder_forward.1} parent=1 // pred_check
      _
    $region11: #{encoder_forward.1} parent=1 // pred_check_branch
      %32 = sbr.rel (0) target = $region13
    $region12: #{encoder_forward.1} parent=1 // pred_region
      _
    $region13: #{encoder_forward.1} parent=1 // pred_fallthru
      _
    // Predicated region
    $region14: #{encoder_forward.1} parent=1 // pred_check
      _
    $region15: #{encoder_forward.1} parent=1 // pred_check_branch
      %34 = sbr.rel (0) target = $region17
    $region16: #{encoder_forward.1} parent=1 // pred_region
      _
    $region17: #{encoder_forward.1} parent=1 // pred_fallthru
      _
    // Predicated region
    $region18: #{encoder_forward.1} parent=1 // pred_check
      _
    $region19: #{encoder_forward.1} parent=1 // pred_check_branch
      %36 = sbr.rel (0) target = $region21
    $region20: #{encoder_forward.1} parent=1 // pred_region
      _
    $region21: #{encoder_forward.1} parent=1 // pred_fallthru
      _
    // Predicated region
    $region22: #{encoder_forward.1} parent=1 // pred_check
      _
    $region23: #{encoder_forward.1} parent=1 // pred_check_branch
      %38 = sbr.rel (0) target = $region25
    $region24: #{encoder_forward.1} parent=1 // pred_region
      _
    $region25: #{encoder_forward.1} parent=1 // pred_fallthru
      _
    // Predicated region
    $region26: #{encoder_forward.1} parent=1 // pred_check
      _
    $region27: #{encoder_forward.1} parent=1 // pred_check_branch
      %40 = sbr.rel (0) target = $region29
    $region28: #{encoder_forward.1} parent=1 // pred_region
      _
    $region29: #{encoder_forward.1} parent=1 // pred_fallthru
      _
    // Predicated region
    $region30: #{encoder_forward.1} parent=1 // pred_check
      _
    $region31: #{encoder_forward.1} parent=1 // pred_check_branch
      %42 = sbr.rel (0) target = $region33
    $region32: #{encoder_forward.1} parent=1 // pred_region
      _
    $region33: #{encoder_forward.1} parent=1 // pred_fallthru
      _
    // Predicated region
    $region34: #{encoder_forward.1} parent=1 // pred_check
      _
    $region35: #{encoder_forward.1} parent=1 // pred_check_branch
      %44 = sbr.rel (0) target = $region37
    $region36: #{encoder_forward.1} parent=1 // pred_region
      _
    $region37: #{encoder_forward.1} parent=1 // pred_fallthru
      _
    // Predicated region
    $region38: #{encoder_forward.1} parent=1 // pred_check
      _
    $region39: #{encoder_forward.1} parent=1 // pred_check_branch
      %46 = sbr.rel (0) target = $region41
    $region40: #{encoder_forward.1} parent=1 // pred_region
      _
    $region41: #{encoder_forward.1} parent=1 // pred_fallthru
      _
    // Predicated region
    $region42: #{encoder_forward.1} parent=1 // pred_check
      _
    $region43: #{encoder_forward.1} parent=1 // pred_check_branch
      %48 = sbr.rel (0) target = $region45
    $region44: #{encoder_forward.1} parent=1 // pred_region
      _
    $region45: #{encoder_forward.1} parent=1 // pred_fallthru
      _
    // Predicated region
    $region46: #{encoder_forward.1} parent=1 // pred_check
      _
    $region47: #{encoder_forward.1} parent=1 // pred_check_branch
      %50 = sbr.rel (0) target = $region49
    $region48: #{encoder_forward.1} parent=1 // pred_region
      _
    $region49: #{encoder_forward.1} parent=1 // pred_fallthru
      _
    // Predicated region
    $region50: #{encoder_forward.1} parent=1 // pred_check
      _
    $region51: #{encoder_forward.1} parent=1 // pred_check_branch
      %52 = sbr.rel (0) target = $region53
    $region52: #{encoder_forward.1} parent=1 // pred_region
      _
    $region53: #{encoder_forward.1} parent=1 // pred_fallthru
      _
    // Predicated region
    $region54: #{encoder_forward.1} parent=1 // pred_check
      _
    $region55: #{encoder_forward.1} parent=1 // pred_check_branch
      %54 = sbr.rel (0) target = $region57
    $region56: #{encoder_forward.1} parent=1 // pred_region
      _
    $region57: #{encoder_forward.1} parent=1 // pred_fallthru
      _
    // Predicated region
    $region58: #{encoder_forward.1} parent=1 // pred_check
      _
    $region59: #{encoder_forward.1} parent=1 // pred_check_branch
      %56 = sbr.rel (0) target = $region61
    $region60: #{encoder_forward.1} parent=1 // pred_region
      _
    $region61: #{encoder_forward.1} parent=1 // pred_fallthru
      _
    // Predicated region
    $region62: #{encoder_forward.1} parent=1 // pred_check
      _
    $region63: #{encoder_forward.1} parent=1 // pred_check_branch
      %58 = sbr.rel (0) target = $region65
    $region64: #{encoder_forward.1} parent=1 // pred_region
      _
    $region65: #{encoder_forward.1} parent=1 // pred_fallthru
      _
    // Predicated region
    $region66: #{encoder_forward.1} parent=1 // pred_check
      _
    $region67: #{encoder_forward.1} parent=1 // pred_check_branch
      %60 = sbr.rel (0) target = $region69
    $region68: #{encoder_forward.1} parent=1 // pred_region
      _
    $region69: #{encoder_forward.1} parent=1 // pred_fallthru
      _
    // Predicated region
    $region70: #{encoder_forward.1} parent=1 // pred_check
      _
    $region71: #{encoder_forward.1} parent=1 // pred_check_branch
      %62 = sbr.rel (0) target = $region73
    $region72: #{encoder_forward.1} parent=1 // pred_region
      _
    $region73: #{encoder_forward.1} parent=1 // pred_fallthru
      _
    %v64 = vld [vmem:[%s0] sm:$0xff]
    %v65 = vld [vmem:[%s0 + $0x8] sm:$0xff]
    %v66 = vld [vmem:[%s0 + $0x10] sm:$0xff]
    %v67 = vld [vmem:[%s0 + $0x18] sm:$0xff]
    %v68 = vld [vmem:[%s0 + $0x20] sm:$0xf]
    %v69 = vpack.c.bf16 %v64, %v64
    %v70 = vpack.c.bf16 %v65, %v65
    %v71 = vpack.c.bf16 %v66, %v66
    %v72 = vpack.c.bf16 %v67, %v67
    %v73 = vpack.c.bf16 %v68, %v68
    %v74 = vld [vmem:[%s2] sm:$0xf]
    %v75 = vld [vmem:[%s2 + $0x4] sm:$0xf]
    %v76 = vld [vmem:[%s2 + $0x8] sm:$0xf]
    %v77 = vld [vmem:[%s2 + $0xc] sm:$0xf]
    %v78 = vld [vmem:[%s2 + $0x10] sm:$0xf]
    %v79 = vld [vmem:[%s2 + $0x14] sm:$0xf]
    %v80 = vld [vmem:[%s2 + $0x18] sm:$0xf]
    %v81 = vld [vmem:[%s2 + $0x1c] sm:$0xf]
    %v82 = vld [vmem:[%s2 + $0x20] sm:$0xf]
    %v83 = vld [vmem:[%s2 + $0x24] sm:$0xf]
    %v84 = vld [vmem:[%s2 + $0x28] sm:$0xf]
    %v85 = vld [vmem:[%s2 + $0x2c] sm:$0xf]
    %v86 = vld [vmem:[%s2 + $0x30] sm:$0xf]
    %v87 = vld [vmem:[%s2 + $0x34] sm:$0xf]
    %v88 = vld [vmem:[%s2 + $0x38] sm:$0xf]
    %v89 = vld [vmem:[%s2 + $0x3c] sm:$0xf]
    %s90 = scalar_lea.vmem %s2, 64
    %v91 = vld [vmem:[%s90] sm:$0xf]
    %v92 = vld [vmem:[%s90 + $0x4] sm:$0xf]
    %v93 = vld [vmem:[%s90 + $0x8] sm:$0xf]
    %v94 = vld [vmem:[%s90 + $0xc] sm:$0xf]
    %v95 = vld [vmem:[%s90 + $0x10] sm:$0xf]
    %v96 = vld [vmem:[%s90 + $0x14] sm:$0xf]
    %v97 = vld [vmem:[%s90 + $0x18] sm:$0xf]
    %v98 = vld [vmem:[%s90 + $0x1c] sm:$0xf]
    %v99 = vld [vmem:[%s90 + $0x20] sm:$0xf]
    %v100 = vld [vmem:[%s90 + $0x24] sm:$0xf]
    %v101 = vld [vmem:[%s90 + $0x28] sm:$0xf]
    %v102 = vld [vmem:[%s90 + $0x2c] sm:$0xf]
    %v103 = vld [vmem:[%s90 + $0x30] sm:$0xf]
    %v104 = vld [vmem:[%s90 + $0x34] sm:$0xf]
    %v105 = vld [vmem:[%s90 + $0x38] sm:$0xf]
    %v106 = vld [vmem:[%s90 + $0x3c] sm:$0xf]
    %v112 = vunpack.c.l.b16 %v69
    %v113 = vunpack.c.l.b16 %v70
    %v114 = vunpack.c.l.b16 %v71
    %v115 = vunpack.c.l.b16 %v72
    %v116 = vunpack.c.l.b16 %v73
    %v117 = vpack.c.b16 %v113, %v112
    %v118 = vpack.c.b16 %v115, %v114
    %v119 = vpack.c.b16 %v116, %v116
    %vm120 = vsmask.f32 7424
    %v122 = vshrl.u32 %v117, 16
    %v124 = vshll.u32 %v117, 16
    %v126 = vrot.slane %v124, 1
    %v127 = vor.u32 %v122, %v126
    %v129 = vshll.u32 %v118, 16
    %v131 = vrot.slane %v129, 1
    %v132 = vsel %vm120, %v127, %v131
    %v133 = vshrl.u32 %v118, 16
    %v135 = vor.u32 %v133, %v131
    %v137 = vshll.u32 %v119, 16
    %v139 = vrot.slane %v137, 1
    %v140 = vsel %vm120, %v135, %v139
    %v141 = vshrl.u32 %v119, 16
    %v143 = vor.u32 %v141, %v139
    %v163 = vunpack.c.l.b16 %v91
    %v164 = vunpack.c.l.b16 %v92
    %v165 = vunpack.c.l.b16 %v93
    %v166 = vunpack.c.l.b16 %v94
    %v167 = vunpack.c.l.b16 %v95
    %v168 = vunpack.c.l.b16 %v96
    %v169 = vunpack.c.l.b16 %v97
    %v170 = vunpack.c.l.b16 %v98
    %v171 = vunpack.c.l.b16 %v99
    %v172 = vunpack.c.l.b16 %v100
    %v173 = vunpack.c.l.b16 %v101
    %v174 = vunpack.c.l.b16 %v102
    %v175 = vunpack.c.l.b16 %v103
    %v176 = vunpack.c.l.b16 %v104
    %v177 = vunpack.c.l.b16 %v105
    %v178 = vunpack.c.l.b16 %v106
    %v179 = vpack.c.b16 %v164, %v163
    %v180 = vpack.c.b16 %v166, %v165
    %v181 = vpack.c.b16 %v168, %v167
    %v182 = vpack.c.b16 %v170, %v169
    %v183 = vpack.c.b16 %v172, %v171
    %v184 = vpack.c.b16 %v174, %v173
    %v185 = vpack.c.b16 %v176, %v175
    %v186 = vpack.c.b16 %v178, %v177
    %195 = vmatpush.bf16.msra.mxu0 %v186
    %196 = vmatpush.bf16.msra.mxu0 %v185
    %197 = vmatpush.bf16.msra.mxu0 %v184
    %198 = vmatpush.bf16.msra.mxu0 %v183
    %199 = vmatpush.bf16.msra.mxu0 %v182
    %200 = vmatpush.bf16.msra.mxu0 %v181
    %201 = vmatpush.bf16.msra.mxu0 %v180
    %202 = vmatpush.bf16.msra.mxu0 %v179
    %203 = vmatmul.bf16.gmra.mxu0 %v132
    %v204 = vpop.f32.mrf.mxu0
    %v205 = vadd.f32 0.0, %v204
    %v206 = vpop.f32.mrf.mxu0
    %v207 = vadd.f32 0.0, %v206
    %208 = vmatmul.bf16.gmra.mxu0 %v140
    %v209 = vpop.f32.mrf.mxu0
    %v210 = vadd.f32 0.0, %v209
    %v211 = vpop.f32.mrf.mxu0
    %v212 = vadd.f32 0.0, %v211
    %213 = vmatmul.bf16.gmra.mxu0 %v143
    %v214 = vpop.f32.mrf.mxu0
    %v215 = vadd.f32 0.0, %v214
    %v216 = vpop.f32.mrf.mxu0
    %217 = vdwg.mxu0
    %v237 = vunpack.c.l.b16 %v74
    %v238 = vunpack.c.l.b16 %v75
    %v239 = vunpack.c.l.b16 %v76
    %v240 = vunpack.c.l.b16 %v77
    %v241 = vunpack.c.l.b16 %v78
    %v242 = vunpack.c.l.b16 %v79
    %v243 = vunpack.c.l.b16 %v80
    %v244 = vunpack.c.l.b16 %v81
    %v245 = vunpack.c.l.b16 %v82
    %v246 = vunpack.c.l.b16 %v83
    %v247 = vunpack.c.l.b16 %v84
    %v248 = vunpack.c.l.b16 %v85
    %v249 = vunpack.c.l.b16 %v86
    %v250 = vunpack.c.l.b16 %v87
    %v251 = vunpack.c.l.b16 %v88
    %v252 = vunpack.c.l.b16 %v89
    %v253 = vpack.c.b16 %v238, %v237
    %v254 = vpack.c.b16 %v240, %v239
    %v255 = vpack.c.b16 %v242, %v241
    %v256 = vpack.c.b16 %v244, %v243
    %v257 = vpack.c.b16 %v246, %v245
    %v258 = vpack.c.b16 %v248, %v247
    %v259 = vpack.c.b16 %v250, %v249
    %v260 = vpack.c.b16 %v252, %v251
    %269 = vmatpush.bf16.msra.mxu0 %v260
    %270 = vmatpush.bf16.msra.mxu0 %v259
    %271 = vmatpush.bf16.msra.mxu0 %v258
    %272 = vmatpush.bf16.msra.mxu0 %v257
    %273 = vmatpush.bf16.msra.mxu0 %v256
    %274 = vmatpush.bf16.msra.mxu0 %v255
    %275 = vmatpush.bf16.msra.mxu0 %v254
    %276 = vmatpush.bf16.msra.mxu0 %v253
    %277 = vmatmul.bf16.gmra.mxu0 %v117
    %v278 = vpop.f32.mrf.mxu0
    %v279 = vadd.f32 %v205, %v278
    %v280 = vpop.f32.mrf.mxu0
    %v281 = vadd.f32 %v207, %v280
    %282 = vmatmul.bf16.gmra.mxu0 %v118
    %v283 = vpop.f32.mrf.mxu0
    %v284 = vadd.f32 %v210, %v283
    %v285 = vpop.f32.mrf.mxu0
    %v286 = vadd.f32 %v212, %v285
    %287 = vmatmul.bf16.gmra.mxu0 %v119
    %v288 = vpop.f32.mrf.mxu0
    %v289 = vadd.f32 %v215, %v288
    %v290 = vpop.f32.mrf.mxu0
    %291 = vdwg.mxu0
    %s292 = scalar_lea.vmem %s2, 128
    %v293 = vld [vmem:[%s292] sm:$0xf]
    %v294 = vld [vmem:[%s292 + $0x4] sm:$0xf]
    %v295 = vld [vmem:[%s292 + $0x8] sm:$0xf]
    %v296 = vld [vmem:[%s292 + $0xc] sm:$0xf]
    %v297 = vld [vmem:[%s292 + $0x10] sm:$0xf]
    %v298 = vld [vmem:[%s292 + $0x14] sm:$0xf]
    %v299 = vld [vmem:[%s292 + $0x18] sm:$0xf]
    %v300 = vld [vmem:[%s292 + $0x1c] sm:$0xf]
    %v301 = vld [vmem:[%s292 + $0x20] sm:$0xf]
    %v302 = vld [vmem:[%s292 + $0x24] sm:$0xf]
    %v303 = vld [vmem:[%s292 + $0x28] sm:$0xf]
    %v304 = vld [vmem:[%s292 + $0x2c] sm:$0xf]
    %v305 = vld [vmem:[%s292 + $0x30] sm:$0xf]
    %v306 = vld [vmem:[%s292 + $0x34] sm:$0xf]
    %v307 = vld [vmem:[%s292 + $0x38] sm:$0xf]
    %v308 = vld [vmem:[%s292 + $0x3c] sm:$0xf]
    %vm309 = vcmask 1046528
    %v310 = vrot.slane %v117, 1
    %v311 = vrot.slane %v118, 1
    %v312 = vsel %vm309, %v310, %v311
    %v313 = vrot.slane %v119, 1
    %v314 = vsel %vm309, %v311, %v313
    %v334 = vunpack.c.l.b16 %v293
    %v335 = vunpack.c.l.b16 %v294
    %v336 = vunpack.c.l.b16 %v295
    %v337 = vunpack.c.l.b16 %v296
    %v338 = vunpack.c.l.b16 %v297
    %v339 = vunpack.c.l.b16 %v298
    %v340 = vunpack.c.l.b16 %v299
    %v341 = vunpack.c.l.b16 %v300
    %v342 = vunpack.c.l.b16 %v301
    %v343 = vunpack.c.l.b16 %v302
    %v344 = vunpack.c.l.b16 %v303
    %v345 = vunpack.c.l.b16 %v304
    %v346 = vunpack.c.l.b16 %v305
    %v347 = vunpack.c.l.b16 %v306
    %v348 = vunpack.c.l.b16 %v307
    %v349 = vunpack.c.l.b16 %v308
    %v350 = vpack.c.b16 %v335, %v334
    %v351 = vpack.c.b16 %v337, %v336
    %v352 = vpack.c.b16 %v339, %v338
    %v353 = vpack.c.b16 %v341, %v340
    %v354 = vpack.c.b16 %v343, %v342
    %v355 = vpack.c.b16 %v345, %v344
    %v356 = vpack.c.b16 %v347, %v346
    %v357 = vpack.c.b16 %v349, %v348
    %366 = vmatpush.bf16.msra.mxu0 %v357
    %367 = vmatpush.bf16.msra.mxu0 %v356
    %368 = vmatpush.bf16.msra.mxu0 %v355
    %369 = vmatpush.bf16.msra.mxu0 %v354
    %370 = vmatpush.bf16.msra.mxu0 %v353
    %371 = vmatpush.bf16.msra.mxu0 %v352
    %372 = vmatpush.bf16.msra.mxu0 %v351
    %373 = vmatpush.bf16.msra.mxu0 %v350
    %374 = vmatmul.bf16.gmra.mxu0 %v312
    %v375 = vpop.f32.mrf.mxu0
    %v376 = vadd.f32 0.0, %v375
    %v377 = vpop.f32.mrf.mxu0
    %v378 = vadd.f32 0.0, %v377
    %379 = vmatmul.bf16.gmra.mxu0 %v314
    %v380 = vpop.f32.mrf.mxu0
    %v381 = vadd.f32 0.0, %v380
    %v382 = vpop.f32.mrf.mxu0
    %v383 = vadd.f32 0.0, %v382
    %384 = vmatmul.bf16.gmra.mxu0 %v313
    %v385 = vpop.f32.mrf.mxu0
    %v386 = vadd.f32 0.0, %v385
    %v387 = vpop.f32.mrf.mxu0
    %388 = vdwg.mxu0
    %v389 = vadd.f32 %v279, %v376
    %v390 = vadd.f32 %v281, %v378
    %v391 = vadd.f32 %v284, %v381
    %v392 = vadd.f32 %v286, %v383
    %v393 = vadd.f32 %v289, %v386
    %vm394 = vcmask 523264
    %395 = vst.msk [vmem:[#allocation2] sm:$0xff] %vm394, 0.0
    %396 = vst.msk [vmem:[#allocation2 + $0x8] sm:$0xff] %vm394, 0.0
    %vm397 = vcmask 519168
    %398 = vst.msk [vmem:[#allocation2 + $0x10] sm:$0xf] %vm397, 0.0
    %v399 = vlaneseq
    %v400 = vshrl.u32 %v399, 7
    %v401 = vlaneseq
    %v402 = vand.u32 %v401, 127
    %v403 = vmul.u32 %v400, 2
    %vm404 = vcmp.eq.s32.totalorder %v402, %v403
    %v405 = vsel %vm404, 1.0, 0.0
    %vm406 = vcmask 130048
    %v408 = vsel %vm406, %v405, 0
    %410 = vmatpush.msra.mxu0 0.0
    %411 = vmatpush.msra.mxu0 0.0
    %412 = vmatpush.msra.mxu0 0.0
    %413 = vmatpush.msra.mxu0 0.0
    %414 = vmatpush.msra.mxu0 0.0
    %415 = vmatpush.msra.mxu0 0.0
    %416 = vmatpush.msra.mxu0 0.0
    %417 = vmatpush.msra.mxu0 0.0
    %418 = vmatpush.msra.mxu0 0.0
    %419 = vmatpush.msra.mxu0 0.0
    %420 = vmatpush.msra.mxu0 0.0
    %421 = vmatpush.msra.mxu0 0.0
    %422 = vmatpush.msra.mxu0 0.0
    %423 = vmatpush.msra.mxu0 0.0
    %424 = vmatpush.msra.mxu0 %v390
    %425 = vmatpush.msra.mxu0 %v389
    %426 = vmatmul.f32.gmra.mxu0 %v408
    %v427 = vpop.f32.mrf.mxu0
    %v428 = vadd.f32 0.0, %v427
    %429 = vdwg.mxu0
    %v430 = vmax.f32 %v428, 0.0
    %431 = vst.msk [vmem:[#allocation2 + $0x1] sm:$0xff] %vm394, %v430
    %vm435 = vcmask 1045504
    %v436 = vrot.slane %v391, 2
    %v437 = vrot.slane %v392, 2
    %v438 = vsel %vm435, %v436, %v437
    %v439 = vrot.slane %v393, 2
    %v440 = vsel %vm435, %v437, %v439
    %443 = vmatpush.msra.mxu0 0.0
    %444 = vmatpush.msra.mxu0 0.0
    %445 = vmatpush.msra.mxu0 0.0
    %446 = vmatpush.msra.mxu0 0.0
    %447 = vmatpush.msra.mxu0 0.0
    %448 = vmatpush.msra.mxu0 0.0
    %449 = vmatpush.msra.mxu0 0.0
    %450 = vmatpush.msra.mxu0 0.0
    %451 = vmatpush.msra.mxu0 0.0
    %452 = vmatpush.msra.mxu0 0.0
    %453 = vmatpush.msra.mxu0 0.0
    %454 = vmatpush.msra.mxu0 0.0
    %455 = vmatpush.msra.mxu0 0.0
    %456 = vmatpush.msra.mxu0 0.0
    %457 = vmatpush.msra.mxu0 %v440
    %458 = vmatpush.msra.mxu0 %v438
    %459 = vmatmul.f32.gmra.mxu0 %v408
    %v460 = vpop.f32.mrf.mxu0
    %v461 = vadd.f32 0.0, %v460
    %462 = vdwg.mxu0
    %v463 = vmax.f32 %v461, 0.0
    %464 = vst.msk [vmem:[#allocation2 + $0xb] sm:$0xff] %vm394, %v463
    %v465 = vld [vmem:[#allocation2] sm:$0xff]
    %v466 = vld [vmem:[#allocation2 + $0x8] sm:$0xff]
    %v467 = vld [vmem:[#allocation2 + $0x10] sm:$0xf]
    %v468 = vpack.c.bf16 %v465, %v465
    %v469 = vpack.c.bf16 %v466, %v466
    %v470 = vpack.c.bf16 %v467, %v467
    %v471 = vld [vmem:[%s3] sm:$0xf]
    %v472 = vld [vmem:[%s3 + $0x4] sm:$0xf]
    %v473 = vld [vmem:[%s3 + $0x8] sm:$0xf]
    %v474 = vld [vmem:[%s3 + $0xc] sm:$0xf]
    %v475 = vld [vmem:[%s3 + $0x10] sm:$0xf]
    %v476 = vld [vmem:[%s3 + $0x14] sm:$0xf]
    %v477 = vld [vmem:[%s3 + $0x18] sm:$0xf]
    %v478 = vld [vmem:[%s3 + $0x1c] sm:$0xf]
    %s479 = scalar_lea.vmem %s3, 32
    %v480 = vld [vmem:[%s479] sm:$0xf]
    %v481 = vld [vmem:[%s479 + $0x4] sm:$0xf]
    %v482 = vld [vmem:[%s479 + $0x8] sm:$0xf]
    %v483 = vld [vmem:[%s479 + $0xc] sm:$0xf]
    %v484 = vld [vmem:[%s479 + $0x10] sm:$0xf]
    %v485 = vld [vmem:[%s479 + $0x14] sm:$0xf]
    %v486 = vld [vmem:[%s479 + $0x18] sm:$0xf]
    %v487 = vld [vmem:[%s479 + $0x1c] sm:$0xf]
    %v491 = vunpack.c.l.b16 %v468
    %v492 = vunpack.c.l.b16 %v469
    %v493 = vunpack.c.l.b16 %v470
    %v494 = vpack.c.b16 %v492, %v491
    %v495 = vpack.c.b16 %v493, %v493
    %v497 = vshrl.u32 %v494, 16
    %v499 = vshll.u32 %v494, 16
    %v501 = vrot.slane %v499, 1
    %v502 = vor.u32 %v497, %v501
    %v504 = vshll.u32 %v495, 16
    %v506 = vrot.slane %v504, 1
    %v507 = vsel %vm120, %v502, %v506
    %v508 = vshrl.u32 %v495, 16
    %v510 = vor.u32 %v508, %v506
    %v519 = vunpack.c.l.b16 %v480
    %v520 = vunpack.c.l.b16 %v481
    %v521 = vunpack.c.l.b16 %v482
    %v522 = vunpack.c.l.b16 %v483
    %v523 = vunpack.c.l.b16 %v484
    %v524 = vunpack.c.l.b16 %v485
    %v525 = vunpack.c.l.b16 %v486
    %v526 = vunpack.c.l.b16 %v487
    %v527 = vpack.c.b16 %v520, %v519
    %v528 = vpack.c.b16 %v522, %v521
    %v529 = vpack.c.b16 %v524, %v523
    %v530 = vpack.c.b16 %v526, %v525
    %v536 = vsel %vm394, %v507, 0
    %v539 = vsel %vm394, %v510, 0
    %541 = vmatpush.bf16.msra.mxu0 0
    %542 = vmatpush.bf16.msra.mxu0 0
    %543 = vmatpush.bf16.msra.mxu0 0
    %544 = vmatpush.bf16.msra.mxu0 0
    %545 = vmatpush.bf16.msra.mxu0 %v530
    %546 = vmatpush.bf16.msra.mxu0 %v529
    %547 = vmatpush.bf16.msra.mxu0 %v528
    %548 = vmatpush.bf16.msra.mxu0 %v527
    %549 = vmatmul.bf16.gmra.mxu0 %v536
    %v550 = vpop.f32.mrf.mxu0
    %v551 = vadd.f32 0.0, %v550
    %v552 = vpop.f32.mrf.mxu0
    %v553 = vadd.f32 0.0, %v552
    %554 = vmatmul.bf16.gmra.mxu0 %v539
    %v555 = vpop.f32.mrf.mxu0
    %v556 = vadd.f32 0.0, %v555
    %v557 = vpop.f32.mrf.mxu0
    %558 = vdwg.mxu0
    %v567 = vunpack.c.l.b16 %v471
    %v568 = vunpack.c.l.b16 %v472
    %v569 = vunpack.c.l.b16 %v473
    %v570 = vunpack.c.l.b16 %v474
    %v571 = vunpack.c.l.b16 %v475
    %v572 = vunpack.c.l.b16 %v476
    %v573 = vunpack.c.l.b16 %v477
    %v574 = vunpack.c.l.b16 %v478
    %v575 = vpack.c.b16 %v568, %v567
    %v576 = vpack.c.b16 %v570, %v569
    %v577 = vpack.c.b16 %v572, %v571
    %v578 = vpack.c.b16 %v574, %v573
    %v583 = vsel %vm394, %v494, 0
    %v585 = vsel %vm394, %v495, 0
    %587 = vmatpush.bf16.msra.mxu0 0
    %588 = vmatpush.bf16.msra.mxu0 0
    %589 = vmatpush.bf16.msra.mxu0 0
    %590 = vmatpush.bf16.msra.mxu0 0
    %591 = vmatpush.bf16.msra.mxu0 %v578
    %592 = vmatpush.bf16.msra.mxu0 %v577
    %593 = vmatpush.bf16.msra.mxu0 %v576
    %594 = vmatpush.bf16.msra.mxu0 %v575
    %595 = vmatmul.bf16.gmra.mxu0 %v583
    %v596 = vpop.f32.mrf.mxu0
    %v597 = vadd.f32 %v551, %v596
    %v598 = vpop.f32.mrf.mxu0
    %v599 = vadd.f32 %v553, %v598
    %600 = vmatmul.bf16.gmra.mxu0 %v585
    %v601 = vpop.f32.mrf.mxu0
    %v602 = vadd.f32 %v556, %v601
    %v603 = vpop.f32.mrf.mxu0
    %604 = vdwg.mxu0
    %s605 = scalar_lea.vmem %s3, 64
    %v606 = vld [vmem:[%s605] sm:$0xf]
    %v607 = vld [vmem:[%s605 + $0x4] sm:$0xf]
    %v608 = vld [vmem:[%s605 + $0x8] sm:$0xf]
    %v609 = vld [vmem:[%s605 + $0xc] sm:$0xf]
    %v610 = vld [vmem:[%s605 + $0x10] sm:$0xf]
    %v611 = vld [vmem:[%s605 + $0x14] sm:$0xf]
    %v612 = vld [vmem:[%s605 + $0x18] sm:$0xf]
    %v613 = vld [vmem:[%s605 + $0x1c] sm:$0xf]
    %v614 = vrot.slane %v494, 1
    %v615 = vrot.slane %v495, 1
    %v616 = vsel %vm309, %v614, %v615
    %v625 = vunpack.c.l.b16 %v606
    %v626 = vunpack.c.l.b16 %v607
    %v627 = vunpack.c.l.b16 %v608
    %v628 = vunpack.c.l.b16 %v609
    %v629 = vunpack.c.l.b16 %v610
    %v630 = vunpack.c.l.b16 %v611
    %v631 = vunpack.c.l.b16 %v612
    %v632 = vunpack.c.l.b16 %v613
    %v633 = vpack.c.b16 %v626, %v625
    %v634 = vpack.c.b16 %v628, %v627
    %v635 = vpack.c.b16 %v630, %v629
    %v636 = vpack.c.b16 %v632, %v631
    %v642 = vsel %vm394, %v616, 0
    %v645 = vsel %vm394, %v615, 0
    %647 = vmatpush.bf16.msra.mxu0 0
    %648 = vmatpush.bf16.msra.mxu0 0
    %649 = vmatpush.bf16.msra.mxu0 0
    %650 = vmatpush.bf16.msra.mxu0 0
    %651 = vmatpush.bf16.msra.mxu0 %v636
    %652 = vmatpush.bf16.msra.mxu0 %v635
    %653 = vmatpush.bf16.msra.mxu0 %v634
    %654 = vmatpush.bf16.msra.mxu0 %v633
    %655 = vmatmul.bf16.gmra.mxu0 %v642
    %v656 = vpop.f32.mrf.mxu0
    %v657 = vadd.f32 0.0, %v656
    %v658 = vpop.f32.mrf.mxu0
    %v659 = vadd.f32 0.0, %v658
    %660 = vmatmul.bf16.gmra.mxu0 %v645
    %v661 = vpop.f32.mrf.mxu0
    %v662 = vadd.f32 0.0, %v661
    %v663 = vpop.f32.mrf.mxu0
    %664 = vdwg.mxu0
    %v665 = vadd.f32 %v597, %v657
    %v666 = vadd.f32 %v599, %v659
    %v667 = vadd.f32 %v602, %v662
    %668 = vst.msk [vmem:[#allocation3] sm:$0xff] %vm394, 0.0
    %669 = vst.msk [vmem:[#allocation3 + $0x8] sm:$0xff] %vm394, 0.0
    %670 = vst.msk [vmem:[#allocation3 + $0x10] sm:$0xf] %vm397, 0.0
    %v671 = vmax.f32 %v665, 0.0
    %672 = vst.msk [vmem:[#allocation3 + $0x1] sm:$0xff] %vm394, %v671
    %v673 = vmax.f32 %v666, 0.0
    %v674 = vmax.f32 %v667, 0.0
    %vm675 = vcmask 523266
    %676 = vst.msk [vmem:[#allocation3 + $0x9] sm:$0xfc] %vm675, %v673
    %vm677 = vcmask 517120
    %678 = vst.msk [vmem:[#allocation3 + $0x11] sm:$0x3] %vm677, %v674
    %v679 = vld [vmem:[#allocation3] sm:$0xff]
    %v680 = vld [vmem:[#allocation3 + $0x8] sm:$0xff]
    %v681 = vld [vmem:[#allocation3 + $0x10] sm:$0xf]
    %v682 = vpack.c.bf16 %v679, %v679
    %v683 = vpack.c.bf16 %v680, %v680
    %v684 = vpack.c.bf16 %v681, %v681
    %v685 = vld [vmem:[%s4] sm:$0xf]
    %v686 = vld [vmem:[%s4 + $0x4] sm:$0xf]
    %v687 = vld [vmem:[%s4 + $0x8] sm:$0xf]
    %v688 = vld [vmem:[%s4 + $0xc] sm:$0xf]
    %v689 = vld [vmem:[%s4 + $0x10] sm:$0xf]
    %v690 = vld [vmem:[%s4 + $0x14] sm:$0xf]
    %v691 = vld [vmem:[%s4 + $0x18] sm:$0xf]
    %v692 = vld [vmem:[%s4 + $0x1c] sm:$0xf]
    %s693 = scalar_lea.vmem %s4, 32
    %v694 = vld [vmem:[%s693] sm:$0xf]
    %v695 = vld [vmem:[%s693 + $0x4] sm:$0xf]
    %v696 = vld [vmem:[%s693 + $0x8] sm:$0xf]
    %v697 = vld [vmem:[%s693 + $0xc] sm:$0xf]
    %v698 = vld [vmem:[%s693 + $0x10] sm:$0xf]
    %v699 = vld [vmem:[%s693 + $0x14] sm:$0xf]
    %v700 = vld [vmem:[%s693 + $0x18] sm:$0xf]
    %v701 = vld [vmem:[%s693 + $0x1c] sm:$0xf]
    %v705 = vunpack.c.l.b16 %v682
    %v706 = vunpack.c.l.b16 %v683
    %v707 = vunpack.c.l.b16 %v684
    %v708 = vpack.c.b16 %v706, %v705
    %v709 = vpack.c.b16 %v707, %v707
    %v711 = vshrl.u32 %v708, 16
    %v713 = vshll.u32 %v708, 16
    %v715 = vrot.slane %v713, 1
    %v716 = vor.u32 %v711, %v715
    %v718 = vshll.u32 %v709, 16
    %v720 = vrot.slane %v718, 1
    %v721 = vsel %vm120, %v716, %v720
    %v722 = vshrl.u32 %v709, 16
    %v724 = vor.u32 %v722, %v720
    %v733 = vunpack.c.l.b16 %v694
    %v734 = vunpack.c.l.b16 %v695
    %v735 = vunpack.c.l.b16 %v696
    %v736 = vunpack.c.l.b16 %v697
    %v737 = vunpack.c.l.b16 %v698
    %v738 = vunpack.c.l.b16 %v699
    %v739 = vunpack.c.l.b16 %v700
    %v740 = vunpack.c.l.b16 %v701
    %v741 = vpack.c.b16 %v734, %v733
    %v742 = vpack.c.b16 %v736, %v735
    %v743 = vpack.c.b16 %v738, %v737
    %v744 = vpack.c.b16 %v740, %v739
    %v750 = vsel %vm394, %v721, 0
    %v753 = vsel %vm394, %v724, 0
    %755 = vmatpush.bf16.msra.mxu0 0
    %756 = vmatpush.bf16.msra.mxu0 0
    %757 = vmatpush.bf16.msra.mxu0 0
    %758 = vmatpush.bf16.msra.mxu0 0
    %759 = vmatpush.bf16.msra.mxu0 %v744
    %760 = vmatpush.bf16.msra.mxu0 %v743
    %761 = vmatpush.bf16.msra.mxu0 %v742
    %762 = vmatpush.bf16.msra.mxu0 %v741
    %763 = vmatmul.bf16.gmra.mxu0 %v750
    %v764 = vpop.f32.mrf.mxu0
    %v765 = vadd.f32 0.0, %v764
    %v766 = vpop.f32.mrf.mxu0
    %v767 = vadd.f32 0.0, %v766
    %768 = vmatmul.bf16.gmra.mxu0 %v753
    %v769 = vpop.f32.mrf.mxu0
    %v770 = vadd.f32 0.0, %v769
    %v771 = vpop.f32.mrf.mxu0
    %772 = vdwg.mxu0
    %v781 = vunpack.c.l.b16 %v685
    %v782 = vunpack.c.l.b16 %v686
    %v783 = vunpack.c.l.b16 %v687
    %v784 = vunpack.c.l.b16 %v688
    %v785 = vunpack.c.l.b16 %v689
    %v786 = vunpack.c.l.b16 %v690
    %v787 = vunpack.c.l.b16 %v691
    %v788 = vunpack.c.l.b16 %v692
    %v789 = vpack.c.b16 %v782, %v781
    %v790 = vpack.c.b16 %v784, %v783
    %v791 = vpack.c.b16 %v786, %v785
    %v792 = vpack.c.b16 %v788, %v787
    %v797 = vsel %vm394, %v708, 0
    %v799 = vsel %vm394, %v709, 0
    %801 = vmatpush.bf16.msra.mxu0 0
    %802 = vmatpush.bf16.msra.mxu0 0
    %803 = vmatpush.bf16.msra.mxu0 0
    %804 = vmatpush.bf16.msra.mxu0 0
    %805 = vmatpush.bf16.msra.mxu0 %v792
    %806 = vmatpush.bf16.msra.mxu0 %v791
    %807 = vmatpush.bf16.msra.mxu0 %v790
    %808 = vmatpush.bf16.msra.mxu0 %v789
    %809 = vmatmul.bf16.gmra.mxu0 %v797
    %v810 = vpop.f32.mrf.mxu0
    %v811 = vadd.f32 %v765, %v810
    %v812 = vpop.f32.mrf.mxu0
    %v813 = vadd.f32 %v767, %v812
    %814 = vmatmul.bf16.gmra.mxu0 %v799
    %v815 = vpop.f32.mrf.mxu0
    %v816 = vadd.f32 %v770, %v815
    %v817 = vpop.f32.mrf.mxu0
    %818 = vdwg.mxu0
    %s819 = scalar_lea.vmem %s4, 64
    %v820 = vld [vmem:[%s819] sm:$0xf]
    %v821 = vld [vmem:[%s819 + $0x4] sm:$0xf]
    %v822 = vld [vmem:[%s819 + $0x8] sm:$0xf]
    %v823 = vld [vmem:[%s819 + $0xc] sm:$0xf]
    %v824 = vld [vmem:[%s819 + $0x10] sm:$0xf]
    %v825 = vld [vmem:[%s819 + $0x14] sm:$0xf]
    %v826 = vld [vmem:[%s819 + $0x18] sm:$0xf]
    %v827 = vld [vmem:[%s819 + $0x1c] sm:$0xf]
    %v828 = vrot.slane %v708, 1
    %v829 = vrot.slane %v709, 1
    %v830 = vsel %vm309, %v828, %v829
    %v839 = vunpack.c.l.b16 %v820
    %v840 = vunpack.c.l.b16 %v821
    %v841 = vunpack.c.l.b16 %v822
    %v842 = vunpack.c.l.b16 %v823
    %v843 = vunpack.c.l.b16 %v824
    %v844 = vunpack.c.l.b16 %v825
    %v845 = vunpack.c.l.b16 %v826
    %v846 = vunpack.c.l.b16 %v827
    %v847 = vpack.c.b16 %v840, %v839
    %v848 = vpack.c.b16 %v842, %v841
    %v849 = vpack.c.b16 %v844, %v843
    %v850 = vpack.c.b16 %v846, %v845
    %v856 = vsel %vm394, %v830, 0
    %v859 = vsel %vm394, %v829, 0
    %861 = vmatpush.bf16.msra.mxu0 0
    %862 = vmatpush.bf16.msra.mxu0 0
    %863 = vmatpush.bf16.msra.mxu0 0
    %864 = vmatpush.bf16.msra.mxu0 0
    %865 = vmatpush.bf16.msra.mxu0 %v850
    %866 = vmatpush.bf16.msra.mxu0 %v849
    %867 = vmatpush.bf16.msra.mxu0 %v848
    %868 = vmatpush.bf16.msra.mxu0 %v847
    %869 = vmatmul.bf16.gmra.mxu0 %v856
    %v870 = vpop.f32.mrf.mxu0
    %v871 = vadd.f32 0.0, %v870
    %v872 = vpop.f32.mrf.mxu0
    %v873 = vadd.f32 0.0, %v872
    %874 = vmatmul.bf16.gmra.mxu0 %v859
    %v875 = vpop.f32.mrf.mxu0
    %v876 = vadd.f32 0.0, %v875
    %v877 = vpop.f32.mrf.mxu0
    %878 = vdwg.mxu0
    %v879 = vadd.f32 %v811, %v871
    %v880 = vadd.f32 %v813, %v873
    %v881 = vadd.f32 %v816, %v876
    %882 = vst.msk [vmem:[#allocation2] sm:$0xff] %vm394, 0.0
    %883 = vst.msk [vmem:[#allocation2 + $0x8] sm:$0xff] %vm394, 0.0
    %884 = vst.msk [vmem:[#allocation2 + $0x10] sm:$0xf] %vm397, 0.0
    %vm885 = vcmask 64512
    %v886 = vsel %vm885, %v405, 0
    %888 = vmatpush.msra.mxu0 0.0
    %889 = vmatpush.msra.mxu0 0.0
    %890 = vmatpush.msra.mxu0 0.0
    %891 = vmatpush.msra.mxu0 0.0
    %892 = vmatpush.msra.mxu0 0.0
    %893 = vmatpush.msra.mxu0 0.0
    %894 = vmatpush.msra.mxu0 0.0
    %895 = vmatpush.msra.mxu0 0.0
    %896 = vmatpush.msra.mxu0 0.0
    %897 = vmatpush.msra.mxu0 0.0
    %898 = vmatpush.msra.mxu0 0.0
    %899 = vmatpush.msra.mxu0 0.0
    %900 = vmatpush.msra.mxu0 0.0
    %901 = vmatpush.msra.mxu0 0.0
    %902 = vmatpush.msra.mxu0 0.0
    %903 = vmatpush.msra.mxu0 %v879
    %904 = vmatmul.f32.gmra.mxu0 %v886
    %v905 = vpop.f32.mrf.mxu0
    %v906 = vadd.f32 0.0, %v905
    %907 = vdwg.mxu0
    %v908 = vmax.f32 %v906, 0.0
    %909 = vst.msk [vmem:[#allocation2 + $0x1] sm:$0xf] %vm397, %v908
    %v912 = vrot.slane %v880, 2
    %v913 = vrot.slane %v881, 2
    %v914 = vsel %vm435, %v912, %v913
    %916 = vmatpush.msra.mxu0 0.0
    %917 = vmatpush.msra.mxu0 0.0
    %918 = vmatpush.msra.mxu0 0.0
    %919 = vmatpush.msra.mxu0 0.0
    %920 = vmatpush.msra.mxu0 0.0
    %921 = vmatpush.msra.mxu0 0.0
    %922 = vmatpush.msra.mxu0 0.0
    %923 = vmatpush.msra.mxu0 0.0
    %924 = vmatpush.msra.mxu0 0.0
    %925 = vmatpush.msra.mxu0 0.0
    %926 = vmatpush.msra.mxu0 0.0
    %927 = vmatpush.msra.mxu0 0.0
    %928 = vmatpush.msra.mxu0 0.0
    %929 = vmatpush.msra.mxu0 0.0
    %930 = vmatpush.msra.mxu0 0.0
    %931 = vmatpush.msra.mxu0 %v914
    %932 = vmatmul.f32.gmra.mxu0 %v886
    %v933 = vpop.f32.mrf.mxu0
    %v934 = vadd.f32 0.0, %v933
    %935 = vdwg.mxu0
    %v936 = vmax.f32 %v934, 0.0
    %937 = vst.msk [vmem:[#allocation2 + $0x7] sm:$0xf] %vm397, %v936
    %v938 = vld [vmem:[#allocation2] sm:$0xff]
    %v939 = vld [vmem:[#allocation2 + $0x8] sm:$0xff]
    %v940 = vpack.c.bf16 %v938, %v938
    %v941 = vpack.c.bf16 %v939, %v939
    %v942 = vld [vmem:[%s5] sm:$0xf]
    %v943 = vld [vmem:[%s5 + $0x4] sm:$0xf]
    %v944 = vld [vmem:[%s5 + $0x8] sm:$0xf]
    %v945 = vld [vmem:[%s5 + $0xc] sm:$0xf]
    %v946 = vld [vmem:[%s5 + $0x10] sm:$0xf]
    %v947 = vld [vmem:[%s5 + $0x14] sm:$0xf]
    %v948 = vld [vmem:[%s5 + $0x18] sm:$0xf]
    %v949 = vld [vmem:[%s5 + $0x1c] sm:$0xf]
    %s950 = scalar_lea.vmem %s5, 32
    %v951 = vld [vmem:[%s950] sm:$0xf]
    %v952 = vld [vmem:[%s950 + $0x4] sm:$0xf]
    %v953 = vld [vmem:[%s950 + $0x8] sm:$0xf]
    %v954 = vld [vmem:[%s950 + $0xc] sm:$0xf]
    %v955 = vld [vmem:[%s950 + $0x10] sm:$0xf]
    %v956 = vld [vmem:[%s950 + $0x14] sm:$0xf]
    %v957 = vld [vmem:[%s950 + $0x18] sm:$0xf]
    %v958 = vld [vmem:[%s950 + $0x1c] sm:$0xf]
    %v961 = vunpack.c.l.b16 %v940
    %v962 = vunpack.c.l.b16 %v941
    %v963 = vpack.c.b16 %v962, %v961
    %v965 = vshrl.u32 %v963, 16
    %v967 = vshll.u32 %v963, 16
    %v969 = vrot.slane %v967, 1
    %v970 = vor.u32 %v965, %v969
    %v979 = vunpack.c.l.b16 %v951
    %v980 = vunpack.c.l.b16 %v952
    %v981 = vunpack.c.l.b16 %v953
    %v982 = vunpack.c.l.b16 %v954
    %v983 = vunpack.c.l.b16 %v955
    %v984 = vunpack.c.l.b16 %v956
    %v985 = vunpack.c.l.b16 %v957
    %v986 = vunpack.c.l.b16 %v958
    %v987 = vpack.c.b16 %v980, %v979
    %v988 = vpack.c.b16 %v982, %v981
    %v989 = vpack.c.b16 %v984, %v983
    %v990 = vpack.c.b16 %v986, %v985
    %v996 = vsel %vm394, %v970, 0
    %998 = vmatpush.bf16.msra.mxu0 0
    %999 = vmatpush.bf16.msra.mxu0 0
    %1000 = vmatpush.bf16.msra.mxu0 0
    %1001 = vmatpush.bf16.msra.mxu0 0
    %1002 = vmatpush.bf16.msra.mxu0 %v990
    %1003 = vmatpush.bf16.msra.mxu0 %v989
    %1004 = vmatpush.bf16.msra.mxu0 %v988
    %1005 = vmatpush.bf16.msra.mxu0 %v987
    %1006 = vmatmul.bf16.gmra.mxu0 %v996
    %v1007 = vpop.f32.mrf.mxu0
    %v1008 = vadd.f32 0.0, %v1007
    %v1009 = vpop.f32.mrf.mxu0
    %v1010 = vadd.f32 0.0, %v1009
    %1011 = vdwg.mxu0
    %v1020 = vunpack.c.l.b16 %v942
    %v1021 = vunpack.c.l.b16 %v943
    %v1022 = vunpack.c.l.b16 %v944
    %v1023 = vunpack.c.l.b16 %v945
    %v1024 = vunpack.c.l.b16 %v946
    %v1025 = vunpack.c.l.b16 %v947
    %v1026 = vunpack.c.l.b16 %v948
    %v1027 = vunpack.c.l.b16 %v949
    %v1028 = vpack.c.b16 %v1021, %v1020
    %v1029 = vpack.c.b16 %v1023, %v1022
    %v1030 = vpack.c.b16 %v1025, %v1024
    %v1031 = vpack.c.b16 %v1027, %v1026
    %v1036 = vsel %vm394, %v963, 0
    %1038 = vmatpush.bf16.msra.mxu0 0
    %1039 = vmatpush.bf16.msra.mxu0 0
    %1040 = vmatpush.bf16.msra.mxu0 0
    %1041 = vmatpush.bf16.msra.mxu0 0
    %1042 = vmatpush.bf16.msra.mxu0 %v1031
    %1043 = vmatpush.bf16.msra.mxu0 %v1030
    %1044 = vmatpush.bf16.msra.mxu0 %v1029
    %1045 = vmatpush.bf16.msra.mxu0 %v1028
    %1046 = vmatmul.bf16.gmra.mxu0 %v1036
    %v1047 = vpop.f32.mrf.mxu0
    %v1048 = vadd.f32 %v1008, %v1047
    %v1049 = vpop.f32.mrf.mxu0
    %v1050 = vadd.f32 %v1010, %v1049
    %1051 = vdwg.mxu0
    %s1052 = scalar_lea.vmem %s5, 64
    %v1053 = vld [vmem:[%s1052] sm:$0xf]
    %v1054 = vld [vmem:[%s1052 + $0x4] sm:$0xf]
    %v1055 = vld [vmem:[%s1052 + $0x8] sm:$0xf]
    %v1056 = vld [vmem:[%s1052 + $0xc] sm:$0xf]
    %v1057 = vld [vmem:[%s1052 + $0x10] sm:$0xf]
    %v1058 = vld [vmem:[%s1052 + $0x14] sm:$0xf]
    %v1059 = vld [vmem:[%s1052 + $0x18] sm:$0xf]
    %v1060 = vld [vmem:[%s1052 + $0x1c] sm:$0xf]
    %v1061 = vrot.slane %v963, 1
    %v1070 = vunpack.c.l.b16 %v1053
    %v1071 = vunpack.c.l.b16 %v1054
    %v1072 = vunpack.c.l.b16 %v1055
    %v1073 = vunpack.c.l.b16 %v1056
    %v1074 = vunpack.c.l.b16 %v1057
    %v1075 = vunpack.c.l.b16 %v1058
    %v1076 = vunpack.c.l.b16 %v1059
    %v1077 = vunpack.c.l.b16 %v1060
    %v1078 = vpack.c.b16 %v1071, %v1070
    %v1079 = vpack.c.b16 %v1073, %v1072
    %v1080 = vpack.c.b16 %v1075, %v1074
    %v1081 = vpack.c.b16 %v1077, %v1076
    %v1087 = vsel %vm394, %v1061, 0
    %1089 = vmatpush.bf16.msra.mxu0 0
    %1090 = vmatpush.bf16.msra.mxu0 0
    %1091 = vmatpush.bf16.msra.mxu0 0
    %1092 = vmatpush.bf16.msra.mxu0 0
    %1093 = vmatpush.bf16.msra.mxu0 %v1081
    %1094 = vmatpush.bf16.msra.mxu0 %v1080
    %1095 = vmatpush.bf16.msra.mxu0 %v1079
    %1096 = vmatpush.bf16.msra.mxu0 %v1078
    %1097 = vmatmul.bf16.gmra.mxu0 %v1087
    %v1098 = vpop.f32.mrf.mxu0
    %v1099 = vadd.f32 0.0, %v1098
    %v1100 = vpop.f32.mrf.mxu0
    %v1101 = vadd.f32 0.0, %v1100
    %1102 = vdwg.mxu0
    %v1103 = vadd.f32 %v1048, %v1099
    %v1104 = vadd.f32 %v1050, %v1101
    %1105 = vst.msk [vmem:[#allocation3] sm:$0xff] %vm394, 0.0
    %1106 = vst.msk [vmem:[#allocation3 + $0x8] sm:$0xff] %vm394, 0.0
    %1107 = vst.msk [vmem:[#allocation3 + $0x10] sm:$0xf] %vm397, 0.0
    %v1108 = vmax.f32 %v1103, 0.0
    %1109 = vst.msk [vmem:[#allocation3 + $0x1] sm:$0xf] %vm397, %v1108
    %v1110 = vmax.f32 %v1104, 0.0
    %vm1111 = vcmask 523270
    %1112 = vst.msk [vmem:[#allocation3 + $0x1] sm:$0xc0] %vm1111, %v1108
    %1113 = vst.msk [vmem:[#allocation3 + $0x9] sm:$0x3] %vm677, %v1110
    %v1114 = vld [vmem:[#allocation3] sm:$0xff]
    %v1115 = vld [vmem:[#allocation3 + $0x8] sm:$0xff]
    %v1116 = vpack.c.bf16 %v1114, %v1114
    %v1117 = vpack.c.bf16 %v1115, %v1115
    %v1118 = vld [vmem:[%s6] sm:$0xf]
    %v1119 = vld [vmem:[%s6 + $0x4] sm:$0xf]
    %v1120 = vld [vmem:[%s6 + $0x8] sm:$0xf]
    %v1121 = vld [vmem:[%s6 + $0xc] sm:$0xf]
    %v1122 = vld [vmem:[%s6 + $0x10] sm:$0xf]
    %v1123 = vld [vmem:[%s6 + $0x14] sm:$0xf]
    %v1124 = vld [vmem:[%s6 + $0x18] sm:$0xf]
    %v1125 = vld [vmem:[%s6 + $0x1c] sm:$0xf]
    %s1126 = scalar_lea.vmem %s6, 32
    %v1127 = vld [vmem:[%s1126] sm:$0xf]
    %v1128 = vld [vmem:[%s1126 + $0x4] sm:$0xf]
    %v1129 = vld [vmem:[%s1126 + $0x8] sm:$0xf]
    %v1130 = vld [vmem:[%s1126 + $0xc] sm:$0xf]
    %v1131 = vld [vmem:[%s1126 + $0x10] sm:$0xf]
    %v1132 = vld [vmem:[%s1126 + $0x14] sm:$0xf]
    %v1133 = vld [vmem:[%s1126 + $0x18] sm:$0xf]
    %v1134 = vld [vmem:[%s1126 + $0x1c] sm:$0xf]
    %v1137 = vunpack.c.l.b16 %v1116
    %v1138 = vunpack.c.l.b16 %v1117
    %v1139 = vpack.c.b16 %v1138, %v1137
    %v1141 = vshrl.u32 %v1139, 16
    %v1143 = vshll.u32 %v1139, 16
    %v1145 = vrot.slane %v1143, 1
    %v1146 = vor.u32 %v1141, %v1145
    %v1155 = vunpack.c.l.b16 %v1127
    %v1156 = vunpack.c.l.b16 %v1128
    %v1157 = vunpack.c.l.b16 %v1129
    %v1158 = vunpack.c.l.b16 %v1130
    %v1159 = vunpack.c.l.b16 %v1131
    %v1160 = vunpack.c.l.b16 %v1132
    %v1161 = vunpack.c.l.b16 %v1133
    %v1162 = vunpack.c.l.b16 %v1134
    %v1163 = vpack.c.b16 %v1156, %v1155
    %v1164 = vpack.c.b16 %v1158, %v1157
    %v1165 = vpack.c.b16 %v1160, %v1159
    %v1166 = vpack.c.b16 %v1162, %v1161
    %v1172 = vsel %vm394, %v1146, 0
    %1174 = vmatpush.bf16.msra.mxu0 0
    %1175 = vmatpush.bf16.msra.mxu0 0
    %1176 = vmatpush.bf16.msra.mxu0 0
    %1177 = vmatpush.bf16.msra.mxu0 0
    %1178 = vmatpush.bf16.msra.mxu0 %v1166
    %1179 = vmatpush.bf16.msra.mxu0 %v1165
    %1180 = vmatpush.bf16.msra.mxu0 %v1164
    %1181 = vmatpush.bf16.msra.mxu0 %v1163
    %1182 = vmatmul.bf16.gmra.mxu0 %v1172
    %v1183 = vpop.f32.mrf.mxu0
    %v1184 = vadd.f32 0.0, %v1183
    %v1185 = vpop.f32.mrf.mxu0
    %v1186 = vadd.f32 0.0, %v1185
    %1187 = vdwg.mxu0
    %v1196 = vunpack.c.l.b16 %v1118
    %v1197 = vunpack.c.l.b16 %v1119
    %v1198 = vunpack.c.l.b16 %v1120
    %v1199 = vunpack.c.l.b16 %v1121
    %v1200 = vunpack.c.l.b16 %v1122
    %v1201 = vunpack.c.l.b16 %v1123
    %v1202 = vunpack.c.l.b16 %v1124
    %v1203 = vunpack.c.l.b16 %v1125
    %v1204 = vpack.c.b16 %v1197, %v1196
    %v1205 = vpack.c.b16 %v1199, %v1198
    %v1206 = vpack.c.b16 %v1201, %v1200
    %v1207 = vpack.c.b16 %v1203, %v1202
    %v1212 = vsel %vm394, %v1139, 0
    %1214 = vmatpush.bf16.msra.mxu0 0
    %1215 = vmatpush.bf16.msra.mxu0 0
    %1216 = vmatpush.bf16.msra.mxu0 0
    %1217 = vmatpush.bf16.msra.mxu0 0
    %1218 = vmatpush.bf16.msra.mxu0 %v1207
    %1219 = vmatpush.bf16.msra.mxu0 %v1206
    %1220 = vmatpush.bf16.msra.mxu0 %v1205
    %1221 = vmatpush.bf16.msra.mxu0 %v1204
    %1222 = vmatmul.bf16.gmra.mxu0 %v1212
    %v1223 = vpop.f32.mrf.mxu0
    %v1224 = vadd.f32 %v1184, %v1223
    %v1225 = vpop.f32.mrf.mxu0
    %v1226 = vadd.f32 %v1186, %v1225
    %1227 = vdwg.mxu0
    %s1228 = scalar_lea.vmem %s6, 64
    %v1229 = vld [vmem:[%s1228] sm:$0xf]
    %v1230 = vld [vmem:[%s1228 + $0x4] sm:$0xf]
    %v1231 = vld [vmem:[%s1228 + $0x8] sm:$0xf]
    %v1232 = vld [vmem:[%s1228 + $0xc] sm:$0xf]
    %v1233 = vld [vmem:[%s1228 + $0x10] sm:$0xf]
    %v1234 = vld [vmem:[%s1228 + $0x14] sm:$0xf]
    %v1235 = vld [vmem:[%s1228 + $0x18] sm:$0xf]
    %v1236 = vld [vmem:[%s1228 + $0x1c] sm:$0xf]
    %v1237 = vrot.slane %v1139, 1
    %v1246 = vunpack.c.l.b16 %v1229
    %v1247 = vunpack.c.l.b16 %v1230
    %v1248 = vunpack.c.l.b16 %v1231
    %v1249 = vunpack.c.l.b16 %v1232
    %v1250 = vunpack.c.l.b16 %v1233
    %v1251 = vunpack.c.l.b16 %v1234
    %v1252 = vunpack.c.l.b16 %v1235
    %v1253 = vunpack.c.l.b16 %v1236
    %v1254 = vpack.c.b16 %v1247, %v1246
    %v1255 = vpack.c.b16 %v1249, %v1248
    %v1256 = vpack.c.b16 %v1251, %v1250
    %v1257 = vpack.c.b16 %v1253, %v1252
    %v1263 = vsel %vm394, %v1237, 0
    %1265 = vmatpush.bf16.msra.mxu0 0
    %1266 = vmatpush.bf16.msra.mxu0 0
    %1267 = vmatpush.bf16.msra.mxu0 0
    %1268 = vmatpush.bf16.msra.mxu0 0
    %1269 = vmatpush.bf16.msra.mxu0 %v1257
    %1270 = vmatpush.bf16.msra.mxu0 %v1256
    %1271 = vmatpush.bf16.msra.mxu0 %v1255
    %1272 = vmatpush.bf16.msra.mxu0 %v1254
    %1273 = vmatmul.bf16.gmra.mxu0 %v1263
    %v1274 = vpop.f32.mrf.mxu0
    %v1275 = vadd.f32 0.0, %v1274
    %v1276 = vpop.f32.mrf.mxu0
    %v1277 = vadd.f32 0.0, %v1276
    %1278 = vdwg.mxu0
    %v1279 = vadd.f32 %v1224, %v1275
    %v1280 = vadd.f32 %v1226, %v1277
    %1281 = vst.msk [vmem:[#allocation2] sm:$0xff] %vm394, 0.0
    %1282 = vst.msk [vmem:[#allocation2 + $0x8] sm:$0xff] %vm394, 0.0
    %1283 = vst.msk [vmem:[#allocation2 + $0x10] sm:$0xf] %vm397, 0.0
    %vm1284 = vcmask 31744
    %v1285 = vsel %vm1284, %v405, 0
    %vm1287 = vcmask 1043456
    %v1289 = vsel %vm1287, %v1279, 0
    %1291 = vmatpush.msra.mxu0 0.0
    %1292 = vmatpush.msra.mxu0 0.0
    %1293 = vmatpush.msra.mxu0 0.0
    %1294 = vmatpush.msra.mxu0 0.0
    %1295 = vmatpush.msra.mxu0 0.0
    %1296 = vmatpush.msra.mxu0 0.0
    %1297 = vmatpush.msra.mxu0 0.0
    %1298 = vmatpush.msra.mxu0 0.0
    %1299 = vmatpush.msra.mxu0 0.0
    %1300 = vmatpush.msra.mxu0 0.0
    %1301 = vmatpush.msra.mxu0 0.0
    %1302 = vmatpush.msra.mxu0 0.0
    %1303 = vmatpush.msra.mxu0 0.0
    %1304 = vmatpush.msra.mxu0 0.0
    %1305 = vmatpush.msra.mxu0 0.0
    %1306 = vmatpush.msra.mxu0 %v1289
    %1307 = vmatmul.f32.gmra.mxu0 %v1285
    %v1308 = vpop.f32.mrf.mxu0
    %v1309 = vadd.f32 0.0, %v1308
    %1310 = vdwg.mxu0
    %v1311 = vmax.f32 %v1309, 0.0
    %vm1312 = vcmask 254976
    %1313 = vst.msk [vmem:[#allocation2 + $0x1] sm:$0x3] %vm1312, %v1311
    %vm1315 = vcmask 1041408
    %v1316 = vrot.slane %v1279, 6
    %v1317 = vrot.slane %v1280, 6
    %v1318 = vsel %vm1315, %v1316, %v1317
    %v1319 = vsel %vm1287, %v1318, 0
    %1321 = vmatpush.msra.mxu0 0.0
    %1322 = vmatpush.msra.mxu0 0.0
    %1323 = vmatpush.msra.mxu0 0.0
    %1324 = vmatpush.msra.mxu0 0.0
    %1325 = vmatpush.msra.mxu0 0.0
    %1326 = vmatpush.msra.mxu0 0.0
    %1327 = vmatpush.msra.mxu0 0.0
    %1328 = vmatpush.msra.mxu0 0.0
    %1329 = vmatpush.msra.mxu0 0.0
    %1330 = vmatpush.msra.mxu0 0.0
    %1331 = vmatpush.msra.mxu0 0.0
    %1332 = vmatpush.msra.mxu0 0.0
    %1333 = vmatpush.msra.mxu0 0.0
    %1334 = vmatpush.msra.mxu0 0.0
    %1335 = vmatpush.msra.mxu0 0.0
    %1336 = vmatpush.msra.mxu0 %v1319
    %1337 = vmatmul.f32.gmra.mxu0 %v1285
    %v1338 = vpop.f32.mrf.mxu0
    %v1339 = vadd.f32 0.0, %v1338
    %1340 = vdwg.mxu0
    %v1341 = vmax.f32 %v1339, 0.0
    %1342 = vst.msk [vmem:[#allocation2 + $0x5] sm:$0x3] %vm1312, %v1341
    %v1343 = vld [vmem:[#allocation2] sm:$0xff]
    %v1344 = vpack.c.bf16 %v1343, %v1343
    %v1345 = vld [vmem:[%s7] sm:$0xf]
    %v1346 = vld [vmem:[%s7 + $0x4] sm:$0xf]
    %v1347 = vld [vmem:[%s7 + $0x8] sm:$0xf]
    %v1348 = vld [vmem:[%s7 + $0xc] sm:$0xf]
    %s1349 = scalar_lea.vmem %s7, 16
    %v1350 = vld [vmem:[%s1349] sm:$0xf]
    %v1351 = vld [vmem:[%s1349 + $0x4] sm:$0xf]
    %v1352 = vld [vmem:[%s1349 + $0x8] sm:$0xf]
    %v1353 = vld [vmem:[%s1349 + $0xc] sm:$0xf]
    %v1355 = vunpack.c.l.b16 %v1344
    %v1356 = vpack.c.b16 %v1355, %v1355
    %v1358 = vshrl.u32 %v1356, 16
    %v1360 = vshll.u32 %v1356, 16
    %v1362 = vrot.slane %v1360, 1
    %v1363 = vor.u32 %v1358, %v1362
    %v1368 = vunpack.c.l.b16 %v1350
    %v1369 = vunpack.c.l.b16 %v1351
    %v1370 = vunpack.c.l.b16 %v1352
    %v1371 = vunpack.c.l.b16 %v1353
    %v1372 = vpack.c.b16 %v1369, %v1368
    %v1373 = vpack.c.b16 %v1371, %v1370
    %vm1376 = vcmask 261120
    %v1378 = vsel %vm1376, %v1363, 0
    %1380 = vmatpush.bf16.msra.mxu0 0
    %1381 = vmatpush.bf16.msra.mxu0 0
    %1382 = vmatpush.bf16.msra.mxu0 0
    %1383 = vmatpush.bf16.msra.mxu0 0
    %1384 = vmatpush.bf16.msra.mxu0 0
    %1385 = vmatpush.bf16.msra.mxu0 0
    %1386 = vmatpush.bf16.msra.mxu0 %v1373
    %1387 = vmatpush.bf16.msra.mxu0 %v1372
    %1388 = vmatmul.bf16.gmra.mxu0 %v1378
    %v1389 = vpop.f32.mrf.mxu0
    %v1390 = vadd.f32 0.0, %v1389
    %v1391 = vpop.f32.mrf.mxu0
    %1392 = vdwg.mxu0
    %v1397 = vunpack.c.l.b16 %v1345
    %v1398 = vunpack.c.l.b16 %v1346
    %v1399 = vunpack.c.l.b16 %v1347
    %v1400 = vunpack.c.l.b16 %v1348
    %v1401 = vpack.c.b16 %v1398, %v1397
    %v1402 = vpack.c.b16 %v1400, %v1399
    %v1406 = vsel %vm1376, %v1344, 0
    %1408 = vmatpush.bf16.msra.mxu0 0
    %1409 = vmatpush.bf16.msra.mxu0 0
    %1410 = vmatpush.bf16.msra.mxu0 0
    %1411 = vmatpush.bf16.msra.mxu0 0
    %1412 = vmatpush.bf16.msra.mxu0 0
    %1413 = vmatpush.bf16.msra.mxu0 0
    %1414 = vmatpush.bf16.msra.mxu0 %v1402
    %1415 = vmatpush.bf16.msra.mxu0 %v1401
    %1416 = vmatmul.bf16.gmra.mxu0 %v1406
    %v1417 = vpop.f32.mrf.mxu0
    %v1418 = vadd.f32 %v1390, %v1417
    %v1419 = vpop.f32.mrf.mxu0
    %1420 = vdwg.mxu0
    %s1421 = scalar_lea.vmem %s7, 32
    %v1422 = vld [vmem:[%s1421] sm:$0xf]
    %v1423 = vld [vmem:[%s1421 + $0x4] sm:$0xf]
    %v1424 = vld [vmem:[%s1421 + $0x8] sm:$0xf]
    %v1425 = vld [vmem:[%s1421 + $0xc] sm:$0xf]
    %v1426 = vrot.slane %v1356, 1
    %v1431 = vunpack.c.l.b16 %v1422
    %v1432 = vunpack.c.l.b16 %v1423
    %v1433 = vunpack.c.l.b16 %v1424
    %v1434 = vunpack.c.l.b16 %v1425
    %v1435 = vpack.c.b16 %v1432, %v1431
    %v1436 = vpack.c.b16 %v1434, %v1433
    %v1440 = vsel %vm1376, %v1426, 0
    %1442 = vmatpush.bf16.msra.mxu0 0
    %1443 = vmatpush.bf16.msra.mxu0 0
    %1444 = vmatpush.bf16.msra.mxu0 0
    %1445 = vmatpush.bf16.msra.mxu0 0
    %1446 = vmatpush.bf16.msra.mxu0 0
    %1447 = vmatpush.bf16.msra.mxu0 0
    %1448 = vmatpush.bf16.msra.mxu0 %v1436
    %1449 = vmatpush.bf16.msra.mxu0 %v1435
    %1450 = vmatmul.bf16.gmra.mxu0 %v1440
    %v1451 = vpop.f32.mrf.mxu0
    %v1452 = vadd.f32 0.0, %v1451
    %v1453 = vpop.f32.mrf.mxu0
    %1454 = vdwg.mxu0
    %v1455 = vadd.f32 %v1418, %v1452
    %1456 = vst.msk [vmem:[#allocation3] sm:$0xff] %vm394, 0.0
    %1457 = vst.msk [vmem:[#allocation3 + $0x8] sm:$0xff] %vm394, 0.0
    %1458 = vst.msk [vmem:[#allocation3 + $0x10] sm:$0xf] %vm397, 0.0
    %v1459 = vmax.f32 %v1455, 0.0
    %1460 = vst.msk [vmem:[#allocation3 + $0x1] sm:$0x3] %vm1312, %v1459
    %vm1461 = vcmask 259076
    %1462 = vst.msk [vmem:[#allocation3 + $0x1] sm:$0x30] %vm1461, %v1459
    %v1463 = vld [vmem:[#allocation3] sm:$0xff]
    %v1464 = vpack.c.bf16 %v1463, %v1463
    %v1465 = vld [vmem:[%s8] sm:$0xf]
    %v1466 = vld [vmem:[%s8 + $0x4] sm:$0xf]
    %v1467 = vld [vmem:[%s8 + $0x8] sm:$0xf]
    %v1468 = vld [vmem:[%s8 + $0xc] sm:$0xf]
    %s1469 = scalar_lea.vmem %s8, 16
    %v1470 = vld [vmem:[%s1469] sm:$0xf]
    %v1471 = vld [vmem:[%s1469 + $0x4] sm:$0xf]
    %v1472 = vld [vmem:[%s1469 + $0x8] sm:$0xf]
    %v1473 = vld [vmem:[%s1469 + $0xc] sm:$0xf]
    %v1475 = vunpack.c.l.b16 %v1464
    %v1476 = vpack.c.b16 %v1475, %v1475
    %v1478 = vshrl.u32 %v1476, 16
    %v1480 = vshll.u32 %v1476, 16
    %v1482 = vrot.slane %v1480, 1
    %v1483 = vor.u32 %v1478, %v1482
    %v1488 = vunpack.c.l.b16 %v1470
    %v1489 = vunpack.c.l.b16 %v1471
    %v1490 = vunpack.c.l.b16 %v1472
    %v1491 = vunpack.c.l.b16 %v1473
    %v1492 = vpack.c.b16 %v1489, %v1488
    %v1493 = vpack.c.b16 %v1491, %v1490
    %v1497 = vsel %vm1376, %v1483, 0
    %1499 = vmatpush.bf16.msra.mxu0 0
    %1500 = vmatpush.bf16.msra.mxu0 0
    %1501 = vmatpush.bf16.msra.mxu0 0
    %1502 = vmatpush.bf16.msra.mxu0 0
    %1503 = vmatpush.bf16.msra.mxu0 0
    %1504 = vmatpush.bf16.msra.mxu0 0
    %1505 = vmatpush.bf16.msra.mxu0 %v1493
    %1506 = vmatpush.bf16.msra.mxu0 %v1492
    %1507 = vmatmul.bf16.gmra.mxu0 %v1497
    %v1508 = vpop.f32.mrf.mxu0
    %v1509 = vadd.f32 0.0, %v1508
    %v1510 = vpop.f32.mrf.mxu0
    %1511 = vdwg.mxu0
    %v1516 = vunpack.c.l.b16 %v1465
    %v1517 = vunpack.c.l.b16 %v1466
    %v1518 = vunpack.c.l.b16 %v1467
    %v1519 = vunpack.c.l.b16 %v1468
    %v1520 = vpack.c.b16 %v1517, %v1516
    %v1521 = vpack.c.b16 %v1519, %v1518
    %v1525 = vsel %vm1376, %v1464, 0
    %1527 = vmatpush.bf16.msra.mxu0 0
    %1528 = vmatpush.bf16.msra.mxu0 0
    %1529 = vmatpush.bf16.msra.mxu0 0
    %1530 = vmatpush.bf16.msra.mxu0 0
    %1531 = vmatpush.bf16.msra.mxu0 0
    %1532 = vmatpush.bf16.msra.mxu0 0
    %1533 = vmatpush.bf16.msra.mxu0 %v1521
    %1534 = vmatpush.bf16.msra.mxu0 %v1520
    %1535 = vmatmul.bf16.gmra.mxu0 %v1525
    %v1536 = vpop.f32.mrf.mxu0
    %v1537 = vadd.f32 %v1509, %v1536
    %v1538 = vpop.f32.mrf.mxu0
    %1539 = vdwg.mxu0
    %s1540 = scalar_lea.vmem %s8, 32
    %v1541 = vld [vmem:[%s1540] sm:$0xf]
    %v1542 = vld [vmem:[%s1540 + $0x4] sm:$0xf]
    %v1543 = vld [vmem:[%s1540 + $0x8] sm:$0xf]
    %v1544 = vld [vmem:[%s1540 + $0xc] sm:$0xf]
    %v1545 = vrot.slane %v1476, 1
    %v1550 = vunpack.c.l.b16 %v1541
    %v1551 = vunpack.c.l.b16 %v1542
    %v1552 = vunpack.c.l.b16 %v1543
    %v1553 = vunpack.c.l.b16 %v1544
    %v1554 = vpack.c.b16 %v1551, %v1550
    %v1555 = vpack.c.b16 %v1553, %v1552
    %v1559 = vsel %vm1376, %v1545, 0
    %1561 = vmatpush.bf16.msra.mxu0 0
    %1562 = vmatpush.bf16.msra.mxu0 0
    %1563 = vmatpush.bf16.msra.mxu0 0
    %1564 = vmatpush.bf16.msra.mxu0 0
    %1565 = vmatpush.bf16.msra.mxu0 0
    %1566 = vmatpush.bf16.msra.mxu0 0
    %1567 = vmatpush.bf16.msra.mxu0 %v1555
    %1568 = vmatpush.bf16.msra.mxu0 %v1554
    %1569 = vmatmul.bf16.gmra.mxu0 %v1559
    %v1570 = vpop.f32.mrf.mxu0
    %v1571 = vadd.f32 0.0, %v1570
    %v1572 = vpop.f32.mrf.mxu0
    %1573 = vdwg.mxu0
    %v1574 = vadd.f32 %v1537, %v1571
    %1575 = vst.msk [vmem:[#allocation2] sm:$0xff] %vm394, 0.0
    %1576 = vst.msk [vmem:[#allocation2 + $0x8] sm:$0xff] %vm394, 0.0
    %1577 = vst.msk [vmem:[#allocation2 + $0x10] sm:$0xf] %vm397, 0.0
    %v1578 = vmax.f32 %v1574, 0.0
    %vm1579 = vcmask 253952
    %1580 = vst.msk [vmem:[#allocation2 + $0x1] sm:$0x1] %vm1579, %v1578
    %vm1581 = vcmask 258052
    %1582 = vst.msk [vmem:[#allocation2] sm:$0x10] %vm1581, %v1578
    %v1583 = vld [vmem:[#allocation2] sm:$0xff]
    %v1584 = vpack.c.bf16 %v1583, %v1583
    %v1585 = vld [vmem:[%s9] sm:$0xf]
    %v1586 = vld [vmem:[%s9 + $0x4] sm:$0xf]
    %v1587 = vld [vmem:[%s9 + $0x8] sm:$0xf]
    %v1588 = vld [vmem:[%s9 + $0xc] sm:$0xf]
    %s1589 = scalar_lea.vmem %s9, 16
    %v1590 = vld [vmem:[%s1589] sm:$0xf]
    %v1591 = vld [vmem:[%s1589 + $0x4] sm:$0xf]
    %v1592 = vld [vmem:[%s1589 + $0x8] sm:$0xf]
    %v1593 = vld [vmem:[%s1589 + $0xc] sm:$0xf]
    %v1595 = vunpack.c.l.b16 %v1584
    %v1596 = vpack.c.b16 %v1595, %v1595
    %v1598 = vshrl.u32 %v1596, 16
    %v1600 = vshll.u32 %v1596, 16
    %v1602 = vrot.slane %v1600, 1
    %v1603 = vor.u32 %v1598, %v1602
    %v1608 = vunpack.c.l.b16 %v1590
    %v1609 = vunpack.c.l.b16 %v1591
    %v1610 = vunpack.c.l.b16 %v1592
    %v1611 = vunpack.c.l.b16 %v1593
    %v1612 = vpack.c.b16 %v1609, %v1608
    %v1613 = vpack.c.b16 %v1611, %v1610
    %v1617 = vsel %vm1376, %v1603, 0
    %1619 = vmatpush.bf16.msra.mxu0 0
    %1620 = vmatpush.bf16.msra.mxu0 0
    %1621 = vmatpush.bf16.msra.mxu0 0
    %1622 = vmatpush.bf16.msra.mxu0 0
    %1623 = vmatpush.bf16.msra.mxu0 0
    %1624 = vmatpush.bf16.msra.mxu0 0
    %1625 = vmatpush.bf16.msra.mxu0 %v1613
    %1626 = vmatpush.bf16.msra.mxu0 %v1612
    %1627 = vmatmul.bf16.gmra.mxu0 %v1617
    %v1628 = vpop.f32.mrf.mxu0
    %v1629 = vadd.f32 0.0, %v1628
    %v1630 = vpop.f32.mrf.mxu0
    %1631 = vdwg.mxu0
    %v1636 = vunpack.c.l.b16 %v1585
    %v1637 = vunpack.c.l.b16 %v1586
    %v1638 = vunpack.c.l.b16 %v1587
    %v1639 = vunpack.c.l.b16 %v1588
    %v1640 = vpack.c.b16 %v1637, %v1636
    %v1641 = vpack.c.b16 %v1639, %v1638
    %v1645 = vsel %vm1376, %v1584, 0
    %1647 = vmatpush.bf16.msra.mxu0 0
    %1648 = vmatpush.bf16.msra.mxu0 0
    %1649 = vmatpush.bf16.msra.mxu0 0
    %1650 = vmatpush.bf16.msra.mxu0 0
    %1651 = vmatpush.bf16.msra.mxu0 0
    %1652 = vmatpush.bf16.msra.mxu0 0
    %1653 = vmatpush.bf16.msra.mxu0 %v1641
    %1654 = vmatpush.bf16.msra.mxu0 %v1640
    %1655 = vmatmul.bf16.gmra.mxu0 %v1645
    %v1656 = vpop.f32.mrf.mxu0
    %v1657 = vadd.f32 %v1629, %v1656
    %v1658 = vpop.f32.mrf.mxu0
    %1659 = vdwg.mxu0
    %s1660 = scalar_lea.vmem %s9, 32
    %v1661 = vld [vmem:[%s1660] sm:$0xf]
    %v1662 = vld [vmem:[%s1660 + $0x4] sm:$0xf]
    %v1663 = vld [vmem:[%s1660 + $0x8] sm:$0xf]
    %v1664 = vld [vmem:[%s1660 + $0xc] sm:$0xf]
    %v1665 = vrot.slane %v1596, 1
    %v1670 = vunpack.c.l.b16 %v1661
    %v1671 = vunpack.c.l.b16 %v1662
    %v1672 = vunpack.c.l.b16 %v1663
    %v1673 = vunpack.c.l.b16 %v1664
    %v1674 = vpack.c.b16 %v1671, %v1670
    %v1675 = vpack.c.b16 %v1673, %v1672
    %v1679 = vsel %vm1376, %v1665, 0
    %1681 = vmatpush.bf16.msra.mxu0 0
    %1682 = vmatpush.bf16.msra.mxu0 0
    %1683 = vmatpush.bf16.msra.mxu0 0
    %1684 = vmatpush.bf16.msra.mxu0 0
    %1685 = vmatpush.bf16.msra.mxu0 0
    %1686 = vmatpush.bf16.msra.mxu0 0
    %1687 = vmatpush.bf16.msra.mxu0 %v1675
    %1688 = vmatpush.bf16.msra.mxu0 %v1674
    %1689 = vmatmul.bf16.gmra.mxu0 %v1679
    %v1690 = vpop.f32.mrf.mxu0
    %v1691 = vadd.f32 0.0, %v1690
    %v1692 = vpop.f32.mrf.mxu0
    %1693 = vdwg.mxu0
    %v1694 = vadd.f32 %v1657, %v1691
    %1695 = vst.msk [vmem:[#allocation3] sm:$0xff] %vm394, 0.0
    %1696 = vst.msk [vmem:[#allocation3 + $0x8] sm:$0xff] %vm394, 0.0
    %1697 = vst.msk [vmem:[#allocation3 + $0x10] sm:$0xf] %vm397, 0.0
    %v1698 = vmax.f32 %v1694, 0.0
    %1699 = vst.msk [vmem:[#allocation3 + $0x1] sm:$0x1] %vm1579, %v1698
    %vm1700 = vcmask 257027
    %1701 = vst.msk [vmem:[#allocation3 + $0x1] sm:$0x8] %vm1700, %v1698
    %v1702 = vld [vmem:[#allocation3 + $0x1] sm:$0x1]
    %1703 = vst.msk [vmem:[#allocation4] sm:$0x1] %vm1579, %v1702
    %v1704 = vld [vmem:[#allocation3 + $0x4] sm:$0x1]
    %1705 = vst.msk [vmem:[#allocation4 + $0x1] sm:$0x1] %vm1579, %v1704
    %v1706 = vld [vmem:[%s1] sm:$0xff]
    %v1707 = vld [vmem:[%s1 + $0x8] sm:$0xff]
    %v1708 = vld [vmem:[%s1 + $0x10] sm:$0xff]
    %v1709 = vld [vmem:[%s1 + $0x18] sm:$0xff]
    %v1710 = vld [vmem:[%s1 + $0x20] sm:$0xf]
    %v1711 = vpack.c.bf16 %v1706, %v1706
    %v1712 = vpack.c.bf16 %v1707, %v1707
    %v1713 = vpack.c.bf16 %v1708, %v1708
    %v1714 = vpack.c.bf16 %v1709, %v1709
    %v1715 = vpack.c.bf16 %v1710, %v1710
    %v1716 = vld [vmem:[%s10] sm:$0xf]
    %v1717 = vld [vmem:[%s10 + $0x4] sm:$0xf]
    %v1718 = vld [vmem:[%s10 + $0x8] sm:$0xf]
    %v1719 = vld [vmem:[%s10 + $0xc] sm:$0xf]
    %v1720 = vld [vmem:[%s10 + $0x10] sm:$0xf]
    %v1721 = vld [vmem:[%s10 + $0x14] sm:$0xf]
    %v1722 = vld [vmem:[%s10 + $0x18] sm:$0xf]
    %v1723 = vld [vmem:[%s10 + $0x1c] sm:$0xf]
    %s1724 = scalar_lea.vmem %s10, 32
    %v1725 = vld [vmem:[%s1724] sm:$0xf]
    %v1726 = vld [vmem:[%s1724 + $0x4] sm:$0xf]
    %v1727 = vld [vmem:[%s1724 + $0x8] sm:$0xf]
    %v1728 = vld [vmem:[%s1724 + $0xc] sm:$0xf]
    %v1729 = vld [vmem:[%s1724 + $0x10] sm:$0xf]
    %v1730 = vld [vmem:[%s1724 + $0x14] sm:$0xf]
    %v1731 = vld [vmem:[%s1724 + $0x18] sm:$0xf]
    %v1732 = vld [vmem:[%s1724 + $0x1c] sm:$0xf]
    %v1738 = vunpack.c.l.b16 %v1711
    %v1739 = vunpack.c.l.b16 %v1712
    %v1740 = vunpack.c.l.b16 %v1713
    %v1741 = vunpack.c.l.b16 %v1714
    %v1742 = vunpack.c.l.b16 %v1715
    %v1743 = vpack.c.b16 %v1739, %v1738
    %v1744 = vpack.c.b16 %v1741, %v1740
    %v1745 = vpack.c.b16 %v1742, %v1742
    %v1747 = vshrl.u32 %v1743, 16
    %v1749 = vshll.u32 %v1743, 16
    %v1751 = vrot.slane %v1749, 1
    %v1752 = vor.u32 %v1747, %v1751
    %v1754 = vshll.u32 %v1744, 16
    %v1756 = vrot.slane %v1754, 1
    %v1757 = vsel %vm120, %v1752, %v1756
    %v1758 = vshrl.u32 %v1744, 16
    %v1760 = vor.u32 %v1758, %v1756
    %v1762 = vshll.u32 %v1745, 16
    %v1764 = vrot.slane %v1762, 1
    %v1765 = vsel %vm120, %v1760, %v1764
    %v1766 = vshrl.u32 %v1745, 16
    %v1768 = vor.u32 %v1766, %v1764
    %v1777 = vunpack.c.l.b16 %v1725
    %v1778 = vunpack.c.l.b16 %v1726
    %v1779 = vunpack.c.l.b16 %v1727
    %v1780 = vunpack.c.l.b16 %v1728
    %v1781 = vunpack.c.l.b16 %v1729
    %v1782 = vunpack.c.l.b16 %v1730
    %v1783 = vunpack.c.l.b16 %v1731
    %v1784 = vunpack.c.l.b16 %v1732
    %v1785 = vpack.c.b16 %v1778, %v1777
    %v1786 = vpack.c.b16 %v1780, %v1779
    %v1787 = vpack.c.b16 %v1782, %v1781
    %v1788 = vpack.c.b16 %v1784, %v1783
    %v1794 = vsel %vm394, %v1757, 0
    %v1797 = vsel %vm394, %v1765, 0
    %v1800 = vsel %vm394, %v1768, 0
    %1802 = vmatpush.bf16.msra.mxu0 0
    %1803 = vmatpush.bf16.msra.mxu0 0
    %1804 = vmatpush.bf16.msra.mxu0 0
    %1805 = vmatpush.bf16.msra.mxu0 0
    %1806 = vmatpush.bf16.msra.mxu0 %v1788
    %1807 = vmatpush.bf16.msra.mxu0 %v1787
    %1808 = vmatpush.bf16.msra.mxu0 %v1786
    %1809 = vmatpush.bf16.msra.mxu0 %v1785
    %1810 = vmatmul.bf16.gmra.mxu0 %v1794
    %v1811 = vpop.f32.mrf.mxu0
    %v1812 = vadd.f32 0.0, %v1811
    %v1813 = vpop.f32.mrf.mxu0
    %v1814 = vadd.f32 0.0, %v1813
    %1815 = vmatmul.bf16.gmra.mxu0 %v1797
    %v1816 = vpop.f32.mrf.mxu0
    %v1817 = vadd.f32 0.0, %v1816
    %v1818 = vpop.f32.mrf.mxu0
    %v1819 = vadd.f32 0.0, %v1818
    %1820 = vmatmul.bf16.gmra.mxu0 %v1800
    %v1821 = vpop.f32.mrf.mxu0
    %v1822 = vadd.f32 0.0, %v1821
    %v1823 = vpop.f32.mrf.mxu0
    %1824 = vdwg.mxu0
    %v1833 = vunpack.c.l.b16 %v1716
    %v1834 = vunpack.c.l.b16 %v1717
    %v1835 = vunpack.c.l.b16 %v1718
    %v1836 = vunpack.c.l.b16 %v1719
    %v1837 = vunpack.c.l.b16 %v1720
    %v1838 = vunpack.c.l.b16 %v1721
    %v1839 = vunpack.c.l.b16 %v1722
    %v1840 = vunpack.c.l.b16 %v1723
    %v1841 = vpack.c.b16 %v1834, %v1833
    %v1842 = vpack.c.b16 %v1836, %v1835
    %v1843 = vpack.c.b16 %v1838, %v1837
    %v1844 = vpack.c.b16 %v1840, %v1839
    %v1849 = vsel %vm394, %v1743, 0
    %v1851 = vsel %vm394, %v1744, 0
    %v1853 = vsel %vm394, %v1745, 0
    %1855 = vmatpush.bf16.msra.mxu0 0
    %1856 = vmatpush.bf16.msra.mxu0 0
    %1857 = vmatpush.bf16.msra.mxu0 0
    %1858 = vmatpush.bf16.msra.mxu0 0
    %1859 = vmatpush.bf16.msra.mxu0 %v1844
    %1860 = vmatpush.bf16.msra.mxu0 %v1843
    %1861 = vmatpush.bf16.msra.mxu0 %v1842
    %1862 = vmatpush.bf16.msra.mxu0 %v1841
    %1863 = vmatmul.bf16.gmra.mxu0 %v1849
    %v1864 = vpop.f32.mrf.mxu0
    %v1865 = vadd.f32 %v1812, %v1864
    %v1866 = vpop.f32.mrf.mxu0
    %v1867 = vadd.f32 %v1814, %v1866
    %1868 = vmatmul.bf16.gmra.mxu0 %v1851
    %v1869 = vpop.f32.mrf.mxu0
    %v1870 = vadd.f32 %v1817, %v1869
    %v1871 = vpop.f32.mrf.mxu0
    %v1872 = vadd.f32 %v1819, %v1871
    %1873 = vmatmul.bf16.gmra.mxu0 %v1853
    %v1874 = vpop.f32.mrf.mxu0
    %v1875 = vadd.f32 %v1822, %v1874
    %v1876 = vpop.f32.mrf.mxu0
    %1877 = vdwg.mxu0
    %s1878 = scalar_lea.vmem %s10, 64
    %v1879 = vld [vmem:[%s1878] sm:$0xf]
    %v1880 = vld [vmem:[%s1878 + $0x4] sm:$0xf]
    %v1881 = vld [vmem:[%s1878 + $0x8] sm:$0xf]
    %v1882 = vld [vmem:[%s1878 + $0xc] sm:$0xf]
    %v1883 = vld [vmem:[%s1878 + $0x10] sm:$0xf]
    %v1884 = vld [vmem:[%s1878 + $0x14] sm:$0xf]
    %v1885 = vld [vmem:[%s1878 + $0x18] sm:$0xf]
    %v1886 = vld [vmem:[%s1878 + $0x1c] sm:$0xf]
    %v1887 = vrot.slane %v1743, 1
    %v1888 = vrot.slane %v1744, 1
    %v1889 = vsel %vm309, %v1887, %v1888
    %v1890 = vrot.slane %v1745, 1
    %v1891 = vsel %vm309, %v1888, %v1890
    %v1900 = vunpack.c.l.b16 %v1879
    %v1901 = vunpack.c.l.b16 %v1880
    %v1902 = vunpack.c.l.b16 %v1881
    %v1903 = vunpack.c.l.b16 %v1882
    %v1904 = vunpack.c.l.b16 %v1883
    %v1905 = vunpack.c.l.b16 %v1884
    %v1906 = vunpack.c.l.b16 %v1885
    %v1907 = vunpack.c.l.b16 %v1886
    %v1908 = vpack.c.b16 %v1901, %v1900
    %v1909 = vpack.c.b16 %v1903, %v1902
    %v1910 = vpack.c.b16 %v1905, %v1904
    %v1911 = vpack.c.b16 %v1907, %v1906
    %v1917 = vsel %vm394, %v1889, 0
    %v1920 = vsel %vm394, %v1891, 0
    %v1923 = vsel %vm394, %v1890, 0
    %1925 = vmatpush.bf16.msra.mxu0 0
    %1926 = vmatpush.bf16.msra.mxu0 0
    %1927 = vmatpush.bf16.msra.mxu0 0
    %1928 = vmatpush.bf16.msra.mxu0 0
    %1929 = vmatpush.bf16.msra.mxu0 %v1911
    %1930 = vmatpush.bf16.msra.mxu0 %v1910
    %1931 = vmatpush.bf16.msra.mxu0 %v1909
    %1932 = vmatpush.bf16.msra.mxu0 %v1908
    %1933 = vmatmul.bf16.gmra.mxu0 %v1917
    %v1934 = vpop.f32.mrf.mxu0
    %v1935 = vadd.f32 0.0, %v1934
    %v1936 = vpop.f32.mrf.mxu0
    %v1937 = vadd.f32 0.0, %v1936
    %1938 = vmatmul.bf16.gmra.mxu0 %v1920
    %v1939 = vpop.f32.mrf.mxu0
    %v1940 = vadd.f32 0.0, %v1939
    %v1941 = vpop.f32.mrf.mxu0
    %v1942 = vadd.f32 0.0, %v1941
    %1943 = vmatmul.bf16.gmra.mxu0 %v1923
    %v1944 = vpop.f32.mrf.mxu0
    %v1945 = vadd.f32 0.0, %v1944
    %v1946 = vpop.f32.mrf.mxu0
    %1947 = vdwg.mxu0
    %v1948 = vadd.f32 %v1865, %v1935
    %v1949 = vadd.f32 %v1867, %v1937
    %v1950 = vadd.f32 %v1870, %v1940
    %v1951 = vadd.f32 %v1872, %v1942
    %v1952 = vadd.f32 %v1875, %v1945
    %1953 = vst.msk [vmem:[#allocation2] sm:$0xff] %vm394, 0.0
    %1954 = vst.msk [vmem:[#allocation2 + $0x8] sm:$0xff] %vm394, 0.0
    %1955 = vst.msk [vmem:[#allocation2 + $0x10] sm:$0xf] %vm397, 0.0
    %1956 = vmatpush.msra.mxu0 0.0
    %1957 = vmatpush.msra.mxu0 0.0
    %1958 = vmatpush.msra.mxu0 0.0
    %1959 = vmatpush.msra.mxu0 0.0
    %1960 = vmatpush.msra.mxu0 0.0
    %1961 = vmatpush.msra.mxu0 0.0
    %1962 = vmatpush.msra.mxu0 0.0
    %1963 = vmatpush.msra.mxu0 0.0
    %1964 = vmatpush.msra.mxu0 0.0
    %1965 = vmatpush.msra.mxu0 0.0
    %1966 = vmatpush.msra.mxu0 0.0
    %1967 = vmatpush.msra.mxu0 0.0
    %1968 = vmatpush.msra.mxu0 0.0
    %1969 = vmatpush.msra.mxu0 0.0
    %1970 = vmatpush.msra.mxu0 %v1949
    %1971 = vmatpush.msra.mxu0 %v1948
    %1972 = vmatmul.f32.gmra.mxu0 %v408
    %v1973 = vpop.f32.mrf.mxu0
    %v1974 = vadd.f32 0.0, %v1973
    %1975 = vdwg.mxu0
    %v1976 = vmax.f32 %v1974, 0.0
    %1977 = vst.msk [vmem:[#allocation2 + $0x1] sm:$0xff] %vm394, %v1976
    %v1981 = vrot.slane %v1950, 2
    %v1982 = vrot.slane %v1951, 2
    %v1983 = vsel %vm435, %v1981, %v1982
    %v1984 = vrot.slane %v1952, 2
    %v1985 = vsel %vm435, %v1982, %v1984
    %1988 = vmatpush.msra.mxu0 0.0
    %1989 = vmatpush.msra.mxu0 0.0
    %1990 = vmatpush.msra.mxu0 0.0
    %1991 = vmatpush.msra.mxu0 0.0
    %1992 = vmatpush.msra.mxu0 0.0
    %1993 = vmatpush.msra.mxu0 0.0
    %1994 = vmatpush.msra.mxu0 0.0
    %1995 = vmatpush.msra.mxu0 0.0
    %1996 = vmatpush.msra.mxu0 0.0
    %1997 = vmatpush.msra.mxu0 0.0
    %1998 = vmatpush.msra.mxu0 0.0
    %1999 = vmatpush.msra.mxu0 0.0
    %2000 = vmatpush.msra.mxu0 0.0
    %2001 = vmatpush.msra.mxu0 0.0
    %2002 = vmatpush.msra.mxu0 %v1985
    %2003 = vmatpush.msra.mxu0 %v1983
    %2004 = vmatmul.f32.gmra.mxu0 %v408
    %v2005 = vpop.f32.mrf.mxu0
    %v2006 = vadd.f32 0.0, %v2005
    %2007 = vdwg.mxu0
    %v2008 = vmax.f32 %v2006, 0.0
    %2009 = vst.msk [vmem:[#allocation2 + $0xb] sm:$0xff] %vm394, %v2008
    %v2010 = vld [vmem:[#allocation2] sm:$0xff]
    %v2011 = vld [vmem:[#allocation2 + $0x8] sm:$0xff]
    %v2012 = vld [vmem:[#allocation2 + $0x10] sm:$0xf]
    %v2013 = vpack.c.bf16 %v2010, %v2010
    %v2014 = vpack.c.bf16 %v2011, %v2011
    %v2015 = vpack.c.bf16 %v2012, %v2012
    %v2016 = vld [vmem:[%s11] sm:$0xf]
    %v2017 = vld [vmem:[%s11 + $0x4] sm:$0xf]
    %v2018 = vld [vmem:[%s11 + $0x8] sm:$0xf]
    %v2019 = vld [vmem:[%s11 + $0xc] sm:$0xf]
    %v2020 = vld [vmem:[%s11 + $0x10] sm:$0xf]
    %v2021 = vld [vmem:[%s11 + $0x14] sm:$0xf]
    %v2022 = vld [vmem:[%s11 + $0x18] sm:$0xf]
    %v2023 = vld [vmem:[%s11 + $0x1c] sm:$0xf]
    %s2024 = scalar_lea.vmem %s11, 32
    %v2025 = vld [vmem:[%s2024] sm:$0xf]
    %v2026 = vld [vmem:[%s2024 + $0x4] sm:$0xf]
    %v2027 = vld [vmem:[%s2024 + $0x8] sm:$0xf]
    %v2028 = vld [vmem:[%s2024 + $0xc] sm:$0xf]
    %v2029 = vld [vmem:[%s2024 + $0x10] sm:$0xf]
    %v2030 = vld [vmem:[%s2024 + $0x14] sm:$0xf]
    %v2031 = vld [vmem:[%s2024 + $0x18] sm:$0xf]
    %v2032 = vld [vmem:[%s2024 + $0x1c] sm:$0xf]
    %v2036 = vunpack.c.l.b16 %v2013
    %v2037 = vunpack.c.l.b16 %v2014
    %v2038 = vunpack.c.l.b16 %v2015
    %v2039 = vpack.c.b16 %v2037, %v2036
    %v2040 = vpack.c.b16 %v2038, %v2038
    %v2042 = vshrl.u32 %v2039, 16
    %v2044 = vshll.u32 %v2039, 16
    %v2046 = vrot.slane %v2044, 1
    %v2047 = vor.u32 %v2042, %v2046
    %v2049 = vshll.u32 %v2040, 16
    %v2051 = vrot.slane %v2049, 1
    %v2052 = vsel %vm120, %v2047, %v2051
    %v2053 = vshrl.u32 %v2040, 16
    %v2055 = vor.u32 %v2053, %v2051
    %v2064 = vunpack.c.l.b16 %v2025
    %v2065 = vunpack.c.l.b16 %v2026
    %v2066 = vunpack.c.l.b16 %v2027
    %v2067 = vunpack.c.l.b16 %v2028
    %v2068 = vunpack.c.l.b16 %v2029
    %v2069 = vunpack.c.l.b16 %v2030
    %v2070 = vunpack.c.l.b16 %v2031
    %v2071 = vunpack.c.l.b16 %v2032
    %v2072 = vpack.c.b16 %v2065, %v2064
    %v2073 = vpack.c.b16 %v2067, %v2066
    %v2074 = vpack.c.b16 %v2069, %v2068
    %v2075 = vpack.c.b16 %v2071, %v2070
    %v2081 = vsel %vm394, %v2052, 0
    %v2084 = vsel %vm394, %v2055, 0
    %2086 = vmatpush.bf16.msra.mxu0 0
    %2087 = vmatpush.bf16.msra.mxu0 0
    %2088 = vmatpush.bf16.msra.mxu0 0
    %2089 = vmatpush.bf16.msra.mxu0 0
    %2090 = vmatpush.bf16.msra.mxu0 %v2075
    %2091 = vmatpush.bf16.msra.mxu0 %v2074
    %2092 = vmatpush.bf16.msra.mxu0 %v2073
    %2093 = vmatpush.bf16.msra.mxu0 %v2072
    %2094 = vmatmul.bf16.gmra.mxu0 %v2081
    %v2095 = vpop.f32.mrf.mxu0
    %v2096 = vadd.f32 0.0, %v2095
    %v2097 = vpop.f32.mrf.mxu0
    %v2098 = vadd.f32 0.0, %v2097
    %2099 = vmatmul.bf16.gmra.mxu0 %v2084
    %v2100 = vpop.f32.mrf.mxu0
    %v2101 = vadd.f32 0.0, %v2100
    %v2102 = vpop.f32.mrf.mxu0
    %2103 = vdwg.mxu0
    %v2112 = vunpack.c.l.b16 %v2016
    %v2113 = vunpack.c.l.b16 %v2017
    %v2114 = vunpack.c.l.b16 %v2018
    %v2115 = vunpack.c.l.b16 %v2019
    %v2116 = vunpack.c.l.b16 %v2020
    %v2117 = vunpack.c.l.b16 %v2021
    %v2118 = vunpack.c.l.b16 %v2022
    %v2119 = vunpack.c.l.b16 %v2023
    %v2120 = vpack.c.b16 %v2113, %v2112
    %v2121 = vpack.c.b16 %v2115, %v2114
    %v2122 = vpack.c.b16 %v2117, %v2116
    %v2123 = vpack.c.b16 %v2119, %v2118
    %v2128 = vsel %vm394, %v2039, 0
    %v2130 = vsel %vm394, %v2040, 0
    %2132 = vmatpush.bf16.msra.mxu0 0
    %2133 = vmatpush.bf16.msra.mxu0 0
    %2134 = vmatpush.bf16.msra.mxu0 0
    %2135 = vmatpush.bf16.msra.mxu0 0
    %2136 = vmatpush.bf16.msra.mxu0 %v2123
    %2137 = vmatpush.bf16.msra.mxu0 %v2122
    %2138 = vmatpush.bf16.msra.mxu0 %v2121
    %2139 = vmatpush.bf16.msra.mxu0 %v2120
    %2140 = vmatmul.bf16.gmra.mxu0 %v2128
    %v2141 = vpop.f32.mrf.mxu0
    %v2142 = vadd.f32 %v2096, %v2141
    %v2143 = vpop.f32.mrf.mxu0
    %v2144 = vadd.f32 %v2098, %v2143
    %2145 = vmatmul.bf16.gmra.mxu0 %v2130
    %v2146 = vpop.f32.mrf.mxu0
    %v2147 = vadd.f32 %v2101, %v2146
    %v2148 = vpop.f32.mrf.mxu0
    %2149 = vdwg.mxu0
    %s2150 = scalar_lea.vmem %s11, 64
    %v2151 = vld [vmem:[%s2150] sm:$0xf]
    %v2152 = vld [vmem:[%s2150 + $0x4] sm:$0xf]
    %v2153 = vld [vmem:[%s2150 + $0x8] sm:$0xf]
    %v2154 = vld [vmem:[%s2150 + $0xc] sm:$0xf]
    %v2155 = vld [vmem:[%s2150 + $0x10] sm:$0xf]
    %v2156 = vld [vmem:[%s2150 + $0x14] sm:$0xf]
    %v2157 = vld [vmem:[%s2150 + $0x18] sm:$0xf]
    %v2158 = vld [vmem:[%s2150 + $0x1c] sm:$0xf]
    %v2159 = vrot.slane %v2039, 1
    %v2160 = vrot.slane %v2040, 1
    %v2161 = vsel %vm309, %v2159, %v2160
    %v2170 = vunpack.c.l.b16 %v2151
    %v2171 = vunpack.c.l.b16 %v2152
    %v2172 = vunpack.c.l.b16 %v2153
    %v2173 = vunpack.c.l.b16 %v2154
    %v2174 = vunpack.c.l.b16 %v2155
    %v2175 = vunpack.c.l.b16 %v2156
    %v2176 = vunpack.c.l.b16 %v2157
    %v2177 = vunpack.c.l.b16 %v2158
    %v2178 = vpack.c.b16 %v2171, %v2170
    %v2179 = vpack.c.b16 %v2173, %v2172
    %v2180 = vpack.c.b16 %v2175, %v2174
    %v2181 = vpack.c.b16 %v2177, %v2176
    %v2187 = vsel %vm394, %v2161, 0
    %v2190 = vsel %vm394, %v2160, 0
    %2192 = vmatpush.bf16.msra.mxu0 0
    %2193 = vmatpush.bf16.msra.mxu0 0
    %2194 = vmatpush.bf16.msra.mxu0 0
    %2195 = vmatpush.bf16.msra.mxu0 0
    %2196 = vmatpush.bf16.msra.mxu0 %v2181
    %2197 = vmatpush.bf16.msra.mxu0 %v2180
    %2198 = vmatpush.bf16.msra.mxu0 %v2179
    %2199 = vmatpush.bf16.msra.mxu0 %v2178
    %2200 = vmatmul.bf16.gmra.mxu0 %v2187
    %v2201 = vpop.f32.mrf.mxu0
    %v2202 = vadd.f32 0.0, %v2201
    %v2203 = vpop.f32.mrf.mxu0
    %v2204 = vadd.f32 0.0, %v2203
    %2205 = vmatmul.bf16.gmra.mxu0 %v2190
    %v2206 = vpop.f32.mrf.mxu0
    %v2207 = vadd.f32 0.0, %v2206
    %v2208 = vpop.f32.mrf.mxu0
    %2209 = vdwg.mxu0
    %v2210 = vadd.f32 %v2142, %v2202
    %v2211 = vadd.f32 %v2144, %v2204
    %v2212 = vadd.f32 %v2147, %v2207
    %2213 = vst.msk [vmem:[#allocation3] sm:$0xff] %vm394, 0.0
    %2214 = vst.msk [vmem:[#allocation3 + $0x8] sm:$0xff] %vm394, 0.0
    %2215 = vst.msk [vmem:[#allocation3 + $0x10] sm:$0xf] %vm397, 0.0
    %v2216 = vmax.f32 %v2210, 0.0
    %2217 = vst.msk [vmem:[#allocation3 + $0x1] sm:$0xff] %vm394, %v2216
    %v2218 = vmax.f32 %v2211, 0.0
    %v2219 = vmax.f32 %v2212, 0.0
    %2220 = vst.msk [vmem:[#allocation3 + $0x9] sm:$0xfc] %vm675, %v2218
    %2221 = vst.msk [vmem:[#allocation3 + $0x11] sm:$0x3] %vm677, %v2219
    %v2222 = vld [vmem:[#allocation3] sm:$0xff]
    %v2223 = vld [vmem:[#allocation3 + $0x8] sm:$0xff]
    %v2224 = vld [vmem:[#allocation3 + $0x10] sm:$0xf]
    %v2225 = vpack.c.bf16 %v2222, %v2222
    %v2226 = vpack.c.bf16 %v2223, %v2223
    %v2227 = vpack.c.bf16 %v2224, %v2224
    %v2228 = vld [vmem:[%s12] sm:$0xf]
    %v2229 = vld [vmem:[%s12 + $0x4] sm:$0xf]
    %v2230 = vld [vmem:[%s12 + $0x8] sm:$0xf]
    %v2231 = vld [vmem:[%s12 + $0xc] sm:$0xf]
    %v2232 = vld [vmem:[%s12 + $0x10] sm:$0xf]
    %v2233 = vld [vmem:[%s12 + $0x14] sm:$0xf]
    %v2234 = vld [vmem:[%s12 + $0x18] sm:$0xf]
    %v2235 = vld [vmem:[%s12 + $0x1c] sm:$0xf]
    %s2236 = scalar_lea.vmem %s12, 32
    %v2237 = vld [vmem:[%s2236] sm:$0xf]
    %v2238 = vld [vmem:[%s2236 + $0x4] sm:$0xf]
    %v2239 = vld [vmem:[%s2236 + $0x8] sm:$0xf]
    %v2240 = vld [vmem:[%s2236 + $0xc] sm:$0xf]
    %v2241 = vld [vmem:[%s2236 + $0x10] sm:$0xf]
    %v2242 = vld [vmem:[%s2236 + $0x14] sm:$0xf]
    %v2243 = vld [vmem:[%s2236 + $0x18] sm:$0xf]
    %v2244 = vld [vmem:[%s2236 + $0x1c] sm:$0xf]
    %v2248 = vunpack.c.l.b16 %v2225
    %v2249 = vunpack.c.l.b16 %v2226
    %v2250 = vunpack.c.l.b16 %v2227
    %v2251 = vpack.c.b16 %v2249, %v2248
    %v2252 = vpack.c.b16 %v2250, %v2250
    %v2254 = vshrl.u32 %v2251, 16
    %v2256 = vshll.u32 %v2251, 16
    %v2258 = vrot.slane %v2256, 1
    %v2259 = vor.u32 %v2254, %v2258
    %v2261 = vshll.u32 %v2252, 16
    %v2263 = vrot.slane %v2261, 1
    %v2264 = vsel %vm120, %v2259, %v2263
    %v2265 = vshrl.u32 %v2252, 16
    %v2267 = vor.u32 %v2265, %v2263
    %v2276 = vunpack.c.l.b16 %v2237
    %v2277 = vunpack.c.l.b16 %v2238
    %v2278 = vunpack.c.l.b16 %v2239
    %v2279 = vunpack.c.l.b16 %v2240
    %v2280 = vunpack.c.l.b16 %v2241
    %v2281 = vunpack.c.l.b16 %v2242
    %v2282 = vunpack.c.l.b16 %v2243
    %v2283 = vunpack.c.l.b16 %v2244
    %v2284 = vpack.c.b16 %v2277, %v2276
    %v2285 = vpack.c.b16 %v2279, %v2278
    %v2286 = vpack.c.b16 %v2281, %v2280
    %v2287 = vpack.c.b16 %v2283, %v2282
    %v2293 = vsel %vm394, %v2264, 0
    %v2296 = vsel %vm394, %v2267, 0
    %2298 = vmatpush.bf16.msra.mxu0 0
    %2299 = vmatpush.bf16.msra.mxu0 0
    %2300 = vmatpush.bf16.msra.mxu0 0
    %2301 = vmatpush.bf16.msra.mxu0 0
    %2302 = vmatpush.bf16.msra.mxu0 %v2287
    %2303 = vmatpush.bf16.msra.mxu0 %v2286
    %2304 = vmatpush.bf16.msra.mxu0 %v2285
    %2305 = vmatpush.bf16.msra.mxu0 %v2284
    %2306 = vmatmul.bf16.gmra.mxu0 %v2293
    %v2307 = vpop.f32.mrf.mxu0
    %v2308 = vadd.f32 0.0, %v2307
    %v2309 = vpop.f32.mrf.mxu0
    %v2310 = vadd.f32 0.0, %v2309
    %2311 = vmatmul.bf16.gmra.mxu0 %v2296
    %v2312 = vpop.f32.mrf.mxu0
    %v2313 = vadd.f32 0.0, %v2312
    %v2314 = vpop.f32.mrf.mxu0
    %2315 = vdwg.mxu0
    %v2324 = vunpack.c.l.b16 %v2228
    %v2325 = vunpack.c.l.b16 %v2229
    %v2326 = vunpack.c.l.b16 %v2230
    %v2327 = vunpack.c.l.b16 %v2231
    %v2328 = vunpack.c.l.b16 %v2232
    %v2329 = vunpack.c.l.b16 %v2233
    %v2330 = vunpack.c.l.b16 %v2234
    %v2331 = vunpack.c.l.b16 %v2235
    %v2332 = vpack.c.b16 %v2325, %v2324
    %v2333 = vpack.c.b16 %v2327, %v2326
    %v2334 = vpack.c.b16 %v2329, %v2328
    %v2335 = vpack.c.b16 %v2331, %v2330
    %v2340 = vsel %vm394, %v2251, 0
    %v2342 = vsel %vm394, %v2252, 0
    %2344 = vmatpush.bf16.msra.mxu0 0
    %2345 = vmatpush.bf16.msra.mxu0 0
    %2346 = vmatpush.bf16.msra.mxu0 0
    %2347 = vmatpush.bf16.msra.mxu0 0
    %2348 = vmatpush.bf16.msra.mxu0 %v2335
    %2349 = vmatpush.bf16.msra.mxu0 %v2334
    %2350 = vmatpush.bf16.msra.mxu0 %v2333
    %2351 = vmatpush.bf16.msra.mxu0 %v2332
    %2352 = vmatmul.bf16.gmra.mxu0 %v2340
    %v2353 = vpop.f32.mrf.mxu0
    %v2354 = vadd.f32 %v2308, %v2353
    %v2355 = vpop.f32.mrf.mxu0
    %v2356 = vadd.f32 %v2310, %v2355
    %2357 = vmatmul.bf16.gmra.mxu0 %v2342
    %v2358 = vpop.f32.mrf.mxu0
    %v2359 = vadd.f32 %v2313, %v2358
    %v2360 = vpop.f32.mrf.mxu0
    %2361 = vdwg.mxu0
    %s2362 = scalar_lea.vmem %s12, 64
    %v2363 = vld [vmem:[%s2362] sm:$0xf]
    %v2364 = vld [vmem:[%s2362 + $0x4] sm:$0xf]
    %v2365 = vld [vmem:[%s2362 + $0x8] sm:$0xf]
    %v2366 = vld [vmem:[%s2362 + $0xc] sm:$0xf]
    %v2367 = vld [vmem:[%s2362 + $0x10] sm:$0xf]
    %v2368 = vld [vmem:[%s2362 + $0x14] sm:$0xf]
    %v2369 = vld [vmem:[%s2362 + $0x18] sm:$0xf]
    %v2370 = vld [vmem:[%s2362 + $0x1c] sm:$0xf]
    %v2371 = vrot.slane %v2251, 1
    %v2372 = vrot.slane %v2252, 1
    %v2373 = vsel %vm309, %v2371, %v2372
    %v2382 = vunpack.c.l.b16 %v2363
    %v2383 = vunpack.c.l.b16 %v2364
    %v2384 = vunpack.c.l.b16 %v2365
    %v2385 = vunpack.c.l.b16 %v2366
    %v2386 = vunpack.c.l.b16 %v2367
    %v2387 = vunpack.c.l.b16 %v2368
    %v2388 = vunpack.c.l.b16 %v2369
    %v2389 = vunpack.c.l.b16 %v2370
    %v2390 = vpack.c.b16 %v2383, %v2382
    %v2391 = vpack.c.b16 %v2385, %v2384
    %v2392 = vpack.c.b16 %v2387, %v2386
    %v2393 = vpack.c.b16 %v2389, %v2388
    %v2399 = vsel %vm394, %v2373, 0
    %v2402 = vsel %vm394, %v2372, 0
    %2404 = vmatpush.bf16.msra.mxu0 0
    %2405 = vmatpush.bf16.msra.mxu0 0
    %2406 = vmatpush.bf16.msra.mxu0 0
    %2407 = vmatpush.bf16.msra.mxu0 0
    %2408 = vmatpush.bf16.msra.mxu0 %v2393
    %2409 = vmatpush.bf16.msra.mxu0 %v2392
    %2410 = vmatpush.bf16.msra.mxu0 %v2391
    %2411 = vmatpush.bf16.msra.mxu0 %v2390
    %2412 = vmatmul.bf16.gmra.mxu0 %v2399
    %v2413 = vpop.f32.mrf.mxu0
    %v2414 = vadd.f32 0.0, %v2413
    %v2415 = vpop.f32.mrf.mxu0
    %v2416 = vadd.f32 0.0, %v2415
    %2417 = vmatmul.bf16.gmra.mxu0 %v2402
    %v2418 = vpop.f32.mrf.mxu0
    %v2419 = vadd.f32 0.0, %v2418
    %v2420 = vpop.f32.mrf.mxu0
    %2421 = vdwg.mxu0
    %v2422 = vadd.f32 %v2354, %v2414
    %v2423 = vadd.f32 %v2356, %v2416
    %v2424 = vadd.f32 %v2359, %v2419
    %2425 = vst.msk [vmem:[#allocation2] sm:$0xff] %vm394, 0.0
    %2426 = vst.msk [vmem:[#allocation2 + $0x8] sm:$0xff] %vm394, 0.0
    %2427 = vst.msk [vmem:[#allocation2 + $0x10] sm:$0xf] %vm397, 0.0
    %2428 = vmatpush.msra.mxu0 0.0
    %2429 = vmatpush.msra.mxu0 0.0
    %2430 = vmatpush.msra.mxu0 0.0
    %2431 = vmatpush.msra.mxu0 0.0
    %2432 = vmatpush.msra.mxu0 0.0
    %2433 = vmatpush.msra.mxu0 0.0
    %2434 = vmatpush.msra.mxu0 0.0
    %2435 = vmatpush.msra.mxu0 0.0
    %2436 = vmatpush.msra.mxu0 0.0
    %2437 = vmatpush.msra.mxu0 0.0
    %2438 = vmatpush.msra.mxu0 0.0
    %2439 = vmatpush.msra.mxu0 0.0
    %2440 = vmatpush.msra.mxu0 0.0
    %2441 = vmatpush.msra.mxu0 0.0
    %2442 = vmatpush.msra.mxu0 0.0
    %2443 = vmatpush.msra.mxu0 %v2422
    %2444 = vmatmul.f32.gmra.mxu0 %v886
    %v2445 = vpop.f32.mrf.mxu0
    %v2446 = vadd.f32 0.0, %v2445
    %2447 = vdwg.mxu0
    %v2448 = vmax.f32 %v2446, 0.0
    %2449 = vst.msk [vmem:[#allocation2 + $0x1] sm:$0xf] %vm397, %v2448
    %v2452 = vrot.slane %v2423, 2
    %v2453 = vrot.slane %v2424, 2
    %v2454 = vsel %vm435, %v2452, %v2453
    %2456 = vmatpush.msra.mxu0 0.0
    %2457 = vmatpush.msra.mxu0 0.0
    %2458 = vmatpush.msra.mxu0 0.0
    %2459 = vmatpush.msra.mxu0 0.0
    %2460 = vmatpush.msra.mxu0 0.0
    %2461 = vmatpush.msra.mxu0 0.0
    %2462 = vmatpush.msra.mxu0 0.0
    %2463 = vmatpush.msra.mxu0 0.0
    %2464 = vmatpush.msra.mxu0 0.0
    %2465 = vmatpush.msra.mxu0 0.0
    %2466 = vmatpush.msra.mxu0 0.0
    %2467 = vmatpush.msra.mxu0 0.0
    %2468 = vmatpush.msra.mxu0 0.0
    %2469 = vmatpush.msra.mxu0 0.0
    %2470 = vmatpush.msra.mxu0 0.0
    %2471 = vmatpush.msra.mxu0 %v2454
    %2472 = vmatmul.f32.gmra.mxu0 %v886
    %v2473 = vpop.f32.mrf.mxu0
    %v2474 = vadd.f32 0.0, %v2473
    %2475 = vdwg.mxu0
    %v2476 = vmax.f32 %v2474, 0.0
    %2477 = vst.msk [vmem:[#allocation2 + $0x7] sm:$0xf] %vm397, %v2476
    %v2478 = vld [vmem:[#allocation2] sm:$0xff]
    %v2479 = vld [vmem:[#allocation2 + $0x8] sm:$0xff]
    %v2480 = vpack.c.bf16 %v2478, %v2478
    %v2481 = vpack.c.bf16 %v2479, %v2479
    %v2482 = vld [vmem:[%s13] sm:$0xf]
    %v2483 = vld [vmem:[%s13 + $0x4] sm:$0xf]
    %v2484 = vld [vmem:[%s13 + $0x8] sm:$0xf]
    %v2485 = vld [vmem:[%s13 + $0xc] sm:$0xf]
    %v2486 = vld [vmem:[%s13 + $0x10] sm:$0xf]
    %v2487 = vld [vmem:[%s13 + $0x14] sm:$0xf]
    %v2488 = vld [vmem:[%s13 + $0x18] sm:$0xf]
    %v2489 = vld [vmem:[%s13 + $0x1c] sm:$0xf]
    %s2490 = scalar_lea.vmem %s13, 32
    %v2491 = vld [vmem:[%s2490] sm:$0xf]
    %v2492 = vld [vmem:[%s2490 + $0x4] sm:$0xf]
    %v2493 = vld [vmem:[%s2490 + $0x8] sm:$0xf]
    %v2494 = vld [vmem:[%s2490 + $0xc] sm:$0xf]
    %v2495 = vld [vmem:[%s2490 + $0x10] sm:$0xf]
    %v2496 = vld [vmem:[%s2490 + $0x14] sm:$0xf]
    %v2497 = vld [vmem:[%s2490 + $0x18] sm:$0xf]
    %v2498 = vld [vmem:[%s2490 + $0x1c] sm:$0xf]
    %v2501 = vunpack.c.l.b16 %v2480
    %v2502 = vunpack.c.l.b16 %v2481
    %v2503 = vpack.c.b16 %v2502, %v2501
    %v2505 = vshrl.u32 %v2503, 16
    %v2507 = vshll.u32 %v2503, 16
    %v2509 = vrot.slane %v2507, 1
    %v2510 = vor.u32 %v2505, %v2509
    %v2519 = vunpack.c.l.b16 %v2491
    %v2520 = vunpack.c.l.b16 %v2492
    %v2521 = vunpack.c.l.b16 %v2493
    %v2522 = vunpack.c.l.b16 %v2494
    %v2523 = vunpack.c.l.b16 %v2495
    %v2524 = vunpack.c.l.b16 %v2496
    %v2525 = vunpack.c.l.b16 %v2497
    %v2526 = vunpack.c.l.b16 %v2498
    %v2527 = vpack.c.b16 %v2520, %v2519
    %v2528 = vpack.c.b16 %v2522, %v2521
    %v2529 = vpack.c.b16 %v2524, %v2523
    %v2530 = vpack.c.b16 %v2526, %v2525
    %v2536 = vsel %vm394, %v2510, 0
    %2538 = vmatpush.bf16.msra.mxu0 0
    %2539 = vmatpush.bf16.msra.mxu0 0
    %2540 = vmatpush.bf16.msra.mxu0 0
    %2541 = vmatpush.bf16.msra.mxu0 0
    %2542 = vmatpush.bf16.msra.mxu0 %v2530
    %2543 = vmatpush.bf16.msra.mxu0 %v2529
    %2544 = vmatpush.bf16.msra.mxu0 %v2528
    %2545 = vmatpush.bf16.msra.mxu0 %v2527
    %2546 = vmatmul.bf16.gmra.mxu0 %v2536
    %v2547 = vpop.f32.mrf.mxu0
    %v2548 = vadd.f32 0.0, %v2547
    %v2549 = vpop.f32.mrf.mxu0
    %v2550 = vadd.f32 0.0, %v2549
    %2551 = vdwg.mxu0
    %v2560 = vunpack.c.l.b16 %v2482
    %v2561 = vunpack.c.l.b16 %v2483
    %v2562 = vunpack.c.l.b16 %v2484
    %v2563 = vunpack.c.l.b16 %v2485
    %v2564 = vunpack.c.l.b16 %v2486
    %v2565 = vunpack.c.l.b16 %v2487
    %v2566 = vunpack.c.l.b16 %v2488
    %v2567 = vunpack.c.l.b16 %v2489
    %v2568 = vpack.c.b16 %v2561, %v2560
    %v2569 = vpack.c.b16 %v2563, %v2562
    %v2570 = vpack.c.b16 %v2565, %v2564
    %v2571 = vpack.c.b16 %v2567, %v2566
    %v2576 = vsel %vm394, %v2503, 0
    %2578 = vmatpush.bf16.msra.mxu0 0
    %2579 = vmatpush.bf16.msra.mxu0 0
    %2580 = vmatpush.bf16.msra.mxu0 0
    %2581 = vmatpush.bf16.msra.mxu0 0
    %2582 = vmatpush.bf16.msra.mxu0 %v2571
    %2583 = vmatpush.bf16.msra.mxu0 %v2570
    %2584 = vmatpush.bf16.msra.mxu0 %v2569
    %2585 = vmatpush.bf16.msra.mxu0 %v2568
    %2586 = vmatmul.bf16.gmra.mxu0 %v2576
    %v2587 = vpop.f32.mrf.mxu0
    %v2588 = vadd.f32 %v2548, %v2587
    %v2589 = vpop.f32.mrf.mxu0
    %v2590 = vadd.f32 %v2550, %v2589
    %2591 = vdwg.mxu0
    %s2592 = scalar_lea.vmem %s13, 64
    %v2593 = vld [vmem:[%s2592] sm:$0xf]
    %v2594 = vld [vmem:[%s2592 + $0x4] sm:$0xf]
    %v2595 = vld [vmem:[%s2592 + $0x8] sm:$0xf]
    %v2596 = vld [vmem:[%s2592 + $0xc] sm:$0xf]
    %v2597 = vld [vmem:[%s2592 + $0x10] sm:$0xf]
    %v2598 = vld [vmem:[%s2592 + $0x14] sm:$0xf]
    %v2599 = vld [vmem:[%s2592 + $0x18] sm:$0xf]
    %v2600 = vld [vmem:[%s2592 + $0x1c] sm:$0xf]
    %v2601 = vrot.slane %v2503, 1
    %v2610 = vunpack.c.l.b16 %v2593
    %v2611 = vunpack.c.l.b16 %v2594
    %v2612 = vunpack.c.l.b16 %v2595
    %v2613 = vunpack.c.l.b16 %v2596
    %v2614 = vunpack.c.l.b16 %v2597
    %v2615 = vunpack.c.l.b16 %v2598
    %v2616 = vunpack.c.l.b16 %v2599
    %v2617 = vunpack.c.l.b16 %v2600
    %v2618 = vpack.c.b16 %v2611, %v2610
    %v2619 = vpack.c.b16 %v2613, %v2612
    %v2620 = vpack.c.b16 %v2615, %v2614
    %v2621 = vpack.c.b16 %v2617, %v2616
    %v2627 = vsel %vm394, %v2601, 0
    %2629 = vmatpush.bf16.msra.mxu0 0
    %2630 = vmatpush.bf16.msra.mxu0 0
    %2631 = vmatpush.bf16.msra.mxu0 0
    %2632 = vmatpush.bf16.msra.mxu0 0
    %2633 = vmatpush.bf16.msra.mxu0 %v2621
    %2634 = vmatpush.bf16.msra.mxu0 %v2620
    %2635 = vmatpush.bf16.msra.mxu0 %v2619
    %2636 = vmatpush.bf16.msra.mxu0 %v2618
    %2637 = vmatmul.bf16.gmra.mxu0 %v2627
    %v2638 = vpop.f32.mrf.mxu0
    %v2639 = vadd.f32 0.0, %v2638
    %v2640 = vpop.f32.mrf.mxu0
    %v2641 = vadd.f32 0.0, %v2640
    %2642 = vdwg.mxu0
    %v2643 = vadd.f32 %v2588, %v2639
    %v2644 = vadd.f32 %v2590, %v2641
    %2645 = vst.msk [vmem:[#allocation3] sm:$0xff] %vm394, 0.0
    %2646 = vst.msk [vmem:[#allocation3 + $0x8] sm:$0xff] %vm394, 0.0
    %2647 = vst.msk [vmem:[#allocation3 + $0x10] sm:$0xf] %vm397, 0.0
    %v2648 = vmax.f32 %v2643, 0.0
    %2649 = vst.msk [vmem:[#allocation3 + $0x1] sm:$0xf] %vm397, %v2648
    %v2650 = vmax.f32 %v2644, 0.0
    %2651 = vst.msk [vmem:[#allocation3 + $0x1] sm:$0xc0] %vm1111, %v2648
    %2652 = vst.msk [vmem:[#allocation3 + $0x9] sm:$0x3] %vm677, %v2650
    %v2653 = vld [vmem:[#allocation3] sm:$0xff]
    %v2654 = vld [vmem:[#allocation3 + $0x8] sm:$0xff]
    %v2655 = vpack.c.bf16 %v2653, %v2653
    %v2656 = vpack.c.bf16 %v2654, %v2654
    %v2657 = vld [vmem:[%s14] sm:$0xf]
    %v2658 = vld [vmem:[%s14 + $0x4] sm:$0xf]
    %v2659 = vld [vmem:[%s14 + $0x8] sm:$0xf]
    %v2660 = vld [vmem:[%s14 + $0xc] sm:$0xf]
    %v2661 = vld [vmem:[%s14 + $0x10] sm:$0xf]
    %v2662 = vld [vmem:[%s14 + $0x14] sm:$0xf]
    %v2663 = vld [vmem:[%s14 + $0x18] sm:$0xf]
    %v2664 = vld [vmem:[%s14 + $0x1c] sm:$0xf]
    %s2665 = scalar_lea.vmem %s14, 32
    %v2666 = vld [vmem:[%s2665] sm:$0xf]
    %v2667 = vld [vmem:[%s2665 + $0x4] sm:$0xf]
    %v2668 = vld [vmem:[%s2665 + $0x8] sm:$0xf]
    %v2669 = vld [vmem:[%s2665 + $0xc] sm:$0xf]
    %v2670 = vld [vmem:[%s2665 + $0x10] sm:$0xf]
    %v2671 = vld [vmem:[%s2665 + $0x14] sm:$0xf]
    %v2672 = vld [vmem:[%s2665 + $0x18] sm:$0xf]
    %v2673 = vld [vmem:[%s2665 + $0x1c] sm:$0xf]
    %v2676 = vunpack.c.l.b16 %v2655
    %v2677 = vunpack.c.l.b16 %v2656
    %v2678 = vpack.c.b16 %v2677, %v2676
    %v2680 = vshrl.u32 %v2678, 16
    %v2682 = vshll.u32 %v2678, 16
    %v2684 = vrot.slane %v2682, 1
    %v2685 = vor.u32 %v2680, %v2684
    %v2694 = vunpack.c.l.b16 %v2666
    %v2695 = vunpack.c.l.b16 %v2667
    %v2696 = vunpack.c.l.b16 %v2668
    %v2697 = vunpack.c.l.b16 %v2669
    %v2698 = vunpack.c.l.b16 %v2670
    %v2699 = vunpack.c.l.b16 %v2671
    %v2700 = vunpack.c.l.b16 %v2672
    %v2701 = vunpack.c.l.b16 %v2673
    %v2702 = vpack.c.b16 %v2695, %v2694
    %v2703 = vpack.c.b16 %v2697, %v2696
    %v2704 = vpack.c.b16 %v2699, %v2698
    %v2705 = vpack.c.b16 %v2701, %v2700
    %v2711 = vsel %vm394, %v2685, 0
    %2713 = vmatpush.bf16.msra.mxu0 0
    %2714 = vmatpush.bf16.msra.mxu0 0
    %2715 = vmatpush.bf16.msra.mxu0 0
    %2716 = vmatpush.bf16.msra.mxu0 0
    %2717 = vmatpush.bf16.msra.mxu0 %v2705
    %2718 = vmatpush.bf16.msra.mxu0 %v2704
    %2719 = vmatpush.bf16.msra.mxu0 %v2703
    %2720 = vmatpush.bf16.msra.mxu0 %v2702
    %2721 = vmatmul.bf16.gmra.mxu0 %v2711
    %v2722 = vpop.f32.mrf.mxu0
    %v2723 = vadd.f32 0.0, %v2722
    %v2724 = vpop.f32.mrf.mxu0
    %v2725 = vadd.f32 0.0, %v2724
    %2726 = vdwg.mxu0
    %v2735 = vunpack.c.l.b16 %v2657
    %v2736 = vunpack.c.l.b16 %v2658
    %v2737 = vunpack.c.l.b16 %v2659
    %v2738 = vunpack.c.l.b16 %v2660
    %v2739 = vunpack.c.l.b16 %v2661
    %v2740 = vunpack.c.l.b16 %v2662
    %v2741 = vunpack.c.l.b16 %v2663
    %v2742 = vunpack.c.l.b16 %v2664
    %v2743 = vpack.c.b16 %v2736, %v2735
    %v2744 = vpack.c.b16 %v2738, %v2737
    %v2745 = vpack.c.b16 %v2740, %v2739
    %v2746 = vpack.c.b16 %v2742, %v2741
    %v2751 = vsel %vm394, %v2678, 0
    %2753 = vmatpush.bf16.msra.mxu0 0
    %2754 = vmatpush.bf16.msra.mxu0 0
    %2755 = vmatpush.bf16.msra.mxu0 0
    %2756 = vmatpush.bf16.msra.mxu0 0
    %2757 = vmatpush.bf16.msra.mxu0 %v2746
    %2758 = vmatpush.bf16.msra.mxu0 %v2745
    %2759 = vmatpush.bf16.msra.mxu0 %v2744
    %2760 = vmatpush.bf16.msra.mxu0 %v2743
    %2761 = vmatmul.bf16.gmra.mxu0 %v2751
    %v2762 = vpop.f32.mrf.mxu0
    %v2763 = vadd.f32 %v2723, %v2762
    %v2764 = vpop.f32.mrf.mxu0
    %v2765 = vadd.f32 %v2725, %v2764
    %2766 = vdwg.mxu0
    %s2767 = scalar_lea.vmem %s14, 64
    %v2768 = vld [vmem:[%s2767] sm:$0xf]
    %v2769 = vld [vmem:[%s2767 + $0x4] sm:$0xf]
    %v2770 = vld [vmem:[%s2767 + $0x8] sm:$0xf]
    %v2771 = vld [vmem:[%s2767 + $0xc] sm:$0xf]
    %v2772 = vld [vmem:[%s2767 + $0x10] sm:$0xf]
    %v2773 = vld [vmem:[%s2767 + $0x14] sm:$0xf]
    %v2774 = vld [vmem:[%s2767 + $0x18] sm:$0xf]
    %v2775 = vld [vmem:[%s2767 + $0x1c] sm:$0xf]
    %v2776 = vrot.slane %v2678, 1
    %v2785 = vunpack.c.l.b16 %v2768
    %v2786 = vunpack.c.l.b16 %v2769
    %v2787 = vunpack.c.l.b16 %v2770
    %v2788 = vunpack.c.l.b16 %v2771
    %v2789 = vunpack.c.l.b16 %v2772
    %v2790 = vunpack.c.l.b16 %v2773
    %v2791 = vunpack.c.l.b16 %v2774
    %v2792 = vunpack.c.l.b16 %v2775
    %v2793 = vpack.c.b16 %v2786, %v2785
    %v2794 = vpack.c.b16 %v2788, %v2787
    %v2795 = vpack.c.b16 %v2790, %v2789
    %v2796 = vpack.c.b16 %v2792, %v2791
    %v2802 = vsel %vm394, %v2776, 0
    %2804 = vmatpush.bf16.msra.mxu0 0
    %2805 = vmatpush.bf16.msra.mxu0 0
    %2806 = vmatpush.bf16.msra.mxu0 0
    %2807 = vmatpush.bf16.msra.mxu0 0
    %2808 = vmatpush.bf16.msra.mxu0 %v2796
    %2809 = vmatpush.bf16.msra.mxu0 %v2795
    %2810 = vmatpush.bf16.msra.mxu0 %v2794
    %2811 = vmatpush.bf16.msra.mxu0 %v2793
    %2812 = vmatmul.bf16.gmra.mxu0 %v2802
    %v2813 = vpop.f32.mrf.mxu0
    %v2814 = vadd.f32 0.0, %v2813
    %v2815 = vpop.f32.mrf.mxu0
    %v2816 = vadd.f32 0.0, %v2815
    %2817 = vdwg.mxu0
    %v2818 = vadd.f32 %v2763, %v2814
    %v2819 = vadd.f32 %v2765, %v2816
    %2820 = vst.msk [vmem:[#allocation2] sm:$0xff] %vm394, 0.0
    %2821 = vst.msk [vmem:[#allocation2 + $0x8] sm:$0xff] %vm394, 0.0
    %2822 = vst.msk [vmem:[#allocation2 + $0x10] sm:$0xf] %vm397, 0.0
    %v2824 = vsel %vm1287, %v2818, 0
    %2826 = vmatpush.msra.mxu0 0.0
    %2827 = vmatpush.msra.mxu0 0.0
    %2828 = vmatpush.msra.mxu0 0.0
    %2829 = vmatpush.msra.mxu0 0.0
    %2830 = vmatpush.msra.mxu0 0.0
    %2831 = vmatpush.msra.mxu0 0.0
    %2832 = vmatpush.msra.mxu0 0.0
    %2833 = vmatpush.msra.mxu0 0.0
    %2834 = vmatpush.msra.mxu0 0.0
    %2835 = vmatpush.msra.mxu0 0.0
    %2836 = vmatpush.msra.mxu0 0.0
    %2837 = vmatpush.msra.mxu0 0.0
    %2838 = vmatpush.msra.mxu0 0.0
    %2839 = vmatpush.msra.mxu0 0.0
    %2840 = vmatpush.msra.mxu0 0.0
    %2841 = vmatpush.msra.mxu0 %v2824
    %2842 = vmatmul.f32.gmra.mxu0 %v1285
    %v2843 = vpop.f32.mrf.mxu0
    %v2844 = vadd.f32 0.0, %v2843
    %2845 = vdwg.mxu0
    %v2846 = vmax.f32 %v2844, 0.0
    %2847 = vst.msk [vmem:[#allocation2 + $0x1] sm:$0x3] %vm1312, %v2846
    %v2849 = vrot.slane %v2818, 6
    %v2850 = vrot.slane %v2819, 6
    %v2851 = vsel %vm1315, %v2849, %v2850
    %v2852 = vsel %vm1287, %v2851, 0
    %2854 = vmatpush.msra.mxu0 0.0
    %2855 = vmatpush.msra.mxu0 0.0
    %2856 = vmatpush.msra.mxu0 0.0
    %2857 = vmatpush.msra.mxu0 0.0
    %2858 = vmatpush.msra.mxu0 0.0
    %2859 = vmatpush.msra.mxu0 0.0
    %2860 = vmatpush.msra.mxu0 0.0
    %2861 = vmatpush.msra.mxu0 0.0
    %2862 = vmatpush.msra.mxu0 0.0
    %2863 = vmatpush.msra.mxu0 0.0
    %2864 = vmatpush.msra.mxu0 0.0
    %2865 = vmatpush.msra.mxu0 0.0
    %2866 = vmatpush.msra.mxu0 0.0
    %2867 = vmatpush.msra.mxu0 0.0
    %2868 = vmatpush.msra.mxu0 0.0
    %2869 = vmatpush.msra.mxu0 %v2852
    %2870 = vmatmul.f32.gmra.mxu0 %v1285
    %v2871 = vpop.f32.mrf.mxu0
    %v2872 = vadd.f32 0.0, %v2871
    %2873 = vdwg.mxu0
    %v2874 = vmax.f32 %v2872, 0.0
    %2875 = vst.msk [vmem:[#allocation2 + $0x5] sm:$0x3] %vm1312, %v2874
    %v2876 = vld [vmem:[#allocation2] sm:$0xff]
    %v2877 = vpack.c.bf16 %v2876, %v2876
    %v2878 = vld [vmem:[%s15] sm:$0xf]
    %v2879 = vld [vmem:[%s15 + $0x4] sm:$0xf]
    %v2880 = vld [vmem:[%s15 + $0x8] sm:$0xf]
    %v2881 = vld [vmem:[%s15 + $0xc] sm:$0xf]
    %s2882 = scalar_lea.vmem %s15, 16
    %v2883 = vld [vmem:[%s2882] sm:$0xf]
    %v2884 = vld [vmem:[%s2882 + $0x4] sm:$0xf]
    %v2885 = vld [vmem:[%s2882 + $0x8] sm:$0xf]
    %v2886 = vld [vmem:[%s2882 + $0xc] sm:$0xf]
    %v2888 = vunpack.c.l.b16 %v2877
    %v2889 = vpack.c.b16 %v2888, %v2888
    %v2891 = vshrl.u32 %v2889, 16
    %v2893 = vshll.u32 %v2889, 16
    %v2895 = vrot.slane %v2893, 1
    %v2896 = vor.u32 %v2891, %v2895
    %v2901 = vunpack.c.l.b16 %v2883
    %v2902 = vunpack.c.l.b16 %v2884
    %v2903 = vunpack.c.l.b16 %v2885
    %v2904 = vunpack.c.l.b16 %v2886
    %v2905 = vpack.c.b16 %v2902, %v2901
    %v2906 = vpack.c.b16 %v2904, %v2903
    %v2910 = vsel %vm1376, %v2896, 0
    %2912 = vmatpush.bf16.msra.mxu0 0
    %2913 = vmatpush.bf16.msra.mxu0 0
    %2914 = vmatpush.bf16.msra.mxu0 0
    %2915 = vmatpush.bf16.msra.mxu0 0
    %2916 = vmatpush.bf16.msra.mxu0 0
    %2917 = vmatpush.bf16.msra.mxu0 0
    %2918 = vmatpush.bf16.msra.mxu0 %v2906
    %2919 = vmatpush.bf16.msra.mxu0 %v2905
    %2920 = vmatmul.bf16.gmra.mxu0 %v2910
    %v2921 = vpop.f32.mrf.mxu0
    %v2922 = vadd.f32 0.0, %v2921
    %v2923 = vpop.f32.mrf.mxu0
    %2924 = vdwg.mxu0
    %v2929 = vunpack.c.l.b16 %v2878
    %v2930 = vunpack.c.l.b16 %v2879
    %v2931 = vunpack.c.l.b16 %v2880
    %v2932 = vunpack.c.l.b16 %v2881
    %v2933 = vpack.c.b16 %v2930, %v2929
    %v2934 = vpack.c.b16 %v2932, %v2931
    %v2938 = vsel %vm1376, %v2877, 0
    %2940 = vmatpush.bf16.msra.mxu0 0
    %2941 = vmatpush.bf16.msra.mxu0 0
    %2942 = vmatpush.bf16.msra.mxu0 0
    %2943 = vmatpush.bf16.msra.mxu0 0
    %2944 = vmatpush.bf16.msra.mxu0 0
    %2945 = vmatpush.bf16.msra.mxu0 0
    %2946 = vmatpush.bf16.msra.mxu0 %v2934
    %2947 = vmatpush.bf16.msra.mxu0 %v2933
    %2948 = vmatmul.bf16.gmra.mxu0 %v2938
    %v2949 = vpop.f32.mrf.mxu0
    %v2950 = vadd.f32 %v2922, %v2949
    %v2951 = vpop.f32.mrf.mxu0
    %2952 = vdwg.mxu0
    %s2953 = scalar_lea.vmem %s15, 32
    %v2954 = vld [vmem:[%s2953] sm:$0xf]
    %v2955 = vld [vmem:[%s2953 + $0x4] sm:$0xf]
    %v2956 = vld [vmem:[%s2953 + $0x8] sm:$0xf]
    %v2957 = vld [vmem:[%s2953 + $0xc] sm:$0xf]
    %v2958 = vrot.slane %v2889, 1
    %v2963 = vunpack.c.l.b16 %v2954
    %v2964 = vunpack.c.l.b16 %v2955
    %v2965 = vunpack.c.l.b16 %v2956
    %v2966 = vunpack.c.l.b16 %v2957
    %v2967 = vpack.c.b16 %v2964, %v2963
    %v2968 = vpack.c.b16 %v2966, %v2965
    %v2972 = vsel %vm1376, %v2958, 0
    %2974 = vmatpush.bf16.msra.mxu0 0
    %2975 = vmatpush.bf16.msra.mxu0 0
    %2976 = vmatpush.bf16.msra.mxu0 0
    %2977 = vmatpush.bf16.msra.mxu0 0
    %2978 = vmatpush.bf16.msra.mxu0 0
    %2979 = vmatpush.bf16.msra.mxu0 0
    %2980 = vmatpush.bf16.msra.mxu0 %v2968
    %2981 = vmatpush.bf16.msra.mxu0 %v2967
    %2982 = vmatmul.bf16.gmra.mxu0 %v2972
    %v2983 = vpop.f32.mrf.mxu0
    %v2984 = vadd.f32 0.0, %v2983
    %v2985 = vpop.f32.mrf.mxu0
    %2986 = vdwg.mxu0
    %v2987 = vadd.f32 %v2950, %v2984
    %2988 = vst.msk [vmem:[#allocation3] sm:$0xff] %vm394, 0.0
    %2989 = vst.msk [vmem:[#allocation3 + $0x8] sm:$0xff] %vm394, 0.0
    %2990 = vst.msk [vmem:[#allocation3 + $0x10] sm:$0xf] %vm397, 0.0
    %v2991 = vmax.f32 %v2987, 0.0
    %2992 = vst.msk [vmem:[#allocation3 + $0x1] sm:$0x3] %vm1312, %v2991
    %2993 = vst.msk [vmem:[#allocation3 + $0x1] sm:$0x30] %vm1461, %v2991
    %v2994 = vld [vmem:[#allocation3] sm:$0xff]
    %v2995 = vpack.c.bf16 %v2994, %v2994
    %v2996 = vld [vmem:[%s16] sm:$0xf]
    %v2997 = vld [vmem:[%s16 + $0x4] sm:$0xf]
    %v2998 = vld [vmem:[%s16 + $0x8] sm:$0xf]
    %v2999 = vld [vmem:[%s16 + $0xc] sm:$0xf]
    %s3000 = scalar_lea.vmem %s16, 16
    %v3001 = vld [vmem:[%s3000] sm:$0xf]
    %v3002 = vld [vmem:[%s3000 + $0x4] sm:$0xf]
    %v3003 = vld [vmem:[%s3000 + $0x8] sm:$0xf]
    %v3004 = vld [vmem:[%s3000 + $0xc] sm:$0xf]
    %v3006 = vunpack.c.l.b16 %v2995
    %v3007 = vpack.c.b16 %v3006, %v3006
    %v3009 = vshrl.u32 %v3007, 16
    %v3011 = vshll.u32 %v3007, 16
    %v3013 = vrot.slane %v3011, 1
    %v3014 = vor.u32 %v3009, %v3013
    %v3019 = vunpack.c.l.b16 %v3001
    %v3020 = vunpack.c.l.b16 %v3002
    %v3021 = vunpack.c.l.b16 %v3003
    %v3022 = vunpack.c.l.b16 %v3004
    %v3023 = vpack.c.b16 %v3020, %v3019
    %v3024 = vpack.c.b16 %v3022, %v3021
    %v3028 = vsel %vm1376, %v3014, 0
    %3030 = vmatpush.bf16.msra.mxu0 0
    %3031 = vmatpush.bf16.msra.mxu0 0
    %3032 = vmatpush.bf16.msra.mxu0 0
    %3033 = vmatpush.bf16.msra.mxu0 0
    %3034 = vmatpush.bf16.msra.mxu0 0
    %3035 = vmatpush.bf16.msra.mxu0 0
    %3036 = vmatpush.bf16.msra.mxu0 %v3024
    %3037 = vmatpush.bf16.msra.mxu0 %v3023
    %3038 = vmatmul.bf16.gmra.mxu0 %v3028
    %v3039 = vpop.f32.mrf.mxu0
    %v3040 = vadd.f32 0.0, %v3039
    %v3041 = vpop.f32.mrf.mxu0
    %3042 = vdwg.mxu0
    %v3047 = vunpack.c.l.b16 %v2996
    %v3048 = vunpack.c.l.b16 %v2997
    %v3049 = vunpack.c.l.b16 %v2998
    %v3050 = vunpack.c.l.b16 %v2999
    %v3051 = vpack.c.b16 %v3048, %v3047
    %v3052 = vpack.c.b16 %v3050, %v3049
    %v3056 = vsel %vm1376, %v2995, 0
    %3058 = vmatpush.bf16.msra.mxu0 0
    %3059 = vmatpush.bf16.msra.mxu0 0
    %3060 = vmatpush.bf16.msra.mxu0 0
    %3061 = vmatpush.bf16.msra.mxu0 0
    %3062 = vmatpush.bf16.msra.mxu0 0
    %3063 = vmatpush.bf16.msra.mxu0 0
    %3064 = vmatpush.bf16.msra.mxu0 %v3052
    %3065 = vmatpush.bf16.msra.mxu0 %v3051
    %3066 = vmatmul.bf16.gmra.mxu0 %v3056
    %v3067 = vpop.f32.mrf.mxu0
    %v3068 = vadd.f32 %v3040, %v3067
    %v3069 = vpop.f32.mrf.mxu0
    %3070 = vdwg.mxu0
    %s3071 = scalar_lea.vmem %s16, 32
    %v3072 = vld [vmem:[%s3071] sm:$0xf]
    %v3073 = vld [vmem:[%s3071 + $0x4] sm:$0xf]
    %v3074 = vld [vmem:[%s3071 + $0x8] sm:$0xf]
    %v3075 = vld [vmem:[%s3071 + $0xc] sm:$0xf]
    %v3076 = vrot.slane %v3007, 1
    %v3081 = vunpack.c.l.b16 %v3072
    %v3082 = vunpack.c.l.b16 %v3073
    %v3083 = vunpack.c.l.b16 %v3074
    %v3084 = vunpack.c.l.b16 %v3075
    %v3085 = vpack.c.b16 %v3082, %v3081
    %v3086 = vpack.c.b16 %v3084, %v3083
    %v3090 = vsel %vm1376, %v3076, 0
    %3092 = vmatpush.bf16.msra.mxu0 0
    %3093 = vmatpush.bf16.msra.mxu0 0
    %3094 = vmatpush.bf16.msra.mxu0 0
    %3095 = vmatpush.bf16.msra.mxu0 0
    %3096 = vmatpush.bf16.msra.mxu0 0
    %3097 = vmatpush.bf16.msra.mxu0 0
    %3098 = vmatpush.bf16.msra.mxu0 %v3086
    %3099 = vmatpush.bf16.msra.mxu0 %v3085
    %3100 = vmatmul.bf16.gmra.mxu0 %v3090
    %v3101 = vpop.f32.mrf.mxu0
    %v3102 = vadd.f32 0.0, %v3101
    %v3103 = vpop.f32.mrf.mxu0
    %3104 = vdwg.mxu0
    %v3105 = vadd.f32 %v3068, %v3102
    %3106 = vst.msk [vmem:[#allocation2] sm:$0xff] %vm394, 0.0
    %3107 = vst.msk [vmem:[#allocation2 + $0x8] sm:$0xff] %vm394, 0.0
    %3108 = vst.msk [vmem:[#allocation2 + $0x10] sm:$0xf] %vm397, 0.0
    %v3109 = vmax.f32 %v3105, 0.0
    %3110 = vst.msk [vmem:[#allocation2 + $0x1] sm:$0x1] %vm1579, %v3109
    %3111 = vst.msk [vmem:[#allocation2] sm:$0x10] %vm1581, %v3109
    %v3112 = vld [vmem:[#allocation2] sm:$0xff]
    %v3113 = vpack.c.bf16 %v3112, %v3112
    %v3114 = vld [vmem:[%s17] sm:$0xf]
    %v3115 = vld [vmem:[%s17 + $0x4] sm:$0xf]
    %v3116 = vld [vmem:[%s17 + $0x8] sm:$0xf]
    %v3117 = vld [vmem:[%s17 + $0xc] sm:$0xf]
    %s3118 = scalar_lea.vmem %s17, 16
    %v3119 = vld [vmem:[%s3118] sm:$0xf]
    %v3120 = vld [vmem:[%s3118 + $0x4] sm:$0xf]
    %v3121 = vld [vmem:[%s3118 + $0x8] sm:$0xf]
    %v3122 = vld [vmem:[%s3118 + $0xc] sm:$0xf]
    %v3124 = vunpack.c.l.b16 %v3113
    %v3125 = vpack.c.b16 %v3124, %v3124
    %v3127 = vshrl.u32 %v3125, 16
    %v3129 = vshll.u32 %v3125, 16
    %v3131 = vrot.slane %v3129, 1
    %v3132 = vor.u32 %v3127, %v3131
    %v3137 = vunpack.c.l.b16 %v3119
    %v3138 = vunpack.c.l.b16 %v3120
    %v3139 = vunpack.c.l.b16 %v3121
    %v3140 = vunpack.c.l.b16 %v3122
    %v3141 = vpack.c.b16 %v3138, %v3137
    %v3142 = vpack.c.b16 %v3140, %v3139
    %v3146 = vsel %vm1376, %v3132, 0
    %3148 = vmatpush.bf16.msra.mxu0 0
    %3149 = vmatpush.bf16.msra.mxu0 0
    %3150 = vmatpush.bf16.msra.mxu0 0
    %3151 = vmatpush.bf16.msra.mxu0 0
    %3152 = vmatpush.bf16.msra.mxu0 0
    %3153 = vmatpush.bf16.msra.mxu0 0
    %3154 = vmatpush.bf16.msra.mxu0 %v3142
    %3155 = vmatpush.bf16.msra.mxu0 %v3141
    %3156 = vmatmul.bf16.gmra.mxu0 %v3146
    %v3157 = vpop.f32.mrf.mxu0
    %v3158 = vadd.f32 0.0, %v3157
    %v3159 = vpop.f32.mrf.mxu0
    %3160 = vdwg.mxu0
    %v3165 = vunpack.c.l.b16 %v3114
    %v3166 = vunpack.c.l.b16 %v3115
    %v3167 = vunpack.c.l.b16 %v3116
    %v3168 = vunpack.c.l.b16 %v3117
    %v3169 = vpack.c.b16 %v3166, %v3165
    %v3170 = vpack.c.b16 %v3168, %v3167
    %v3174 = vsel %vm1376, %v3113, 0
    %3176 = vmatpush.bf16.msra.mxu0 0
    %3177 = vmatpush.bf16.msra.mxu0 0
    %3178 = vmatpush.bf16.msra.mxu0 0
    %3179 = vmatpush.bf16.msra.mxu0 0
    %3180 = vmatpush.bf16.msra.mxu0 0
    %3181 = vmatpush.bf16.msra.mxu0 0
    %3182 = vmatpush.bf16.msra.mxu0 %v3170
    %3183 = vmatpush.bf16.msra.mxu0 %v3169
    %3184 = vmatmul.bf16.gmra.mxu0 %v3174
    %v3185 = vpop.f32.mrf.mxu0
    %v3186 = vadd.f32 %v3158, %v3185
    %v3187 = vpop.f32.mrf.mxu0
    %3188 = vdwg.mxu0
    %s3189 = scalar_lea.vmem %s17, 32
    %v3190 = vld [vmem:[%s3189] sm:$0xf]
    %v3191 = vld [vmem:[%s3189 + $0x4] sm:$0xf]
    %v3192 = vld [vmem:[%s3189 + $0x8] sm:$0xf]
    %v3193 = vld [vmem:[%s3189 + $0xc] sm:$0xf]
    %v3194 = vrot.slane %v3125, 1
    %v3199 = vunpack.c.l.b16 %v3190
    %v3200 = vunpack.c.l.b16 %v3191
    %v3201 = vunpack.c.l.b16 %v3192
    %v3202 = vunpack.c.l.b16 %v3193
    %v3203 = vpack.c.b16 %v3200, %v3199
    %v3204 = vpack.c.b16 %v3202, %v3201
    %v3208 = vsel %vm1376, %v3194, 0
    %3210 = vmatpush.bf16.msra.mxu0 0
    %3211 = vmatpush.bf16.msra.mxu0 0
    %3212 = vmatpush.bf16.msra.mxu0 0
    %3213 = vmatpush.bf16.msra.mxu0 0
    %3214 = vmatpush.bf16.msra.mxu0 0
    %3215 = vmatpush.bf16.msra.mxu0 0
    %3216 = vmatpush.bf16.msra.mxu0 %v3204
    %3217 = vmatpush.bf16.msra.mxu0 %v3203
    %3218 = vmatmul.bf16.gmra.mxu0 %v3208
    %v3219 = vpop.f32.mrf.mxu0
    %v3220 = vadd.f32 0.0, %v3219
    %v3221 = vpop.f32.mrf.mxu0
    %3222 = vdwg.mxu0
    %v3223 = vadd.f32 %v3186, %v3220
    %3224 = vst.msk [vmem:[#allocation3] sm:$0xff] %vm394, 0.0
    %3225 = vst.msk [vmem:[#allocation3 + $0x8] sm:$0xff] %vm394, 0.0
    %3226 = vst.msk [vmem:[#allocation3 + $0x10] sm:$0xf] %vm397, 0.0
    %v3227 = vmax.f32 %v3223, 0.0
    %3228 = vst.msk [vmem:[#allocation3 + $0x1] sm:$0x1] %vm1579, %v3227
    %3229 = vst.msk [vmem:[#allocation3 + $0x1] sm:$0x8] %vm1700, %v3227
    %v3230 = vld [vmem:[#allocation3 + $0x1] sm:$0x1]
    %3231 = vst.msk [vmem:[#allocation6] sm:$0x1] %vm1579, %v3230
    %v3232 = vld [vmem:[#allocation3 + $0x4] sm:$0x1]
    %3233 = vst.msk [vmem:[#allocation6 + $0x1] sm:$0x1] %vm1579, %v3232
    // Predicated region
    $region74: #{encoder_forward.1} parent=1 // pred_check
      _
    $region75: #{encoder_forward.1} parent=1 // pred_check_branch
      %3235 = sbr.rel (0) target = $region77
    $region76: #{encoder_forward.1} parent=1 // pred_region
      %3237 = vsyncadd [#allocation5], 0
      %s3239 = sshll.u32 [#allocation4], 4
      %s3240 = int_to_ptr.vmem [resolvable:$true] %s3239
      %s3241 = sshll.u32 %s18, 4
      %s3242 = int_to_ptr.hbm [resolvable:$true] %s3241
      %3244 = dma.vmem_to_hbm [thread:$0]  %s3240, 32, %s3242, [#allocation5]
    $region77: #{encoder_forward.1} parent=1 // pred_fallthru
      _
    // Predicated region
    $region78: #{encoder_forward.1} parent=1 // pred_check
      _
    $region79: #{encoder_forward.1} parent=1 // pred_check_branch
      %3246 = sbr.rel (0) target = $region81
    $region80: #{encoder_forward.1} parent=1 // pred_region
      %3248 = vsyncadd [#allocation7], 0
      %s3250 = sshll.u32 [#allocation6], 4
      %s3251 = int_to_ptr.vmem [resolvable:$true] %s3250
      %s3252 = sshll.u32 %s19, 4
      %s3253 = int_to_ptr.hbm [resolvable:$true] %s3252
      %3255 = dma.vmem_to_hbm [thread:$0]  %s3251, 32, %s3253, [#allocation7]
    $region81: #{encoder_forward.1} parent=1 // pred_fallthru
      _
    // Predicated region
    $region82: #{encoder_forward.1} parent=1 // pred_check
      _
    $region83: #{encoder_forward.1} parent=1 // pred_check_branch
      %3257 = sbr.rel (0) target = $region85
    $region84: #{encoder_forward.1} parent=1 // pred_region
      %3259 = dma.done [#allocation5], 32
    $region85: #{encoder_forward.1} parent=1 // pred_fallthru
      _
    // Predicated region
    $region86: #{encoder_forward.1} parent=1 // pred_check
      _
    $region87: #{encoder_forward.1} parent=1 // pred_check_branch
      %3261 = sbr.rel (0) target = $region89
    $region88: #{encoder_forward.1} parent=1 // pred_region
      %3263 = dma.done [#allocation7], 32
    $region89: #{encoder_forward.1} parent=1 // pred_fallthru
      _
    %3264 = vsyncpa [#allocation5], 1
    %3265 = vsyncpa [#allocation7], 1

</llo_original>
